<compile_context>
chip_gen: v7x
topology: tpu7x:2x2x1
jax: 0.10.0
libtpu: 0.0.40
codegen_flags: <defaults>
</compile_context>

<pallas_src>
import jax
import jax.numpy as jnp
from jax.experimental import pallas as pl
from jax.experimental.pallas import tpu as pltpu

# Layer sizes from the module __init__ (input_size=2, num_classes=1)
LAYER_SIZES = [2, 32, 512, 256, 128, 64, 1]


def discriminator_kernel(x_ref,
                         w1, b1, w2, b2, w3, b3, w4, b4, w5, b5, w6, b6,
                         o_ref):
    """One batch tile. x_ref: (2, TB); o_ref: (1, TB). Weights are (out, in)."""
    x = x_ref[...].astype(jnp.float32)                      # (2, TB)

    # Layer 1 (K=2): two VPU broadcast-FMAs instead of a degenerate MXU matmul.
    w1v = w1[...]                                           # (32, 2) f32
    h = w1v[:, 0:1] * x[0:1, :] + w1v[:, 1:2] * x[1:2, :] + b1[...]
    h = jnp.maximum(h, 0.0)                                 # (32, TB)
    # Dropout(0.4): identity in eval mode.

    def linear_relu(h, w_ref, b_ref):
        # bf16 MXU operands, f32 accumulation, f32 bias/ReLU.
        y = jnp.dot(w_ref[...], h.astype(jnp.bfloat16),
                    preferred_element_type=jnp.float32) + b_ref[...]
        return jnp.maximum(y, 0.0)

    h = linear_relu(h, w2, b2)                              # (512, TB)
    h = linear_relu(h, w3, b3)                              # (256, TB)
    h = linear_relu(h, w4, b4)                              # (128, TB)
    h = linear_relu(h, w5, b5)                              # (64,  TB)

    # Layer 6 (N=1): VPU multiply + sublane (XLU) reduction; no MXU op.
    logits = jnp.sum(w6[...] * h, axis=0, keepdims=True) + b6[...]   # (1, TB)
    o_ref[...] = jax.nn.sigmoid(logits)                     # lane-dense store


def make_params(key):
    """PyTorch nn.Linear default init: uniform(-1/sqrt(fan_in), 1/sqrt(fan_in)).

    Returned in PyTorch layout: w is (out_features, in_features), b is (out_features,).
    """
    params = []
    for i in range(len(LAYER_SIZES) - 1):
        fan_in, fan_out = LAYER_SIZES[i], LAYER_SIZES[i + 1]
        key, kw, kb = jax.random.split(key, 3)
        bound = 1.0 / float(fan_in) ** 0.5
        w = jax.random.uniform(kw, (fan_out, fan_in), jnp.float32, -bound, bound)
        b = jax.random.uniform(kb, (fan_out,), jnp.float32, -bound, bound)
        params.append((w, b))
    return params


def _pack_params(params):
    """PyTorch-layout params -> flat kernel operand list with kernel dtypes/layouts."""
    n = len(params)
    flat = []
    for i, (w, bias) in enumerate(params):
        if i == 0:
            pw = w.astype(jnp.float32)                  # (32, 2): VPU layer, keep f32
        elif i == n - 1:
            pw = w.reshape(-1, 1).astype(jnp.float32)   # (64, 1): VPU/XLU layer
        else:
            pw = w.astype(jnp.bfloat16)                 # MXU layers in bf16
        pb = bias.reshape(-1, 1).astype(jnp.float32)    # (out, 1) column bias
        flat.extend([pw, pb])
    return flat


def discriminator_forward(x, params, *, tb=512):
    """x: (B, ...) -> (B, 1) sigmoid probabilities (matches the torch forward)."""
    b = x.shape[0]
    x2d = x.reshape(b, -1).astype(jnp.float32)           # x.view(x.size(0), -1).float()
    in_size = x2d.shape[1]
    assert in_size == LAYER_SIZES[0], f"expected input_size={LAYER_SIZES[0]}"

    num_tiles = (b + tb - 1) // tb
    bp = num_tiles * tb                                  # pad batch to a tile multiple
    x_t = jnp.pad(x2d.T, ((0, 0), (0, bp - b)))          # (in_size, Bp): batch on lanes

    flat = _pack_params(params)

    in_specs = [pl.BlockSpec((in_size, tb), lambda i: (0, i))]           # streamed x tile
    in_specs += [pl.BlockSpec(p.shape, lambda i: (0, 0)) for p in flat]  # resident params
    out_specs = pl.BlockSpec((1, tb), lambda i: (0, i))                  # lane-dense out

    flops = 2 * bp * sum(LAYER_SIZES[i] * LAYER_SIZES[i + 1]
                         for i in range(len(LAYER_SIZES) - 1))
    bytes_accessed = int(x_t.size) * 4 + bp * 4 + sum(
        int(p.size) * p.dtype.itemsize for p in flat)
    cost = pl.CostEstimate(flops=int(flops), transcendentals=int(bp),
                           bytes_accessed=int(bytes_accessed))

    out_t = pl.pallas_call(
        discriminator_kernel,
        out_shape=jax.ShapeDtypeStruct((1, bp), jnp.float32),
        grid=(num_tiles,),
        in_specs=in_specs,
        out_specs=out_specs,
        compiler_params=pltpu.CompilerParams(
            dimension_semantics=("parallel",)),   # megacore sharding on v7x
        cost_estimate=cost,
    )(x_t, *flat)

    return out_t[0, :b].reshape(b, 1)


def discriminator_reference(x, params):
    """Pure-JAX f32 reference (eval-mode Dropout)."""
    h = x.reshape(x.shape[0], -1).astype(jnp.float32)
    n = len(params)
    for i, (w, bias) in enumerate(params):
        h = h @ w.T + bias
        h = jnp.maximum(h, 0.0) if i < n - 1 else jax.nn.sigmoid(h)
    return h


if __name__ == "__main__":
    key = jax.random.PRNGKey(0)
    kx, kp = jax.random.split(key)

    # Small deterministic input consistent with the module (input_size=2);
    # batch=600 exercises two grid steps plus tail padding.
    batch = 600
    x = jax.random.normal(kx, (batch, 2), dtype=jnp.float32)
    params = make_params(kp)

    y = discriminator_forward(x, params, tb=512)
    y = jax.block_until_ready(y)

    # sanity: correct shape, valid probabilities, and agreement with f32 reference
    assert y.shape == (batch, 1)
    assert bool(jnp.all((y >= 0.0) & (y <= 1.0)))
    y_ref = discriminator_reference(x, params)
    max_err = float(jnp.max(jnp.abs(y - y_ref)))
    assert max_err < 3e-2, f"max abs error vs f32 reference: {max_err}"

    print("KERNEL_OK")
</pallas_src>

<mosaic_0001>
module attributes {stable_mosaic.version = 11 : i64} {
  func.func @discriminator_kernel(%arg0: i32, %arg1: memref<2x512xf32, #tpu.memory_space<vmem>>, %arg2: memref<32x2xf32, #tpu.memory_space<vmem>>, %arg3: memref<32x1xf32, #tpu.memory_space<vmem>>, %arg4: memref<512x32xbf16, #tpu.memory_space<vmem>>, %arg5: memref<512x1xf32, #tpu.memory_space<vmem>>, %arg6: memref<256x512xbf16, #tpu.memory_space<vmem>>, %arg7: memref<256x1xf32, #tpu.memory_space<vmem>>, %arg8: memref<128x256xbf16, #tpu.memory_space<vmem>>, %arg9: memref<128x1xf32, #tpu.memory_space<vmem>>, %arg10: memref<64x128xbf16, #tpu.memory_space<vmem>>, %arg11: memref<64x1xf32, #tpu.memory_space<vmem>>, %arg12: memref<64x1xf32, #tpu.memory_space<vmem>>, %arg13: memref<1x1xf32, #tpu.memory_space<vmem>>, %arg14: memref<1x512xf32, #tpu.memory_space<vmem>>) attributes {dimension_semantics = [#tpu.dimension_semantics<parallel>], iteration_bounds = array<i64: 2>, scalar_prefetch = 0 : i64, scratch_operands = 0 : i64, tpu.core_type = #tpu.core_type<tc>, window_params = [{transform_indices = @transform_0, window_bounds = array<i64: 2, 512>}, {pipeline_mode = #tpu.pipeline_mode<synchronous>, transform_indices = @transform_1, window_bounds = array<i64: 32, 2>}, {pipeline_mode = #tpu.pipeline_mode<synchronous>, transform_indices = @transform_2, window_bounds = array<i64: 32, 1>}, {pipeline_mode = #tpu.pipeline_mode<synchronous>, transform_indices = @transform_3, window_bounds = array<i64: 512, 32>}, {pipeline_mode = #tpu.pipeline_mode<synchronous>, transform_indices = @transform_4, window_bounds = array<i64: 512, 1>}, {pipeline_mode = #tpu.pipeline_mode<synchronous>, transform_indices = @transform_5, window_bounds = array<i64: 256, 512>}, {pipeline_mode = #tpu.pipeline_mode<synchronous>, transform_indices = @transform_6, window_bounds = array<i64: 256, 1>}, {pipeline_mode = #tpu.pipeline_mode<synchronous>, transform_indices = @transform_7, window_bounds = array<i64: 128, 256>}, {pipeline_mode = #tpu.pipeline_mode<synchronous>, transform_indices = @transform_8, window_bounds = array<i64: 128, 1>}, {pipeline_mode = #tpu.pipeline_mode<synchronous>, transform_indices = @transform_9, window_bounds = array<i64: 64, 128>}, {pipeline_mode = #tpu.pipeline_mode<synchronous>, transform_indices = @transform_10, window_bounds = array<i64: 64, 1>}, {pipeline_mode = #tpu.pipeline_mode<synchronous>, transform_indices = @transform_11, window_bounds = array<i64: 64, 1>}, {pipeline_mode = #tpu.pipeline_mode<synchronous>, transform_indices = @transform_12, window_bounds = array<i64: 1, 1>}, {transform_indices = @transform_13, window_bounds = array<i64: 1, 512>}]} {
    %c0 = arith.constant 0 : index
    %c0_0 = arith.constant 0 : index
    %0 = vector.load %arg1[%c0, %c0_0] : memref<2x512xf32, #tpu.memory_space<vmem>>, vector<2x512xf32>
    %c0_1 = arith.constant 0 : index
    %c0_2 = arith.constant 0 : index
    %1 = vector.load %arg2[%c0_1, %c0_2] : memref<32x2xf32, #tpu.memory_space<vmem>>, vector<32x2xf32>
    %2 = vector.extract_strided_slice %1 {offsets = [0, 0], sizes = [32, 1], strides = [1, 1]} : vector<32x2xf32> to vector<32x1xf32>
    %3 = vector.extract_strided_slice %0 {offsets = [0, 0], sizes = [1, 512], strides = [1, 1]} : vector<2x512xf32> to vector<1x512xf32>
    %4 = vector.broadcast %2 : vector<32x1xf32> to vector<32x512xf32>
    %5 = vector.broadcast %3 : vector<1x512xf32> to vector<32x512xf32>
    %6 = arith.mulf %4, %5 : vector<32x512xf32>
    %7 = vector.extract_strided_slice %1 {offsets = [0, 1], sizes = [32, 1], strides = [1, 1]} : vector<32x2xf32> to vector<32x1xf32>
    %8 = vector.extract_strided_slice %0 {offsets = [1, 0], sizes = [1, 512], strides = [1, 1]} : vector<2x512xf32> to vector<1x512xf32>
    %9 = vector.broadcast %7 : vector<32x1xf32> to vector<32x512xf32>
    %10 = vector.broadcast %8 : vector<1x512xf32> to vector<32x512xf32>
    %11 = arith.mulf %9, %10 : vector<32x512xf32>
    %12 = arith.addf %6, %11 : vector<32x512xf32>
    %c0_3 = arith.constant 0 : index
    %c0_4 = arith.constant 0 : index
    %13 = vector.load %arg3[%c0_3, %c0_4] : memref<32x1xf32, #tpu.memory_space<vmem>>, vector<32x1xf32>
    %14 = vector.broadcast %13 : vector<32x1xf32> to vector<32x512xf32>
    %15 = arith.addf %12, %14 : vector<32x512xf32>
    %cst = arith.constant 0.000000e+00 : f32
    %16 = vector.broadcast %cst : f32 to vector<32x512xf32>
    %17 = arith.maximumf %15, %16 : vector<32x512xf32>
    %c0_5 = arith.constant 0 : index
    %c0_6 = arith.constant 0 : index
    %18 = vector.load %arg4[%c0_5, %c0_6] : memref<512x32xbf16, #tpu.memory_space<vmem>>, vector<512x32xbf16>
    %19 = arith.truncf %17 : vector<32x512xf32> to vector<32x512xbf16>
    %cst_7 = arith.constant dense<0.000000e+00> : vector<512x512xf32>
    %20 = tpu.matmul %18, %19, %cst_7 {dimension_numbers = #tpu.dot_dimension_numbers<[1], [0], [0], [1], [0, 0, 1, 1], [], []>} : vector<512x32xbf16>, vector<32x512xbf16>, vector<512x512xf32> -> vector<512x512xf32>
    %c0_8 = arith.constant 0 : index
    %c0_9 = arith.constant 0 : index
    %21 = vector.load %arg5[%c0_8, %c0_9] : memref<512x1xf32, #tpu.memory_space<vmem>>, vector<512x1xf32>
    %22 = vector.broadcast %21 : vector<512x1xf32> to vector<512x512xf32>
    %23 = arith.addf %20, %22 : vector<512x512xf32>
    %cst_10 = arith.constant 0.000000e+00 : f32
    %24 = vector.broadcast %cst_10 : f32 to vector<512x512xf32>
    %25 = arith.maximumf %23, %24 : vector<512x512xf32>
    %c0_11 = arith.constant 0 : index
    %c0_12 = arith.constant 0 : index
    %26 = vector.load %arg6[%c0_11, %c0_12] : memref<256x512xbf16, #tpu.memory_space<vmem>>, vector<256x512xbf16>
    %27 = arith.truncf %25 : vector<512x512xf32> to vector<512x512xbf16>
    %cst_13 = arith.constant dense<0.000000e+00> : vector<256x512xf32>
    %28 = tpu.matmul %26, %27, %cst_13 {dimension_numbers = #tpu.dot_dimension_numbers<[1], [0], [0], [1], [0, 0, 1, 1], [], []>} : vector<256x512xbf16>, vector<512x512xbf16>, vector<256x512xf32> -> vector<256x512xf32>
    %c0_14 = arith.constant 0 : index
    %c0_15 = arith.constant 0 : index
    %29 = vector.load %arg7[%c0_14, %c0_15] : memref<256x1xf32, #tpu.memory_space<vmem>>, vector<256x1xf32>
    %30 = vector.broadcast %29 : vector<256x1xf32> to vector<256x512xf32>
    %31 = arith.addf %28, %30 : vector<256x512xf32>
    %cst_16 = arith.constant 0.000000e+00 : f32
    %32 = vector.broadcast %cst_16 : f32 to vector<256x512xf32>
    %33 = arith.maximumf %31, %32 : vector<256x512xf32>
    %c0_17 = arith.constant 0 : index
    %c0_18 = arith.constant 0 : index
    %34 = vector.load %arg8[%c0_17, %c0_18] : memref<128x256xbf16, #tpu.memory_space<vmem>>, vector<128x256xbf16>
    %35 = arith.truncf %33 : vector<256x512xf32> to vector<256x512xbf16>
    %cst_19 = arith.constant dense<0.000000e+00> : vector<128x512xf32>
    %36 = tpu.matmul %34, %35, %cst_19 {dimension_numbers = #tpu.dot_dimension_numbers<[1], [0], [0], [1], [0, 0, 1, 1], [], []>} : vector<128x256xbf16>, vector<256x512xbf16>, vector<128x512xf32> -> vector<128x512xf32>
    %c0_20 = arith.constant 0 : index
    %c0_21 = arith.constant 0 : index
    %37 = vector.load %arg9[%c0_20, %c0_21] : memref<128x1xf32, #tpu.memory_space<vmem>>, vector<128x1xf32>
    %38 = vector.broadcast %37 : vector<128x1xf32> to vector<128x512xf32>
    %39 = arith.addf %36, %38 : vector<128x512xf32>
    %cst_22 = arith.constant 0.000000e+00 : f32
    %40 = vector.broadcast %cst_22 : f32 to vector<128x512xf32>
    %41 = arith.maximumf %39, %40 : vector<128x512xf32>
    %c0_23 = arith.constant 0 : index
    %c0_24 = arith.constant 0 : index
    %42 = vector.load %arg10[%c0_23, %c0_24] : memref<64x128xbf16, #tpu.memory_space<vmem>>, vector<64x128xbf16>
    %43 = arith.truncf %41 : vector<128x512xf32> to vector<128x512xbf16>
    %cst_25 = arith.constant dense<0.000000e+00> : vector<64x512xf32>
    %44 = tpu.matmul %42, %43, %cst_25 {dimension_numbers = #tpu.dot_dimension_numbers<[1], [0], [0], [1], [0, 0, 1, 1], [], []>} : vector<64x128xbf16>, vector<128x512xbf16>, vector<64x512xf32> -> vector<64x512xf32>
    %c0_26 = arith.constant 0 : index
    %c0_27 = arith.constant 0 : index
    %45 = vector.load %arg11[%c0_26, %c0_27] : memref<64x1xf32, #tpu.memory_space<vmem>>, vector<64x1xf32>
    %46 = vector.broadcast %45 : vector<64x1xf32> to vector<64x512xf32>
    %47 = arith.addf %44, %46 : vector<64x512xf32>
    %cst_28 = arith.constant 0.000000e+00 : f32
    %48 = vector.broadcast %cst_28 : f32 to vector<64x512xf32>
    %49 = arith.maximumf %47, %48 : vector<64x512xf32>
    %c0_29 = arith.constant 0 : index
    %c0_30 = arith.constant 0 : index
    %50 = vector.load %arg12[%c0_29, %c0_30] : memref<64x1xf32, #tpu.memory_space<vmem>>, vector<64x1xf32>
    %51 = vector.broadcast %50 : vector<64x1xf32> to vector<64x512xf32>
    %52 = arith.mulf %51, %49 : vector<64x512xf32>
    %cst_31 = arith.constant dense<0.000000e+00> : vector<512xf32>
    %53 = vector.multi_reduction <add>, %52, %cst_31 [0] : vector<64x512xf32> to vector<512xf32>
    %54 = vector.shape_cast %53 : vector<512xf32> to vector<1x512xf32>
    %c0_32 = arith.constant 0 : index
    %c0_33 = arith.constant 0 : index
    %55 = vector.load %arg13[%c0_32, %c0_33] : memref<1x1xf32, #tpu.memory_space<vmem>>, vector<1x1xf32>
    %56 = vector.broadcast %55 : vector<1x1xf32> to vector<1x512xf32>
    %57 = arith.addf %54, %56 : vector<1x512xf32>
    %58 = arith.negf %57 : vector<1x512xf32>
    %59 = math.exp %58 : vector<1x512xf32>
    %cst_34 = arith.constant 1.000000e+00 : f32
    %60 = vector.broadcast %cst_34 : f32 to vector<1x512xf32>
    %61 = arith.addf %60, %59 : vector<1x512xf32>
    %62 = arith.divf %60, %61 : vector<1x512xf32>
    %c0_35 = arith.constant 0 : index
    %c0_36 = arith.constant 0 : index
    %63 = vector.load %arg14[%c0_35, %c0_36] : memref<1x512xf32, #tpu.memory_space<vmem>>, vector<1x512xf32>
    tpu.vector_store %arg14[%c0_35, %c0_36], %62 {strides = array<i32>} : memref<1x512xf32, #tpu.memory_space<vmem>>, vector<1x512xf32>,
    return
  }
  func.func @transform_0(%arg0: i32) -> (i32, i32) {
    %c0_i32 = arith.constant 0 : i32
    %c0_i32_0 = arith.constant 0 : i32
    return %c0_i32, %arg0 : i32, i32
  }
  func.func @transform_1(%arg0: i32) -> (i32, i32) {
    %c0_i32 = arith.constant 0 : i32
    %c0_i32_0 = arith.constant 0 : i32
    %c0_i32_1 = arith.constant 0 : i32
    return %c0_i32, %c0_i32_0 : i32, i32
  }
  func.func @transform_2(%arg0: i32) -> (i32, i32) {
    %c0_i32 = arith.constant 0 : i32
    %c0_i32_0 = arith.constant 0 : i32
    %c0_i32_1 = arith.constant 0 : i32
    return %c0_i32, %c0_i32_0 : i32, i32
  }
  func.func @transform_3(%arg0: i32) -> (i32, i32) {
    %c0_i32 = arith.constant 0 : i32
    %c0_i32_0 = arith.constant 0 : i32
    %c0_i32_1 = arith.constant 0 : i32
    return %c0_i32, %c0_i32_0 : i32, i32
  }
  func.func @transform_4(%arg0: i32) -> (i32, i32) {
    %c0_i32 = arith.constant 0 : i32
    %c0_i32_0 = arith.constant 0 : i32
    %c0_i32_1 = arith.constant 0 : i32
    return %c0_i32, %c0_i32_0 : i32, i32
  }
  func.func @transform_5(%arg0: i32) -> (i32, i32) {
    %c0_i32 = arith.constant 0 : i32
    %c0_i32_0 = arith.constant 0 : i32
    %c0_i32_1 = arith.constant 0 : i32
    return %c0_i32, %c0_i32_0 : i32, i32
  }
  func.func @transform_6(%arg0: i32) -> (i32, i32) {
    %c0_i32 = arith.constant 0 : i32
    %c0_i32_0 = arith.constant 0 : i32
    %c0_i32_1 = arith.constant 0 : i32
    return %c0_i32, %c0_i32_0 : i32, i32
  }
  func.func @transform_7(%arg0: i32) -> (i32, i32) {
    %c0_i32 = arith.constant 0 : i32
    %c0_i32_0 = arith.constant 0 : i32
    %c0_i32_1 = arith.constant 0 : i32
    return %c0_i32, %c0_i32_0 : i32, i32
  }
  func.func @transform_8(%arg0: i32) -> (i32, i32) {
    %c0_i32 = arith.constant 0 : i32
    %c0_i32_0 = arith.constant 0 : i32
    %c0_i32_1 = arith.constant 0 : i32
    return %c0_i32, %c0_i32_0 : i32, i32
  }
  func.func @transform_9(%arg0: i32) -> (i32, i32) {
    %c0_i32 = arith.constant 0 : i32
    %c0_i32_0 = arith.constant 0 : i32
    %c0_i32_1 = arith.constant 0 : i32
    return %c0_i32, %c0_i32_0 : i32, i32
  }
  func.func @transform_10(%arg0: i32) -> (i32, i32) {
    %c0_i32 = arith.constant 0 : i32
    %c0_i32_0 = arith.constant 0 : i32
    %c0_i32_1 = arith.constant 0 : i32
    return %c0_i32, %c0_i32_0 : i32, i32
  }
  func.func @transform_11(%arg0: i32) -> (i32, i32) {
    %c0_i32 = arith.constant 0 : i32
    %c0_i32_0 = arith.constant 0 : i32
    %c0_i32_1 = arith.constant 0 : i32
    return %c0_i32, %c0_i32_0 : i32, i32
  }
  func.func @transform_12(%arg0: i32) -> (i32, i32) {
    %c0_i32 = arith.constant 0 : i32
    %c0_i32_0 = arith.constant 0 : i32
    %c0_i32_1 = arith.constant 0 : i32
    return %c0_i32, %c0_i32_0 : i32, i32
  }
  func.func @transform_13(%arg0: i32) -> (i32, i32) {
    %c0_i32 = arith.constant 0 : i32
    %c0_i32_0 = arith.constant 0 : i32
    return %c0_i32, %arg0 : i32, i32
  }
}

</mosaic_0001>

<llo_original>
// kernel: tpu_custom_call.1
$region0: #{tpu_custom_call.1}
  #allocation0 [shape = 'u32[]', space=smem, size = 0x4, offset = 0x4, fixed_abs, tag = 'smem constant byte address 0x4 - core index']
  #allocation1 [shape = 'u32[144,128]{1,0:T(1,128)}', space=vmem, size = 0x12000, scoped, tag = 'internal scratch']
  #allocation2 [shape = 'f32[1,1]{1,0:T(1,128)S(1)}', space=vmem, size = 0x200, scoped, tag = 'scoped memory for tpu_custom_call.1']
  %s0 = inlined_call_operand.vmem [shape: f32[2,1024], index: 0, kind: input, shape index: {}]
  %s1 = inlined_call_operand.vmem [shape: f32[32,2], index: 1, kind: input, shape index: {}]
  %s2 = inlined_call_operand.vmem [shape: f32[32,1], index: 2, kind: input, shape index: {}]
  %s3 = inlined_call_operand.vmem [shape: bf16[512,32], index: 3, kind: input, shape index: {}]
  %s4 = inlined_call_operand.vmem [shape: f32[512,1], index: 4, kind: input, shape index: {}]
  %s5 = inlined_call_operand.vmem [shape: bf16[256,512], index: 5, kind: input, shape index: {}]
  %s6 = inlined_call_operand.vmem [shape: f32[256,1], index: 6, kind: input, shape index: {}]
  %s7 = inlined_call_operand.vmem [shape: bf16[128,256], index: 7, kind: input, shape index: {}]
  %s8 = inlined_call_operand.vmem [shape: f32[128,1], index: 8, kind: input, shape index: {}]
  %s9 = inlined_call_operand.vmem [shape: bf16[64,128], index: 9, kind: input, shape index: {}]
  %s10 = inlined_call_operand.vmem [shape: f32[64,1], index: 10, kind: input, shape index: {}]
  %s11 = inlined_call_operand.vmem [shape: f32[64,1], index: 11, kind: input, shape index: {}]
  %s12 = inlined_call_operand.<no memory space> [shape: f32[1,1], index: 12, kind: input, shape index: {}]
  %s13 = inlined_call_operand.hbm [shape: f32[1,1024], index: 13, kind: output, shape index: {}]
  %s14 = sld [smem:[#allocation0]]
  $region85: #{tpu_custom_call.1} parent=0
    _
  %s16 = ssub.s32 1, %s14
  %s17 = scalar_select 0, %s16, %s14
  %v18 = vstv %s12
  %19 = vst [vmem:[#allocation2] sm:$0x1] %v18
  $region1: #{tpu_custom_call.1} parent=0
    #allocation3 [shape = 'u8[4096]{0}', space=vmem, size = 0x1000, scoped, tag = 'output window, operand 0']
    #allocation4 [shape = 's32[2]{0}', space=sflag, size = 0x8, scoped, tag = 'scoped memory for tpu_custom_call.1']
    %20 = vsyncpa [#allocation4], 0
    %s21 = scalar_lea.sflag [#allocation4], 1
    %22 = vsyncpa %s21, 0
    loop: start=0, step=1, limit=4
    $region2: #{tpu_custom_call.1} parent=1 // loop_pre_header
      _
    $region3: #{tpu_custom_call.1} parent=1 // loop_header
      %s24 = sphi 0, %s28
      %p25 = scmp.ge.s32.totalorder %s24, 4
      %s34 = sphi 0, %s36
      %s37 = sphi 0, %s34
      %s38 = sphi 0, %s37
      %s54 = sphi 0, %s38
      %s58 = sphi 0, %s58
      %s60 = sphi 0, %s58
      %s61 = sphi 0, %s60
      %s75 = sphi 0, %s61
      %s79 = sphi 0, %s79
      %s81 = sphi 0, %s79
      %s82 = sphi 0, %s81
      %s96 = sphi 0, %s82
      %s100 = sphi 0, %s100
      %s102 = sphi 0, %s100
      %s103 = sphi 0, %s102
      %s117 = sphi 0, %s103
      %s121 = sphi 0, %s121
      %s123 = sphi 0, %s121
      %s124 = sphi 0, %s123
      %s138 = sphi 0, %s124
      %s142 = sphi 0, %s142
      %s144 = sphi 0, %s142
      %s145 = sphi 0, %s144
      %s159 = sphi 0, %s145
      %s163 = sphi 0, %s163
      %s165 = sphi 0, %s163
      %s166 = sphi 0, %s165
      %s180 = sphi 0, %s166
      %s184 = sphi 0, %s184
      %s186 = sphi 0, %s184
      %s187 = sphi 0, %s186
      %s201 = sphi 0, %s187
      %s205 = sphi 0, %s205
      %s207 = sphi 0, %s205
      %s208 = sphi 0, %s207
      %s222 = sphi 0, %s208
      %s226 = sphi 0, %s226
      %s228 = sphi 0, %s226
      %s229 = sphi 0, %s228
      %s243 = sphi 0, %s229
      %s247 = sphi 0, %s247
      %s249 = sphi 0, %s247
      %s250 = sphi 0, %s249
      %s264 = sphi 0, %s250
      %s268 = sphi 0, %s268
      %s270 = sphi 0, %s268
      %s271 = sphi 0, %s270
      %s285 = sphi 0, %s271
      %s289 = sphi 0, %s289
      %s291 = sphi 0, %s289
      %s292 = sphi 0, %s291
      %s306 = sphi 0, %s292
      %s312 = sphi 0, %s314
      %s315 = sphi 0, %s312
      %s316 = sphi 0, %s315
      %s332 = sphi 0, %s316
    $region4: #{tpu_custom_call.1} parent=1 // loop_header_branch
      %27 = sbr.rel (%p25) target = $region8
    $region5: #{tpu_custom_call.1} parent=1 // loop_body
      %s29 = ssub.s32 %s24, 1
      %s30 = ssub.s32 %s24, 2
      %s31 = sadd.s32 %s24, 1
      %s32 = ssub.s32 %s24, %s31
      %p33 = scmp.eq.s32.totalorder %s32, 0
      %s35 = sadd.s32 %s34, 1
      %s36 = scalar_select %p33, %s34, %s35
      %p39 = pneg %p33
      %p40 = scmp.eq.s32.totalorder %s24, 1
      %p41 = por %p39, %p40
      %p42 = scmp.ne.s32.totalorder %s34, %s37
      %p43 = scmp.eq.s32.totalorder %s24, 0
      %p44 = por %p42, %p43
      %p45 = scmp.ne.s32.totalorder %s34, %s37
      %p46 = scmp.eq.s32.totalorder %s29, 1
      %p47 = por %p45, %p46
      %p48 = scmp.ne.s32.totalorder %s37, %s38
      %p49 = scmp.eq.s32.totalorder %s29, 0
      %p50 = por %p48, %p49
      %p51 = scmp.ne.s32.totalorder %s37, %s38
      %p52 = scmp.eq.s32.totalorder %s30, 1
      %p53 = por %p51, %p52
      %p55 = scmp.ne.s32.totalorder %s38, %s54
      %p56 = scmp.eq.s32.totalorder %s30, 0
      %p57 = por %p55, %p56
      %s59 = sadd.s32 %s58, 1
      %p62 = scmp.eq.s32.totalorder %s24, 1
      %p63 = scmp.ne.s32.totalorder %s58, %s60
      %p64 = scmp.eq.s32.totalorder %s24, 0
      %p65 = por %p63, %p64
      %p66 = scmp.ne.s32.totalorder %s58, %s60
      %p67 = scmp.eq.s32.totalorder %s29, 1
      %p68 = por %p66, %p67
      %p69 = scmp.ne.s32.totalorder %s60, %s61
      %p70 = scmp.eq.s32.totalorder %s29, 0
      %p71 = por %p69, %p70
      %p72 = scmp.ne.s32.totalorder %s60, %s61
      %p73 = scmp.eq.s32.totalorder %s30, 1
      %p74 = por %p72, %p73
      %p76 = scmp.ne.s32.totalorder %s61, %s75
      %p77 = scmp.eq.s32.totalorder %s30, 0
      %p78 = por %p76, %p77
      %s80 = sadd.s32 %s79, 1
      %p83 = scmp.eq.s32.totalorder %s24, 1
      %p84 = scmp.ne.s32.totalorder %s79, %s81
      %p85 = scmp.eq.s32.totalorder %s24, 0
      %p86 = por %p84, %p85
      %p87 = scmp.ne.s32.totalorder %s79, %s81
      %p88 = scmp.eq.s32.totalorder %s29, 1
      %p89 = por %p87, %p88
      %p90 = scmp.ne.s32.totalorder %s81, %s82
      %p91 = scmp.eq.s32.totalorder %s29, 0
      %p92 = por %p90, %p91
      %p93 = scmp.ne.s32.totalorder %s81, %s82
      %p94 = scmp.eq.s32.totalorder %s30, 1
      %p95 = por %p93, %p94
      %p97 = scmp.ne.s32.totalorder %s82, %s96
      %p98 = scmp.eq.s32.totalorder %s30, 0
      %p99 = por %p97, %p98
      %s101 = sadd.s32 %s100, 1
      %p104 = scmp.eq.s32.totalorder %s24, 1
      %p105 = scmp.ne.s32.totalorder %s100, %s102
      %p106 = scmp.eq.s32.totalorder %s24, 0
      %p107 = por %p105, %p106
      %p108 = scmp.ne.s32.totalorder %s100, %s102
      %p109 = scmp.eq.s32.totalorder %s29, 1
      %p110 = por %p108, %p109
      %p111 = scmp.ne.s32.totalorder %s102, %s103
      %p112 = scmp.eq.s32.totalorder %s29, 0
      %p113 = por %p111, %p112
      %p114 = scmp.ne.s32.totalorder %s102, %s103
      %p115 = scmp.eq.s32.totalorder %s30, 1
      %p116 = por %p114, %p115
      %p118 = scmp.ne.s32.totalorder %s103, %s117
      %p119 = scmp.eq.s32.totalorder %s30, 0
      %p120 = por %p118, %p119
      %s122 = sadd.s32 %s121, 1
      %p125 = scmp.eq.s32.totalorder %s24, 1
      %p126 = scmp.ne.s32.totalorder %s121, %s123
      %p127 = scmp.eq.s32.totalorder %s24, 0
      %p128 = por %p126, %p127
      %p129 = scmp.ne.s32.totalorder %s121, %s123
      %p130 = scmp.eq.s32.totalorder %s29, 1
      %p131 = por %p129, %p130
      %p132 = scmp.ne.s32.totalorder %s123, %s124
      %p133 = scmp.eq.s32.totalorder %s29, 0
      %p134 = por %p132, %p133
      %p135 = scmp.ne.s32.totalorder %s123, %s124
      %p136 = scmp.eq.s32.totalorder %s30, 1
      %p137 = por %p135, %p136
      %p139 = scmp.ne.s32.totalorder %s124, %s138
      %p140 = scmp.eq.s32.totalorder %s30, 0
      %p141 = por %p139, %p140
      %s143 = sadd.s32 %s142, 1
      %p146 = scmp.eq.s32.totalorder %s24, 1
      %p147 = scmp.ne.s32.totalorder %s142, %s144
      %p148 = scmp.eq.s32.totalorder %s24, 0
      %p149 = por %p147, %p148
      %p150 = scmp.ne.s32.totalorder %s142, %s144
      %p151 = scmp.eq.s32.totalorder %s29, 1
      %p152 = por %p150, %p151
      %p153 = scmp.ne.s32.totalorder %s144, %s145
      %p154 = scmp.eq.s32.totalorder %s29, 0
      %p155 = por %p153, %p154
      %p156 = scmp.ne.s32.totalorder %s144, %s145
      %p157 = scmp.eq.s32.totalorder %s30, 1
      %p158 = por %p156, %p157
      %p160 = scmp.ne.s32.totalorder %s145, %s159
      %p161 = scmp.eq.s32.totalorder %s30, 0
      %p162 = por %p160, %p161
      %s164 = sadd.s32 %s163, 1
      %p167 = scmp.eq.s32.totalorder %s24, 1
      %p168 = scmp.ne.s32.totalorder %s163, %s165
      %p169 = scmp.eq.s32.totalorder %s24, 0
      %p170 = por %p168, %p169
      %p171 = scmp.ne.s32.totalorder %s163, %s165
      %p172 = scmp.eq.s32.totalorder %s29, 1
      %p173 = por %p171, %p172
      %p174 = scmp.ne.s32.totalorder %s165, %s166
      %p175 = scmp.eq.s32.totalorder %s29, 0
      %p176 = por %p174, %p175
      %p177 = scmp.ne.s32.totalorder %s165, %s166
      %p178 = scmp.eq.s32.totalorder %s30, 1
      %p179 = por %p177, %p178
      %p181 = scmp.ne.s32.totalorder %s166, %s180
      %p182 = scmp.eq.s32.totalorder %s30, 0
      %p183 = por %p181, %p182
      %s185 = sadd.s32 %s184, 1
      %p188 = scmp.eq.s32.totalorder %s24, 1
      %p189 = scmp.ne.s32.totalorder %s184, %s186
      %p190 = scmp.eq.s32.totalorder %s24, 0
      %p191 = por %p189, %p190
      %p192 = scmp.ne.s32.totalorder %s184, %s186
      %p193 = scmp.eq.s32.totalorder %s29, 1
      %p194 = por %p192, %p193
      %p195 = scmp.ne.s32.totalorder %s186, %s187
      %p196 = scmp.eq.s32.totalorder %s29, 0
      %p197 = por %p195, %p196
      %p198 = scmp.ne.s32.totalorder %s186, %s187
      %p199 = scmp.eq.s32.totalorder %s30, 1
      %p200 = por %p198, %p199
      %p202 = scmp.ne.s32.totalorder %s187, %s201
      %p203 = scmp.eq.s32.totalorder %s30, 0
      %p204 = por %p202, %p203
      %s206 = sadd.s32 %s205, 1
      %p209 = scmp.eq.s32.totalorder %s24, 1
      %p210 = scmp.ne.s32.totalorder %s205, %s207
      %p211 = scmp.eq.s32.totalorder %s24, 0
      %p212 = por %p210, %p211
      %p213 = scmp.ne.s32.totalorder %s205, %s207
      %p214 = scmp.eq.s32.totalorder %s29, 1
      %p215 = por %p213, %p214
      %p216 = scmp.ne.s32.totalorder %s207, %s208
      %p217 = scmp.eq.s32.totalorder %s29, 0
      %p218 = por %p216, %p217
      %p219 = scmp.ne.s32.totalorder %s207, %s208
      %p220 = scmp.eq.s32.totalorder %s30, 1
      %p221 = por %p219, %p220
      %p223 = scmp.ne.s32.totalorder %s208, %s222
      %p224 = scmp.eq.s32.totalorder %s30, 0
      %p225 = por %p223, %p224
      %s227 = sadd.s32 %s226, 1
      %p230 = scmp.eq.s32.totalorder %s24, 1
      %p231 = scmp.ne.s32.totalorder %s226, %s228
      %p232 = scmp.eq.s32.totalorder %s24, 0
      %p233 = por %p231, %p232
      %p234 = scmp.ne.s32.totalorder %s226, %s228
      %p235 = scmp.eq.s32.totalorder %s29, 1
      %p236 = por %p234, %p235
      %p237 = scmp.ne.s32.totalorder %s228, %s229
      %p238 = scmp.eq.s32.totalorder %s29, 0
      %p239 = por %p237, %p238
      %p240 = scmp.ne.s32.totalorder %s228, %s229
      %p241 = scmp.eq.s32.totalorder %s30, 1
      %p242 = por %p240, %p241
      %p244 = scmp.ne.s32.totalorder %s229, %s243
      %p245 = scmp.eq.s32.totalorder %s30, 0
      %p246 = por %p244, %p245
      %s248 = sadd.s32 %s247, 1
      %p251 = scmp.eq.s32.totalorder %s24, 1
      %p252 = scmp.ne.s32.totalorder %s247, %s249
      %p253 = scmp.eq.s32.totalorder %s24, 0
      %p254 = por %p252, %p253
      %p255 = scmp.ne.s32.totalorder %s247, %s249
      %p256 = scmp.eq.s32.totalorder %s29, 1
      %p257 = por %p255, %p256
      %p258 = scmp.ne.s32.totalorder %s249, %s250
      %p259 = scmp.eq.s32.totalorder %s29, 0
      %p260 = por %p258, %p259
      %p261 = scmp.ne.s32.totalorder %s249, %s250
      %p262 = scmp.eq.s32.totalorder %s30, 1
      %p263 = por %p261, %p262
      %p265 = scmp.ne.s32.totalorder %s250, %s264
      %p266 = scmp.eq.s32.totalorder %s30, 0
      %p267 = por %p265, %p266
      %s269 = sadd.s32 %s268, 1
      %p272 = scmp.eq.s32.totalorder %s24, 1
      %p273 = scmp.ne.s32.totalorder %s268, %s270
      %p274 = scmp.eq.s32.totalorder %s24, 0
      %p275 = por %p273, %p274
      %p276 = scmp.ne.s32.totalorder %s268, %s270
      %p277 = scmp.eq.s32.totalorder %s29, 1
      %p278 = por %p276, %p277
      %p279 = scmp.ne.s32.totalorder %s270, %s271
      %p280 = scmp.eq.s32.totalorder %s29, 0
      %p281 = por %p279, %p280
      %p282 = scmp.ne.s32.totalorder %s270, %s271
      %p283 = scmp.eq.s32.totalorder %s30, 1
      %p284 = por %p282, %p283
      %p286 = scmp.ne.s32.totalorder %s271, %s285
      %p287 = scmp.eq.s32.totalorder %s30, 0
      %p288 = por %p286, %p287
      %s290 = sadd.s32 %s289, 1
      %p293 = scmp.eq.s32.totalorder %s24, 1
      %p294 = scmp.ne.s32.totalorder %s289, %s291
      %p295 = scmp.eq.s32.totalorder %s24, 0
      %p296 = por %p294, %p295
      %p297 = scmp.ne.s32.totalorder %s289, %s291
      %p298 = scmp.eq.s32.totalorder %s29, 1
      %p299 = por %p297, %p298
      %p300 = scmp.ne.s32.totalorder %s291, %s292
      %p301 = scmp.eq.s32.totalorder %s29, 0
      %p302 = por %p300, %p301
      %p303 = scmp.ne.s32.totalorder %s291, %s292
      %p304 = scmp.eq.s32.totalorder %s30, 1
      %p305 = por %p303, %p304
      %p307 = scmp.ne.s32.totalorder %s292, %s306
      %p308 = scmp.eq.s32.totalorder %s30, 0
      %p309 = por %p307, %p308
      %s310 = ssub.s32 %s24, %s31
      %p311 = scmp.eq.s32.totalorder %s310, 0
      %s313 = sadd.s32 %s312, 1
      %s314 = scalar_select %p311, %s312, %s313
      %p317 = pneg %p311
      %p318 = scmp.eq.s32.totalorder %s24, 1
      %p319 = por %p317, %p318
      %p320 = scmp.ne.s32.totalorder %s312, %s315
      %p321 = scmp.eq.s32.totalorder %s24, 0
      %p322 = por %p320, %p321
      %p323 = scmp.ne.s32.totalorder %s312, %s315
      %p324 = scmp.eq.s32.totalorder %s29, 1
      %p325 = por %p323, %p324
      %p326 = scmp.ne.s32.totalorder %s315, %s316
      %p327 = scmp.eq.s32.totalorder %s29, 0
      %p328 = por %p326, %p327
      %p329 = scmp.ne.s32.totalorder %s315, %s316
      %p330 = scmp.eq.s32.totalorder %s30, 1
      %p331 = por %p329, %p330
      %p333 = scmp.ne.s32.totalorder %s316, %s332
      %p334 = scmp.eq.s32.totalorder %s30, 0
      %p335 = por %p333, %p334
      %p336 = scmp.le.s32.totalorder 1, %s24
      %p337 = scmp.lt.s32.totalorder %s24, 3
      %p338 = pnand %p336, %p337
      %p339 = pneg %p338
      // Predicated region
      $region9: #{tpu_custom_call.1} parent=5 // pred_check
        _
      $region10: #{tpu_custom_call.1} parent=5 // pred_check_branch
        %341 = sbr.rel (%p338) target = $region12
      $region11: #{tpu_custom_call.1} parent=5 // pred_region
        %s342 = ssub.s32 %s24, 1
        // Predicated region
        $region13: #{tpu_custom_call.1} parent=11 // pred_check
          %p343 = pneg %p71
        $region14: #{tpu_custom_call.1} parent=11 // pred_check_branch
          %345 = sbr.rel (%p343) target = $region16
        $region15: #{tpu_custom_call.1} parent=11 // pred_region
          _
        $region16: #{tpu_custom_call.1} parent=11 // pred_fallthru
          _
        // Predicated region
        $region17: #{tpu_custom_call.1} parent=11 // pred_check
          %p346 = pneg %p92
        $region18: #{tpu_custom_call.1} parent=11 // pred_check_branch
          %348 = sbr.rel (%p346) target = $region20
        $region19: #{tpu_custom_call.1} parent=11 // pred_region
          _
        $region20: #{tpu_custom_call.1} parent=11 // pred_fallthru
          _
        // Predicated region
        $region21: #{tpu_custom_call.1} parent=11 // pred_check
          %p349 = pneg %p113
        $region22: #{tpu_custom_call.1} parent=11 // pred_check_branch
          %351 = sbr.rel (%p349) target = $region24
        $region23: #{tpu_custom_call.1} parent=11 // pred_region
          _
        $region24: #{tpu_custom_call.1} parent=11 // pred_fallthru
          _
        // Predicated region
        $region25: #{tpu_custom_call.1} parent=11 // pred_check
          %p352 = pneg %p134
        $region26: #{tpu_custom_call.1} parent=11 // pred_check_branch
          %354 = sbr.rel (%p352) target = $region28
        $region27: #{tpu_custom_call.1} parent=11 // pred_region
          _
        $region28: #{tpu_custom_call.1} parent=11 // pred_fallthru
          _
        // Predicated region
        $region29: #{tpu_custom_call.1} parent=11 // pred_check
          %p355 = pneg %p155
        $region30: #{tpu_custom_call.1} parent=11 // pred_check_branch
          %357 = sbr.rel (%p355) target = $region32
        $region31: #{tpu_custom_call.1} parent=11 // pred_region
          _
        $region32: #{tpu_custom_call.1} parent=11 // pred_fallthru
          _
        // Predicated region
        $region33: #{tpu_custom_call.1} parent=11 // pred_check
          %p358 = pneg %p176
        $region34: #{tpu_custom_call.1} parent=11 // pred_check_branch
          %360 = sbr.rel (%p358) target = $region36
        $region35: #{tpu_custom_call.1} parent=11 // pred_region
          _
        $region36: #{tpu_custom_call.1} parent=11 // pred_fallthru
          _
        // Predicated region
        $region37: #{tpu_custom_call.1} parent=11 // pred_check
          %p361 = pneg %p197
        $region38: #{tpu_custom_call.1} parent=11 // pred_check_branch
          %363 = sbr.rel (%p361) target = $region40
        $region39: #{tpu_custom_call.1} parent=11 // pred_region
          _
        $region40: #{tpu_custom_call.1} parent=11 // pred_fallthru
          _
        // Predicated region
        $region41: #{tpu_custom_call.1} parent=11 // pred_check
          %p364 = pneg %p218
        $region42: #{tpu_custom_call.1} parent=11 // pred_check_branch
          %366 = sbr.rel (%p364) target = $region44
        $region43: #{tpu_custom_call.1} parent=11 // pred_region
          _
        $region44: #{tpu_custom_call.1} parent=11 // pred_fallthru
          _
        // Predicated region
        $region45: #{tpu_custom_call.1} parent=11 // pred_check
          %p367 = pneg %p239
        $region46: #{tpu_custom_call.1} parent=11 // pred_check_branch
          %369 = sbr.rel (%p367) target = $region48
        $region47: #{tpu_custom_call.1} parent=11 // pred_region
          _
        $region48: #{tpu_custom_call.1} parent=11 // pred_fallthru
          _
        // Predicated region
        $region49: #{tpu_custom_call.1} parent=11 // pred_check
          %p370 = pneg %p260
        $region50: #{tpu_custom_call.1} parent=11 // pred_check_branch
          %372 = sbr.rel (%p370) target = $region52
        $region51: #{tpu_custom_call.1} parent=11 // pred_region
          _
        $region52: #{tpu_custom_call.1} parent=11 // pred_fallthru
          _
        // Predicated region
        $region53: #{tpu_custom_call.1} parent=11 // pred_check
          %p373 = pneg %p281
        $region54: #{tpu_custom_call.1} parent=11 // pred_check_branch
          %375 = sbr.rel (%p373) target = $region56
        $region55: #{tpu_custom_call.1} parent=11 // pred_region
          _
        $region56: #{tpu_custom_call.1} parent=11 // pred_fallthru
          _
        // Predicated region
        $region57: #{tpu_custom_call.1} parent=11 // pred_check
          %p376 = pneg %p302
        $region58: #{tpu_custom_call.1} parent=11 // pred_check_branch
          %378 = sbr.rel (%p376) target = $region60
        $region59: #{tpu_custom_call.1} parent=11 // pred_region
          _
        $region60: #{tpu_custom_call.1} parent=11 // pred_fallthru
          _
      $region12: #{tpu_custom_call.1} parent=5 // pred_fallthru
        _
      %p379 = scmp.lt.s32.totalorder %s24, 2
      // Predicated region
      $region61: #{tpu_custom_call.1} parent=5 // pred_check
        %p380 = pneg %p379
      $region62: #{tpu_custom_call.1} parent=5 // pred_check_branch
        %382 = sbr.rel (%p380) target = $region64
      $region63: #{tpu_custom_call.1} parent=5 // pred_region
        // Predicated region
        $region65: #{tpu_custom_call.1} parent=63 // pred_check
          %p383 = pneg %p44
        $region66: #{tpu_custom_call.1} parent=63 // pred_check_branch
          %385 = sbr.rel (%p383) target = $region68
        $region67: #{tpu_custom_call.1} parent=63 // pred_region
          %s386 = smul.u32 4, %s24
          %p387 = scmp.lt.s32.totalorder %s386, 7
          %s388 = scalar_select %p387, %s386, 7
          %s389 = smul.addr %s388, 2
          %s390 = scalar_lea.vmem %s0, %s389
          %s391 = smul.u32 4, %s24
        $region68: #{tpu_custom_call.1} parent=63 // pred_fallthru
          _
      $region64: #{tpu_custom_call.1} parent=5 // pred_fallthru
        _
      %p392 = scmp.le.s32.totalorder 1, %s24
      %p393 = scmp.lt.s32.totalorder %s24, 3
      %p394 = pnand %p392, %p393
      %p395 = pneg %p394
      // Predicated region
      $region69: #{tpu_custom_call.1} parent=5 // pred_check
        _
      $region70: #{tpu_custom_call.1} parent=5 // pred_check_branch
        %397 = sbr.rel (%p394) target = $region72
      $region71: #{tpu_custom_call.1} parent=5 // pred_region
        %s398 = ssub.s32 %s24, 1
        %s399 = smul.u32 4, %s29
        %p400 = scmp.lt.s32.totalorder %s399, 7
        %s401 = scalar_select %p400, %s399, 7
        %s402 = smul.addr %s401, 2
        %s403 = scalar_lea.vmem %s0, %s402
        %p404 = pneg %p50
        %p405 = pneg %p47
        %p406 = pneg %p71
        %p407 = pneg %p68
        %p408 = pneg %p92
        %p409 = pneg %p89
        %p410 = pneg %p113
        %p411 = pneg %p110
        %p412 = pneg %p134
        %p413 = pneg %p131
        %p414 = pneg %p155
        %p415 = pneg %p152
        %p416 = pneg %p176
        %p417 = pneg %p173
        %p418 = pneg %p197
        %p419 = pneg %p194
        %p420 = pneg %p218
        %p421 = pneg %p215
        %p422 = pneg %p239
        %p423 = pneg %p236
        %p424 = pneg %p260
        %p425 = pneg %p257
        %p426 = pneg %p281
        %p427 = pneg %p278
        %p428 = pneg %p302
        %p429 = pneg %p299
        %p430 = pneg %p328
        %p431 = pneg %p325
        %s432 = sand.u32 %s315, 1
        %s433 = scalar_lea.sflag [#allocation4], %s432
        %s434 = sand.u32 %s315, 1
        %s435 = smul.addr %s434, 4
        %s436 = scalar_lea.vmem [#allocation3], %s435
        %s437 = smul.u32 4, %s29
        %p438 = scmp.lt.s32.totalorder %s437, 7
        %s439 = scalar_select %p438, %s437, 7
        %s440 = smul.addr %s439, 2
        %s441 = scalar_lea.vmem %s0, %s440
        %s442 = smul.u32 4, %s29
        %s443 = smul.u32 4, %s29
        %v445 = vld [vmem:[%s441] sm:$0xff]
        %v446 = vld [vmem:[%s1] sm:$0xff]
        %v447 = vld [vmem:[%s1 + $0x8] sm:$0xff]
        %v448 = vld [vmem:[%s1 + $0x10] sm:$0xff]
        %v449 = vld [vmem:[%s1 + $0x18] sm:$0xff]
        %451 = vset.pattern.permute.xlu0 0
        %452 = vperm.xlu0 %451, %v446
        %v453 = vpop.permute.xlu0 %452
        %456 = vset.pattern.permute.xlu0 0
        %457 = vperm.xlu0 %456, %v447
        %v458 = vpop.permute.xlu0 %457
        %461 = vset.pattern.permute.xlu0 0
        %462 = vperm.xlu0 %461, %v448
        %v463 = vpop.permute.xlu0 %462
        %466 = vset.pattern.permute.xlu0 0
        %467 = vperm.xlu0 %466, %v449
        %v468 = vpop.permute.xlu0 %467
        %v471 = vlaneseq
        %v472 = vshrl.u32 %v471, 7
        %v473 = vsub.s32 0, %v472
        %v474 = vrot.slane %v445, %v473
        %v475 = vlaneseq
        %v476 = vshrl.u32 %v475, 7
        %v477 = vsub.s32 2, %v476
        %v478 = vrot.slane %v445, %v477
        %v479 = vlaneseq
        %v480 = vshrl.u32 %v479, 7
        %v481 = vsub.s32 4, %v480
        %v482 = vrot.slane %v445, %v481
        %v483 = vlaneseq
        %v484 = vshrl.u32 %v483, 7
        %v485 = vsub.s32 6, %v484
        %v486 = vrot.slane %v445, %v485
        %v491 = vlaneseq
        %v492 = vshrl.u32 %v491, 7
        %v493 = vsub.s32 0, %v492
        %v494 = vrot.slane %v474, %v493
        %v495 = vlaneseq
        %v496 = vshrl.u32 %v495, 7
        %v497 = vsub.s32 0, %v496
        %v498 = vrot.slane %v478, %v497
        %v499 = vlaneseq
        %v500 = vshrl.u32 %v499, 7
        %v501 = vsub.s32 0, %v500
        %v502 = vrot.slane %v482, %v501
        %v503 = vlaneseq
        %v504 = vshrl.u32 %v503, 7
        %v505 = vsub.s32 0, %v504
        %v506 = vrot.slane %v486, %v505
        %v507 = vmul.f32 %v453, %v494
        %v508 = vmul.f32 %v453, %v498
        %v509 = vmul.f32 %v453, %v502
        %v510 = vmul.f32 %v453, %v506
        %v511 = vmul.f32 %v458, %v494
        %v512 = vmul.f32 %v458, %v498
        %v513 = vmul.f32 %v458, %v502
        %v514 = vmul.f32 %v458, %v506
        %v515 = vmul.f32 %v463, %v494
        %v516 = vmul.f32 %v463, %v498
        %v517 = vmul.f32 %v463, %v502
        %v518 = vmul.f32 %v463, %v506
        %v519 = vmul.f32 %v468, %v494
        %v520 = vmul.f32 %v468, %v498
        %v521 = vmul.f32 %v468, %v502
        %v522 = vmul.f32 %v468, %v506
        %523 = vset.pattern.permute.xlu0 1
        %524 = vperm.xlu0 %523, %v446
        %v525 = vpop.permute.xlu0 %524
        %527 = vset.pattern.permute.xlu0 1
        %528 = vperm.xlu0 %527, %v447
        %v529 = vpop.permute.xlu0 %528
        %531 = vset.pattern.permute.xlu0 1
        %532 = vperm.xlu0 %531, %v448
        %v533 = vpop.permute.xlu0 %532
        %535 = vset.pattern.permute.xlu0 1
        %536 = vperm.xlu0 %535, %v449
        %v537 = vpop.permute.xlu0 %536
        %v539 = vlaneseq
        %v540 = vshrl.u32 %v539, 7
        %v541 = vsub.s32 1, %v540
        %v542 = vrot.slane %v445, %v541
        %v543 = vlaneseq
        %v544 = vshrl.u32 %v543, 7
        %v545 = vsub.s32 3, %v544
        %v546 = vrot.slane %v445, %v545
        %v547 = vlaneseq
        %v548 = vshrl.u32 %v547, 7
        %v549 = vsub.s32 5, %v548
        %v550 = vrot.slane %v445, %v549
        %v551 = vlaneseq
        %v552 = vshrl.u32 %v551, 7
        %v553 = vsub.s32 7, %v552
        %v554 = vrot.slane %v445, %v553
        %v559 = vlaneseq
        %v560 = vshrl.u32 %v559, 7
        %v561 = vsub.s32 1, %v560
        %v562 = vrot.slane %v542, %v561
        %v563 = vlaneseq
        %v564 = vshrl.u32 %v563, 7
        %v565 = vsub.s32 1, %v564
        %v566 = vrot.slane %v546, %v565
        %v567 = vlaneseq
        %v568 = vshrl.u32 %v567, 7
        %v569 = vsub.s32 1, %v568
        %v570 = vrot.slane %v550, %v569
        %v571 = vlaneseq
        %v572 = vshrl.u32 %v571, 7
        %v573 = vsub.s32 1, %v572
        %v574 = vrot.slane %v554, %v573
        %v575 = vmul.f32 %v525, %v562
        %v576 = vmul.f32 %v525, %v566
        %v577 = vmul.f32 %v525, %v570
        %v578 = vmul.f32 %v525, %v574
        %v579 = vmul.f32 %v529, %v562
        %v580 = vmul.f32 %v529, %v566
        %v581 = vmul.f32 %v529, %v570
        %v582 = vmul.f32 %v529, %v574
        %v583 = vmul.f32 %v533, %v562
        %v584 = vmul.f32 %v533, %v566
        %v585 = vmul.f32 %v533, %v570
        %v586 = vmul.f32 %v533, %v574
        %v587 = vmul.f32 %v537, %v562
        %v588 = vmul.f32 %v537, %v566
        %v589 = vmul.f32 %v537, %v570
        %v590 = vmul.f32 %v537, %v574
        %v591 = vadd.f32 %v507, %v575
        %v592 = vadd.f32 %v508, %v576
        %v593 = vadd.f32 %v509, %v577
        %v594 = vadd.f32 %v510, %v578
        %v595 = vadd.f32 %v511, %v579
        %v596 = vadd.f32 %v512, %v580
        %v597 = vadd.f32 %v513, %v581
        %v598 = vadd.f32 %v514, %v582
        %v599 = vadd.f32 %v515, %v583
        %v600 = vadd.f32 %v516, %v584
        %v601 = vadd.f32 %v517, %v585
        %v602 = vadd.f32 %v518, %v586
        %v603 = vadd.f32 %v519, %v587
        %v604 = vadd.f32 %v520, %v588
        %v605 = vadd.f32 %v521, %v589
        %v606 = vadd.f32 %v522, %v590
        %v607 = vld [vmem:[%s2] sm:$0xff]
        %v608 = vld [vmem:[%s2 + $0x8] sm:$0xff]
        %v609 = vld [vmem:[%s2 + $0x10] sm:$0xff]
        %v610 = vld [vmem:[%s2 + $0x18] sm:$0xff]
        %612 = vset.pattern.permute.xlu0 0
        %613 = vperm.xlu0 %612, %v607
        %v614 = vpop.permute.xlu0 %613
        %617 = vset.pattern.permute.xlu0 0
        %618 = vperm.xlu0 %617, %v608
        %v619 = vpop.permute.xlu0 %618
        %622 = vset.pattern.permute.xlu0 0
        %623 = vperm.xlu0 %622, %v609
        %v624 = vpop.permute.xlu0 %623
        %627 = vset.pattern.permute.xlu0 0
        %628 = vperm.xlu0 %627, %v610
        %v629 = vpop.permute.xlu0 %628
        %v631 = vadd.f32 %v591, %v614
        %v632 = vadd.f32 %v592, %v614
        %v633 = vadd.f32 %v593, %v614
        %v634 = vadd.f32 %v594, %v614
        %v635 = vadd.f32 %v595, %v619
        %v636 = vadd.f32 %v596, %v619
        %v637 = vadd.f32 %v597, %v619
        %v638 = vadd.f32 %v598, %v619
        %v639 = vadd.f32 %v599, %v624
        %v640 = vadd.f32 %v600, %v624
        %v641 = vadd.f32 %v601, %v624
        %v642 = vadd.f32 %v602, %v624
        %v643 = vadd.f32 %v603, %v629
        %v644 = vadd.f32 %v604, %v629
        %v645 = vadd.f32 %v605, %v629
        %v646 = vadd.f32 %v606, %v629
        %v647 = vmax.f32 %v631, 0.0
        %v648 = vmax.f32 %v632, 0.0
        %v649 = vmax.f32 %v633, 0.0
        %v650 = vmax.f32 %v634, 0.0
        %v651 = vmax.f32 %v635, 0.0
        %v652 = vmax.f32 %v636, 0.0
        %v653 = vmax.f32 %v637, 0.0
        %v654 = vmax.f32 %v638, 0.0
        %v655 = vmax.f32 %v639, 0.0
        %v656 = vmax.f32 %v640, 0.0
        %v657 = vmax.f32 %v641, 0.0
        %v658 = vmax.f32 %v642, 0.0
        %v659 = vmax.f32 %v643, 0.0
        %v660 = vmax.f32 %v644, 0.0
        %v661 = vmax.f32 %v645, 0.0
        %v662 = vmax.f32 %v646, 0.0
        %v663 = vld [vmem:[%s3] sm:$0xf]
        %v664 = vld [vmem:[%s3 + $0x4] sm:$0xf]
        %v665 = vld [vmem:[%s3 + $0x8] sm:$0xf]
        %v666 = vld [vmem:[%s3 + $0xc] sm:$0xf]
        %v667 = vld [vmem:[%s3 + $0x10] sm:$0xf]
        %v668 = vld [vmem:[%s3 + $0x14] sm:$0xf]
        %v669 = vld [vmem:[%s3 + $0x18] sm:$0xf]
        %v670 = vld [vmem:[%s3 + $0x1c] sm:$0xf]
        %v671 = vld [vmem:[%s3 + $0x20] sm:$0xf]
        %v672 = vld [vmem:[%s3 + $0x24] sm:$0xf]
        %v673 = vld [vmem:[%s3 + $0x28] sm:$0xf]
        %v674 = vld [vmem:[%s3 + $0x2c] sm:$0xf]
        %v675 = vld [vmem:[%s3 + $0x30] sm:$0xf]
        %v676 = vld [vmem:[%s3 + $0x34] sm:$0xf]
        %v677 = vld [vmem:[%s3 + $0x38] sm:$0xf]
        %v678 = vld [vmem:[%s3 + $0x3c] sm:$0xf]
        %v679 = vld [vmem:[%s3 + $0x40] sm:$0xf]
        %v680 = vld [vmem:[%s3 + $0x44] sm:$0xf]
        %v681 = vld [vmem:[%s3 + $0x48] sm:$0xf]
        %v682 = vld [vmem:[%s3 + $0x4c] sm:$0xf]
        %v683 = vld [vmem:[%s3 + $0x50] sm:$0xf]
        %v684 = vld [vmem:[%s3 + $0x54] sm:$0xf]
        %v685 = vld [vmem:[%s3 + $0x58] sm:$0xf]
        %v686 = vld [vmem:[%s3 + $0x5c] sm:$0xf]
        %v687 = vld [vmem:[%s3 + $0x60] sm:$0xf]
        %v688 = vld [vmem:[%s3 + $0x64] sm:$0xf]
        %v689 = vld [vmem:[%s3 + $0x68] sm:$0xf]
        %v690 = vld [vmem:[%s3 + $0x6c] sm:$0xf]
        %v691 = vld [vmem:[%s3 + $0x70] sm:$0xf]
        %v692 = vld [vmem:[%s3 + $0x74] sm:$0xf]
        %v693 = vld [vmem:[%s3 + $0x78] sm:$0xf]
        %v694 = vld [vmem:[%s3 + $0x7c] sm:$0xf]
        %v695 = vld [vmem:[%s3 + $0x80] sm:$0xf]
        %v696 = vld [vmem:[%s3 + $0x84] sm:$0xf]
        %v697 = vld [vmem:[%s3 + $0x88] sm:$0xf]
        %v698 = vld [vmem:[%s3 + $0x8c] sm:$0xf]
        %v699 = vld [vmem:[%s3 + $0x90] sm:$0xf]
        %v700 = vld [vmem:[%s3 + $0x94] sm:$0xf]
        %v701 = vld [vmem:[%s3 + $0x98] sm:$0xf]
        %v702 = vld [vmem:[%s3 + $0x9c] sm:$0xf]
        %v703 = vld [vmem:[%s3 + $0xa0] sm:$0xf]
        %v704 = vld [vmem:[%s3 + $0xa4] sm:$0xf]
        %v705 = vld [vmem:[%s3 + $0xa8] sm:$0xf]
        %v706 = vld [vmem:[%s3 + $0xac] sm:$0xf]
        %v707 = vld [vmem:[%s3 + $0xb0] sm:$0xf]
        %v708 = vld [vmem:[%s3 + $0xb4] sm:$0xf]
        %v709 = vld [vmem:[%s3 + $0xb8] sm:$0xf]
        %v710 = vld [vmem:[%s3 + $0xbc] sm:$0xf]
        %v711 = vld [vmem:[%s3 + $0xc0] sm:$0xf]
        %v712 = vld [vmem:[%s3 + $0xc4] sm:$0xf]
        %v713 = vld [vmem:[%s3 + $0xc8] sm:$0xf]
        %v714 = vld [vmem:[%s3 + $0xcc] sm:$0xf]
        %v715 = vld [vmem:[%s3 + $0xd0] sm:$0xf]
        %v716 = vld [vmem:[%s3 + $0xd4] sm:$0xf]
        %v717 = vld [vmem:[%s3 + $0xd8] sm:$0xf]
        %v718 = vld [vmem:[%s3 + $0xdc] sm:$0xf]
        %v719 = vld [vmem:[%s3 + $0xe0] sm:$0xf]
        %v720 = vld [vmem:[%s3 + $0xe4] sm:$0xf]
        %v721 = vld [vmem:[%s3 + $0xe8] sm:$0xf]
        %v722 = vld [vmem:[%s3 + $0xec] sm:$0xf]
        %v723 = vld [vmem:[%s3 + $0xf0] sm:$0xf]
        %v724 = vld [vmem:[%s3 + $0xf4] sm:$0xf]
        %v725 = vld [vmem:[%s3 + $0xf8] sm:$0xf]
        %v726 = vld [vmem:[%s3 + $0xfc] sm:$0xf]
        %v727 = vpack.c.bf16 %v651, %v647
        %v728 = vpack.c.bf16 %v652, %v648
        %v729 = vpack.c.bf16 %v653, %v649
        %v730 = vpack.c.bf16 %v654, %v650
        %v731 = vpack.c.bf16 %v659, %v655
        %v732 = vpack.c.bf16 %v660, %v656
        %v733 = vpack.c.bf16 %v661, %v657
        %v734 = vpack.c.bf16 %v662, %v658
        %v735 = vld [vmem:[%s4] sm:$0xff]
        %v736 = vld [vmem:[%s4 + $0x8] sm:$0xff]
        %v737 = vld [vmem:[%s4 + $0x10] sm:$0xff]
        %v738 = vld [vmem:[%s4 + $0x18] sm:$0xff]
        %v739 = vld [vmem:[%s4 + $0x20] sm:$0xff]
        %v740 = vld [vmem:[%s4 + $0x28] sm:$0xff]
        %v741 = vld [vmem:[%s4 + $0x30] sm:$0xff]
        %v742 = vld [vmem:[%s4 + $0x38] sm:$0xff]
        %v743 = vld [vmem:[%s4 + $0x40] sm:$0xff]
        %v744 = vld [vmem:[%s4 + $0x48] sm:$0xff]
        %v745 = vld [vmem:[%s4 + $0x50] sm:$0xff]
        %v746 = vld [vmem:[%s4 + $0x58] sm:$0xff]
        %v747 = vld [vmem:[%s4 + $0x60] sm:$0xff]
        %v748 = vld [vmem:[%s4 + $0x68] sm:$0xff]
        %v749 = vld [vmem:[%s4 + $0x70] sm:$0xff]
        %v750 = vld [vmem:[%s4 + $0x78] sm:$0xff]
        %v751 = vld [vmem:[%s4 + $0x80] sm:$0xff]
        %v752 = vld [vmem:[%s4 + $0x88] sm:$0xff]
        %v753 = vld [vmem:[%s4 + $0x90] sm:$0xff]
        %v754 = vld [vmem:[%s4 + $0x98] sm:$0xff]
        %v755 = vld [vmem:[%s4 + $0xa0] sm:$0xff]
        %v756 = vld [vmem:[%s4 + $0xa8] sm:$0xff]
        %v757 = vld [vmem:[%s4 + $0xb0] sm:$0xff]
        %v758 = vld [vmem:[%s4 + $0xb8] sm:$0xff]
        %v759 = vld [vmem:[%s4 + $0xc0] sm:$0xff]
        %v760 = vld [vmem:[%s4 + $0xc8] sm:$0xff]
        %v761 = vld [vmem:[%s4 + $0xd0] sm:$0xff]
        %v762 = vld [vmem:[%s4 + $0xd8] sm:$0xff]
        %v763 = vld [vmem:[%s4 + $0xe0] sm:$0xff]
        %v764 = vld [vmem:[%s4 + $0xe8] sm:$0xff]
        %v765 = vld [vmem:[%s4 + $0xf0] sm:$0xff]
        %v766 = vld [vmem:[%s4 + $0xf8] sm:$0xff]
        %v767 = vld [vmem:[%s4 + $0x100] sm:$0xff]
        %v768 = vld [vmem:[%s4 + $0x108] sm:$0xff]
        %v769 = vld [vmem:[%s4 + $0x110] sm:$0xff]
        %v770 = vld [vmem:[%s4 + $0x118] sm:$0xff]
        %v771 = vld [vmem:[%s4 + $0x120] sm:$0xff]
        %v772 = vld [vmem:[%s4 + $0x128] sm:$0xff]
        %v773 = vld [vmem:[%s4 + $0x130] sm:$0xff]
        %v774 = vld [vmem:[%s4 + $0x138] sm:$0xff]
        %v775 = vld [vmem:[%s4 + $0x140] sm:$0xff]
        %v776 = vld [vmem:[%s4 + $0x148] sm:$0xff]
        %v777 = vld [vmem:[%s4 + $0x150] sm:$0xff]
        %v778 = vld [vmem:[%s4 + $0x158] sm:$0xff]
        %v779 = vld [vmem:[%s4 + $0x160] sm:$0xff]
        %v780 = vld [vmem:[%s4 + $0x168] sm:$0xff]
        %v781 = vld [vmem:[%s4 + $0x170] sm:$0xff]
        %v782 = vld [vmem:[%s4 + $0x178] sm:$0xff]
        %v783 = vld [vmem:[%s4 + $0x180] sm:$0xff]
        %v784 = vld [vmem:[%s4 + $0x188] sm:$0xff]
        %v785 = vld [vmem:[%s4 + $0x190] sm:$0xff]
        %v786 = vld [vmem:[%s4 + $0x198] sm:$0xff]
        %v787 = vld [vmem:[%s4 + $0x1a0] sm:$0xff]
        %v788 = vld [vmem:[%s4 + $0x1a8] sm:$0xff]
        %v789 = vld [vmem:[%s4 + $0x1b0] sm:$0xff]
        %v790 = vld [vmem:[%s4 + $0x1b8] sm:$0xff]
        %v791 = vld [vmem:[%s4 + $0x1c0] sm:$0xff]
        %v792 = vld [vmem:[%s4 + $0x1c8] sm:$0xff]
        %v793 = vld [vmem:[%s4 + $0x1d0] sm:$0xff]
        %v794 = vld [vmem:[%s4 + $0x1d8] sm:$0xff]
        %v795 = vld [vmem:[%s4 + $0x1e0] sm:$0xff]
        %v796 = vld [vmem:[%s4 + $0x1e8] sm:$0xff]
        %v797 = vld [vmem:[%s4 + $0x1f0] sm:$0xff]
        %v798 = vld [vmem:[%s4 + $0x1f8] sm:$0xff]
        %800 = vset.pattern.permute.xlu0 0
        %801 = vperm.xlu0 %800, %v735
        %v802 = vpop.permute.xlu0 %801
        %805 = vset.pattern.permute.xlu0 0
        %806 = vperm.xlu0 %805, %v736
        %v807 = vpop.permute.xlu0 %806
        %810 = vset.pattern.permute.xlu0 0
        %811 = vperm.xlu0 %810, %v737
        %v812 = vpop.permute.xlu0 %811
        %815 = vset.pattern.permute.xlu0 0
        %816 = vperm.xlu0 %815, %v738
        %v817 = vpop.permute.xlu0 %816
        %820 = vset.pattern.permute.xlu0 0
        %821 = vperm.xlu0 %820, %v739
        %v822 = vpop.permute.xlu0 %821
        %825 = vset.pattern.permute.xlu0 0
        %826 = vperm.xlu0 %825, %v740
        %v827 = vpop.permute.xlu0 %826
        %830 = vset.pattern.permute.xlu0 0
        %831 = vperm.xlu0 %830, %v741
        %v832 = vpop.permute.xlu0 %831
        %835 = vset.pattern.permute.xlu0 0
        %836 = vperm.xlu0 %835, %v742
        %v837 = vpop.permute.xlu0 %836
        %840 = vset.pattern.permute.xlu0 0
        %841 = vperm.xlu0 %840, %v743
        %v842 = vpop.permute.xlu0 %841
        %845 = vset.pattern.permute.xlu0 0
        %846 = vperm.xlu0 %845, %v744
        %v847 = vpop.permute.xlu0 %846
        %850 = vset.pattern.permute.xlu0 0
        %851 = vperm.xlu0 %850, %v745
        %v852 = vpop.permute.xlu0 %851
        %855 = vset.pattern.permute.xlu0 0
        %856 = vperm.xlu0 %855, %v746
        %v857 = vpop.permute.xlu0 %856
        %860 = vset.pattern.permute.xlu0 0
        %861 = vperm.xlu0 %860, %v747
        %v862 = vpop.permute.xlu0 %861
        %865 = vset.pattern.permute.xlu0 0
        %866 = vperm.xlu0 %865, %v748
        %v867 = vpop.permute.xlu0 %866
        %870 = vset.pattern.permute.xlu0 0
        %871 = vperm.xlu0 %870, %v749
        %v872 = vpop.permute.xlu0 %871
        %875 = vset.pattern.permute.xlu0 0
        %876 = vperm.xlu0 %875, %v750
        %v877 = vpop.permute.xlu0 %876
        %880 = vset.pattern.permute.xlu0 0
        %881 = vperm.xlu0 %880, %v751
        %v882 = vpop.permute.xlu0 %881
        %885 = vset.pattern.permute.xlu0 0
        %886 = vperm.xlu0 %885, %v752
        %v887 = vpop.permute.xlu0 %886
        %890 = vset.pattern.permute.xlu0 0
        %891 = vperm.xlu0 %890, %v753
        %v892 = vpop.permute.xlu0 %891
        %895 = vset.pattern.permute.xlu0 0
        %896 = vperm.xlu0 %895, %v754
        %v897 = vpop.permute.xlu0 %896
        %900 = vset.pattern.permute.xlu0 0
        %901 = vperm.xlu0 %900, %v755
        %v902 = vpop.permute.xlu0 %901
        %905 = vset.pattern.permute.xlu0 0
        %906 = vperm.xlu0 %905, %v756
        %v907 = vpop.permute.xlu0 %906
        %910 = vset.pattern.permute.xlu0 0
        %911 = vperm.xlu0 %910, %v757
        %v912 = vpop.permute.xlu0 %911
        %915 = vset.pattern.permute.xlu0 0
        %916 = vperm.xlu0 %915, %v758
        %v917 = vpop.permute.xlu0 %916
        %920 = vset.pattern.permute.xlu0 0
        %921 = vperm.xlu0 %920, %v759
        %v922 = vpop.permute.xlu0 %921
        %925 = vset.pattern.permute.xlu0 0
        %926 = vperm.xlu0 %925, %v760
        %v927 = vpop.permute.xlu0 %926
        %930 = vset.pattern.permute.xlu0 0
        %931 = vperm.xlu0 %930, %v761
        %v932 = vpop.permute.xlu0 %931
        %935 = vset.pattern.permute.xlu0 0
        %936 = vperm.xlu0 %935, %v762
        %v937 = vpop.permute.xlu0 %936
        %940 = vset.pattern.permute.xlu0 0
        %941 = vperm.xlu0 %940, %v763
        %v942 = vpop.permute.xlu0 %941
        %945 = vset.pattern.permute.xlu0 0
        %946 = vperm.xlu0 %945, %v764
        %v947 = vpop.permute.xlu0 %946
        %950 = vset.pattern.permute.xlu0 0
        %951 = vperm.xlu0 %950, %v765
        %v952 = vpop.permute.xlu0 %951
        %955 = vset.pattern.permute.xlu0 0
        %956 = vperm.xlu0 %955, %v766
        %v957 = vpop.permute.xlu0 %956
        %960 = vset.pattern.permute.xlu0 0
        %961 = vperm.xlu0 %960, %v767
        %v962 = vpop.permute.xlu0 %961
        %965 = vset.pattern.permute.xlu0 0
        %966 = vperm.xlu0 %965, %v768
        %v967 = vpop.permute.xlu0 %966
        %970 = vset.pattern.permute.xlu0 0
        %971 = vperm.xlu0 %970, %v769
        %v972 = vpop.permute.xlu0 %971
        %975 = vset.pattern.permute.xlu0 0
        %976 = vperm.xlu0 %975, %v770
        %v977 = vpop.permute.xlu0 %976
        %980 = vset.pattern.permute.xlu0 0
        %981 = vperm.xlu0 %980, %v771
        %v982 = vpop.permute.xlu0 %981
        %985 = vset.pattern.permute.xlu0 0
        %986 = vperm.xlu0 %985, %v772
        %v987 = vpop.permute.xlu0 %986
        %990 = vset.pattern.permute.xlu0 0
        %991 = vperm.xlu0 %990, %v773
        %v992 = vpop.permute.xlu0 %991
        %995 = vset.pattern.permute.xlu0 0
        %996 = vperm.xlu0 %995, %v774
        %v997 = vpop.permute.xlu0 %996
        %1000 = vset.pattern.permute.xlu0 0
        %1001 = vperm.xlu0 %1000, %v775
        %v1002 = vpop.permute.xlu0 %1001
        %1005 = vset.pattern.permute.xlu0 0
        %1006 = vperm.xlu0 %1005, %v776
        %v1007 = vpop.permute.xlu0 %1006
        %1010 = vset.pattern.permute.xlu0 0
        %1011 = vperm.xlu0 %1010, %v777
        %v1012 = vpop.permute.xlu0 %1011
        %1015 = vset.pattern.permute.xlu0 0
        %1016 = vperm.xlu0 %1015, %v778
        %v1017 = vpop.permute.xlu0 %1016
        %1020 = vset.pattern.permute.xlu0 0
        %1021 = vperm.xlu0 %1020, %v779
        %v1022 = vpop.permute.xlu0 %1021
        %1025 = vset.pattern.permute.xlu0 0
        %1026 = vperm.xlu0 %1025, %v780
        %v1027 = vpop.permute.xlu0 %1026
        %1030 = vset.pattern.permute.xlu0 0
        %1031 = vperm.xlu0 %1030, %v781
        %v1032 = vpop.permute.xlu0 %1031
        %1035 = vset.pattern.permute.xlu0 0
        %1036 = vperm.xlu0 %1035, %v782
        %v1037 = vpop.permute.xlu0 %1036
        %1040 = vset.pattern.permute.xlu0 0
        %1041 = vperm.xlu0 %1040, %v783
        %v1042 = vpop.permute.xlu0 %1041
        %1045 = vset.pattern.permute.xlu0 0
        %1046 = vperm.xlu0 %1045, %v784
        %v1047 = vpop.permute.xlu0 %1046
        %1050 = vset.pattern.permute.xlu0 0
        %1051 = vperm.xlu0 %1050, %v785
        %v1052 = vpop.permute.xlu0 %1051
        %1055 = vset.pattern.permute.xlu0 0
        %1056 = vperm.xlu0 %1055, %v786
        %v1057 = vpop.permute.xlu0 %1056
        %1060 = vset.pattern.permute.xlu0 0
        %1061 = vperm.xlu0 %1060, %v787
        %v1062 = vpop.permute.xlu0 %1061
        %1065 = vset.pattern.permute.xlu0 0
        %1066 = vperm.xlu0 %1065, %v788
        %v1067 = vpop.permute.xlu0 %1066
        %1070 = vset.pattern.permute.xlu0 0
        %1071 = vperm.xlu0 %1070, %v789
        %v1072 = vpop.permute.xlu0 %1071
        %1075 = vset.pattern.permute.xlu0 0
        %1076 = vperm.xlu0 %1075, %v790
        %v1077 = vpop.permute.xlu0 %1076
        %1080 = vset.pattern.permute.xlu0 0
        %1081 = vperm.xlu0 %1080, %v791
        %v1082 = vpop.permute.xlu0 %1081
        %1085 = vset.pattern.permute.xlu0 0
        %1086 = vperm.xlu0 %1085, %v792
        %v1087 = vpop.permute.xlu0 %1086
        %1090 = vset.pattern.permute.xlu0 0
        %1091 = vperm.xlu0 %1090, %v793
        %v1092 = vpop.permute.xlu0 %1091
        %1095 = vset.pattern.permute.xlu0 0
        %1096 = vperm.xlu0 %1095, %v794
        %v1097 = vpop.permute.xlu0 %1096
        %1100 = vset.pattern.permute.xlu0 0
        %1101 = vperm.xlu0 %1100, %v795
        %v1102 = vpop.permute.xlu0 %1101
        %1105 = vset.pattern.permute.xlu0 0
        %1106 = vperm.xlu0 %1105, %v796
        %v1107 = vpop.permute.xlu0 %1106
        %1110 = vset.pattern.permute.xlu0 0
        %1111 = vperm.xlu0 %1110, %v797
        %v1112 = vpop.permute.xlu0 %1111
        %1115 = vset.pattern.permute.xlu0 0
        %1116 = vperm.xlu0 %1115, %v798
        %v1117 = vpop.permute.xlu0 %1116
        %v1183 = vunpack.c.l.b16 %v663
        %v1184 = vunpack.c.l.b16 %v664
        %v1185 = vunpack.c.l.b16 %v665
        %v1186 = vunpack.c.l.b16 %v666
        %v1187 = vunpack.c.l.b16 %v667
        %v1188 = vunpack.c.l.b16 %v668
        %v1189 = vunpack.c.l.b16 %v669
        %v1190 = vunpack.c.l.b16 %v670
        %v1191 = vunpack.c.l.b16 %v671
        %v1192 = vunpack.c.l.b16 %v672
        %v1193 = vunpack.c.l.b16 %v673
        %v1194 = vunpack.c.l.b16 %v674
        %v1195 = vunpack.c.l.b16 %v675
        %v1196 = vunpack.c.l.b16 %v676
        %v1197 = vunpack.c.l.b16 %v677
        %v1198 = vunpack.c.l.b16 %v678
        %v1199 = vunpack.c.l.b16 %v679
        %v1200 = vunpack.c.l.b16 %v680
        %v1201 = vunpack.c.l.b16 %v681
        %v1202 = vunpack.c.l.b16 %v682
        %v1203 = vunpack.c.l.b16 %v683
        %v1204 = vunpack.c.l.b16 %v684
        %v1205 = vunpack.c.l.b16 %v685
        %v1206 = vunpack.c.l.b16 %v686
        %v1207 = vunpack.c.l.b16 %v687
        %v1208 = vunpack.c.l.b16 %v688
        %v1209 = vunpack.c.l.b16 %v689
        %v1210 = vunpack.c.l.b16 %v690
        %v1211 = vunpack.c.l.b16 %v691
        %v1212 = vunpack.c.l.b16 %v692
        %v1213 = vunpack.c.l.b16 %v693
        %v1214 = vunpack.c.l.b16 %v694
        %v1215 = vunpack.c.l.b16 %v695
        %v1216 = vunpack.c.l.b16 %v696
        %v1217 = vunpack.c.l.b16 %v697
        %v1218 = vunpack.c.l.b16 %v698
        %v1219 = vunpack.c.l.b16 %v699
        %v1220 = vunpack.c.l.b16 %v700
        %v1221 = vunpack.c.l.b16 %v701
        %v1222 = vunpack.c.l.b16 %v702
        %v1223 = vunpack.c.l.b16 %v703
        %v1224 = vunpack.c.l.b16 %v704
        %v1225 = vunpack.c.l.b16 %v705
        %v1226 = vunpack.c.l.b16 %v706
        %v1227 = vunpack.c.l.b16 %v707
        %v1228 = vunpack.c.l.b16 %v708
        %v1229 = vunpack.c.l.b16 %v709
        %v1230 = vunpack.c.l.b16 %v710
        %v1231 = vunpack.c.l.b16 %v711
        %v1232 = vunpack.c.l.b16 %v712
        %v1233 = vunpack.c.l.b16 %v713
        %v1234 = vunpack.c.l.b16 %v714
        %v1235 = vunpack.c.l.b16 %v715
        %v1236 = vunpack.c.l.b16 %v716
        %v1237 = vunpack.c.l.b16 %v717
        %v1238 = vunpack.c.l.b16 %v718
        %v1239 = vunpack.c.l.b16 %v719
        %v1240 = vunpack.c.l.b16 %v720
        %v1241 = vunpack.c.l.b16 %v721
        %v1242 = vunpack.c.l.b16 %v722
        %v1243 = vunpack.c.l.b16 %v723
        %v1244 = vunpack.c.l.b16 %v724
        %v1245 = vunpack.c.l.b16 %v725
        %v1246 = vunpack.c.l.b16 %v726
        %v1247 = vpack.c.b16 %v1184, %v1183
        %v1248 = vpack.c.b16 %v1186, %v1185
        %v1249 = vpack.c.b16 %v1188, %v1187
        %v1250 = vpack.c.b16 %v1190, %v1189
        %v1251 = vpack.c.b16 %v1192, %v1191
        %v1252 = vpack.c.b16 %v1194, %v1193
        %v1253 = vpack.c.b16 %v1196, %v1195
        %v1254 = vpack.c.b16 %v1198, %v1197
        %v1255 = vpack.c.b16 %v1200, %v1199
        %v1256 = vpack.c.b16 %v1202, %v1201
        %v1257 = vpack.c.b16 %v1204, %v1203
        %v1258 = vpack.c.b16 %v1206, %v1205
        %v1259 = vpack.c.b16 %v1208, %v1207
        %v1260 = vpack.c.b16 %v1210, %v1209
        %v1261 = vpack.c.b16 %v1212, %v1211
        %v1262 = vpack.c.b16 %v1214, %v1213
        %v1263 = vpack.c.b16 %v1216, %v1215
        %v1264 = vpack.c.b16 %v1218, %v1217
        %v1265 = vpack.c.b16 %v1220, %v1219
        %v1266 = vpack.c.b16 %v1222, %v1221
        %v1267 = vpack.c.b16 %v1224, %v1223
        %v1268 = vpack.c.b16 %v1226, %v1225
        %v1269 = vpack.c.b16 %v1228, %v1227
        %v1270 = vpack.c.b16 %v1230, %v1229
        %v1271 = vpack.c.b16 %v1232, %v1231
        %v1272 = vpack.c.b16 %v1234, %v1233
        %v1273 = vpack.c.b16 %v1236, %v1235
        %v1274 = vpack.c.b16 %v1238, %v1237
        %v1275 = vpack.c.b16 %v1240, %v1239
        %v1276 = vpack.c.b16 %v1242, %v1241
        %v1277 = vpack.c.b16 %v1244, %v1243
        %v1278 = vpack.c.b16 %v1246, %v1245
        %vm1279 = vcmask 261120
        %v1281 = vsel %vm1279, %v1247, 0
        %v1284 = vsel %vm1279, %v1248, 0
        %v1287 = vsel %vm1279, %v1249, 0
        %v1290 = vsel %vm1279, %v1250, 0
        %v1293 = vsel %vm1279, %v1251, 0
        %v1296 = vsel %vm1279, %v1252, 0
        %v1299 = vsel %vm1279, %v1253, 0
        %v1302 = vsel %vm1279, %v1254, 0
        %v1305 = vsel %vm1279, %v1255, 0
        %v1308 = vsel %vm1279, %v1256, 0
        %v1311 = vsel %vm1279, %v1257, 0
        %v1314 = vsel %vm1279, %v1258, 0
        %v1317 = vsel %vm1279, %v1259, 0
        %v1320 = vsel %vm1279, %v1260, 0
        %v1323 = vsel %vm1279, %v1261, 0
        %v1326 = vsel %vm1279, %v1262, 0
        %v1329 = vsel %vm1279, %v1263, 0
        %v1332 = vsel %vm1279, %v1264, 0
        %v1335 = vsel %vm1279, %v1265, 0
        %v1338 = vsel %vm1279, %v1266, 0
        %v1341 = vsel %vm1279, %v1267, 0
        %v1344 = vsel %vm1279, %v1268, 0
        %v1347 = vsel %vm1279, %v1269, 0
        %v1350 = vsel %vm1279, %v1270, 0
        %v1353 = vsel %vm1279, %v1271, 0
        %v1356 = vsel %vm1279, %v1272, 0
        %v1359 = vsel %vm1279, %v1273, 0
        %v1362 = vsel %vm1279, %v1274, 0
        %v1365 = vsel %vm1279, %v1275, 0
        %v1368 = vsel %vm1279, %v1276, 0
        %v1371 = vsel %vm1279, %v1277, 0
        %v1374 = vsel %vm1279, %v1278, 0
        %1376 = vmatprep.subr.bf16.mxu0 %v728
        %1377 = vmatpush1.bf16.msra.mxu0 %v727
        %1378 = vmatprep.subr.bf16.mxu0 %v732
        %1379 = vmatpush1.bf16.msra.mxu0 %v731
        %1380 = vmatprep.subr.bf16.mxu0 0
        %1381 = vmatpush1.bf16.msra.mxu0 0
        %1382 = vmatprep.subr.bf16.mxu0 0
        %1383 = vmatpush1.bf16.msra.mxu0 0
        %1384 = vmatprep.subr.bf16.mxu0 0
        %1385 = vmatpush1.bf16.msra.mxu0 0
        %1386 = vmatprep.subr.bf16.mxu0 0
        %1387 = vmatpush1.bf16.msra.mxu0 0
        %1388 = vmatprep.subr.bf16.mxu0 0
        %1389 = vmatpush1.bf16.msra.mxu0 0
        %1390 = vmatprep.subr.bf16.mxu0 0
        %1391 = vmatpush1.bf16.msra.mxu0 0
        %1392 = vmatprep.subr.bf16.mxu0 0
        %1393 = vmatpush1.bf16.msra.mxu0 0
        %1394 = vmatprep.subr.bf16.mxu0 0
        %1395 = vmatpush1.bf16.msra.mxu0 0
        %1396 = vmatprep.subr.bf16.mxu0 0
        %1397 = vmatpush1.bf16.msra.mxu0 0
        %1398 = vmatprep.subr.bf16.mxu0 0
        %1399 = vmatpush1.bf16.msra.mxu0 0
        %1400 = vmatprep.subr.bf16.mxu0 0
        %1401 = vmatpush1.bf16.msra.mxu0 0
        %1402 = vmatprep.subr.bf16.mxu0 0
        %1403 = vmatpush1.bf16.msra.mxu0 0
        %1404 = vmatprep.subr.bf16.mxu0 0
        %1405 = vmatpush1.bf16.msra.mxu0 0
        %1406 = vmatprep.subr.bf16.mxu0 0
        %1407 = vmatpush1.bf16.msra.mxu0 0
        %1408 = vmatprep.mubr.bf16.mxu0 0
        %1409 = vmatmul.mubr.bf16.gmra.mrb[0].mxu0 %v1281
        %v1410 = vpop.f32.mrb[0].mxu0
        %v1411 = vadd.f32 %v802, %v1410
        %v1412 = vpop.f32.mrb[0].mxu0
        %v1413 = vadd.f32 %v802, %v1412
        %v1414 = vpop.f32.mrb[0].mxu0
        %v1415 = vadd.f32 %v807, %v1414
        %v1416 = vpop.f32.mrb[0].mxu0
        %v1417 = vadd.f32 %v807, %v1416
        %1418 = vmatprep.mubr.bf16.mxu0 0
        %1419 = vmatmul.mubr.bf16.gmra.mrb[0].mxu0 %v1284
        %v1420 = vpop.f32.mrb[0].mxu0
        %v1421 = vadd.f32 %v812, %v1420
        %v1422 = vpop.f32.mrb[0].mxu0
        %v1423 = vadd.f32 %v812, %v1422
        %v1424 = vpop.f32.mrb[0].mxu0
        %v1425 = vadd.f32 %v817, %v1424
        %v1426 = vpop.f32.mrb[0].mxu0
        %v1427 = vadd.f32 %v817, %v1426
        %1428 = vmatprep.mubr.bf16.mxu0 0
        %1429 = vmatmul.mubr.bf16.gmra.mrb[0].mxu0 %v1287
        %v1430 = vpop.f32.mrb[0].mxu0
        %v1431 = vadd.f32 %v822, %v1430
        %v1432 = vpop.f32.mrb[0].mxu0
        %v1433 = vadd.f32 %v822, %v1432
        %v1434 = vpop.f32.mrb[0].mxu0
        %v1435 = vadd.f32 %v827, %v1434
        %v1436 = vpop.f32.mrb[0].mxu0
        %v1437 = vadd.f32 %v827, %v1436
        %1438 = vmatprep.mubr.bf16.mxu0 0
        %1439 = vmatmul.mubr.bf16.gmra.mrb[0].mxu0 %v1290
        %v1440 = vpop.f32.mrb[0].mxu0
        %v1441 = vadd.f32 %v832, %v1440
        %v1442 = vpop.f32.mrb[0].mxu0
        %v1443 = vadd.f32 %v832, %v1442
        %v1444 = vpop.f32.mrb[0].mxu0
        %v1445 = vadd.f32 %v837, %v1444
        %v1446 = vpop.f32.mrb[0].mxu0
        %v1447 = vadd.f32 %v837, %v1446
        %1448 = vmatprep.mubr.bf16.mxu0 0
        %1449 = vmatmul.mubr.bf16.gmra.mrb[0].mxu0 %v1293
        %v1450 = vpop.f32.mrb[0].mxu0
        %v1451 = vadd.f32 %v842, %v1450
        %v1452 = vpop.f32.mrb[0].mxu0
        %v1453 = vadd.f32 %v842, %v1452
        %v1454 = vpop.f32.mrb[0].mxu0
        %v1455 = vadd.f32 %v847, %v1454
        %v1456 = vpop.f32.mrb[0].mxu0
        %v1457 = vadd.f32 %v847, %v1456
        %1458 = vmatprep.mubr.bf16.mxu0 0
        %1459 = vmatmul.mubr.bf16.gmra.mrb[0].mxu0 %v1296
        %v1460 = vpop.f32.mrb[0].mxu0
        %v1461 = vadd.f32 %v852, %v1460
        %v1462 = vpop.f32.mrb[0].mxu0
        %v1463 = vadd.f32 %v852, %v1462
        %v1464 = vpop.f32.mrb[0].mxu0
        %v1465 = vadd.f32 %v857, %v1464
        %v1466 = vpop.f32.mrb[0].mxu0
        %v1467 = vadd.f32 %v857, %v1466
        %1468 = vmatprep.mubr.bf16.mxu0 0
        %1469 = vmatmul.mubr.bf16.gmra.mrb[0].mxu0 %v1299
        %v1470 = vpop.f32.mrb[0].mxu0
        %v1471 = vadd.f32 %v862, %v1470
        %v1472 = vpop.f32.mrb[0].mxu0
        %v1473 = vadd.f32 %v862, %v1472
        %v1474 = vpop.f32.mrb[0].mxu0
        %v1475 = vadd.f32 %v867, %v1474
        %v1476 = vpop.f32.mrb[0].mxu0
        %v1477 = vadd.f32 %v867, %v1476
        %1478 = vmatprep.mubr.bf16.mxu0 0
        %1479 = vmatmul.mubr.bf16.gmra.mrb[0].mxu0 %v1302
        %v1480 = vpop.f32.mrb[0].mxu0
        %v1481 = vadd.f32 %v872, %v1480
        %v1482 = vpop.f32.mrb[0].mxu0
        %v1483 = vadd.f32 %v872, %v1482
        %v1484 = vpop.f32.mrb[0].mxu0
        %v1485 = vadd.f32 %v877, %v1484
        %v1486 = vpop.f32.mrb[0].mxu0
        %v1487 = vadd.f32 %v877, %v1486
        %1488 = vmatprep.mubr.bf16.mxu0 0
        %1489 = vmatmul.mubr.bf16.gmra.mrb[0].mxu0 %v1305
        %v1490 = vpop.f32.mrb[0].mxu0
        %v1491 = vadd.f32 %v882, %v1490
        %v1492 = vpop.f32.mrb[0].mxu0
        %v1493 = vadd.f32 %v882, %v1492
        %v1494 = vpop.f32.mrb[0].mxu0
        %v1495 = vadd.f32 %v887, %v1494
        %v1496 = vpop.f32.mrb[0].mxu0
        %v1497 = vadd.f32 %v887, %v1496
        %1498 = vmatprep.mubr.bf16.mxu0 0
        %1499 = vmatmul.mubr.bf16.gmra.mrb[0].mxu0 %v1308
        %v1500 = vpop.f32.mrb[0].mxu0
        %v1501 = vadd.f32 %v892, %v1500
        %v1502 = vpop.f32.mrb[0].mxu0
        %v1503 = vadd.f32 %v892, %v1502
        %v1504 = vpop.f32.mrb[0].mxu0
        %v1505 = vadd.f32 %v897, %v1504
        %v1506 = vpop.f32.mrb[0].mxu0
        %v1507 = vadd.f32 %v897, %v1506
        %1508 = vmatprep.mubr.bf16.mxu0 0
        %1509 = vmatmul.mubr.bf16.gmra.mrb[0].mxu0 %v1311
        %v1510 = vpop.f32.mrb[0].mxu0
        %v1511 = vadd.f32 %v902, %v1510
        %v1512 = vpop.f32.mrb[0].mxu0
        %v1513 = vadd.f32 %v902, %v1512
        %v1514 = vpop.f32.mrb[0].mxu0
        %v1515 = vadd.f32 %v907, %v1514
        %v1516 = vpop.f32.mrb[0].mxu0
        %v1517 = vadd.f32 %v907, %v1516
        %1518 = vmatprep.mubr.bf16.mxu0 0
        %1519 = vmatmul.mubr.bf16.gmra.mrb[0].mxu0 %v1314
        %v1520 = vpop.f32.mrb[0].mxu0
        %v1521 = vadd.f32 %v912, %v1520
        %v1522 = vpop.f32.mrb[0].mxu0
        %v1523 = vadd.f32 %v912, %v1522
        %v1524 = vpop.f32.mrb[0].mxu0
        %v1525 = vadd.f32 %v917, %v1524
        %v1526 = vpop.f32.mrb[0].mxu0
        %v1527 = vadd.f32 %v917, %v1526
        %1528 = vmatprep.mubr.bf16.mxu0 0
        %1529 = vmatmul.mubr.bf16.gmra.mrb[0].mxu0 %v1317
        %v1530 = vpop.f32.mrb[0].mxu0
        %v1531 = vadd.f32 %v922, %v1530
        %v1532 = vpop.f32.mrb[0].mxu0
        %v1533 = vadd.f32 %v922, %v1532
        %v1534 = vpop.f32.mrb[0].mxu0
        %v1535 = vadd.f32 %v927, %v1534
        %v1536 = vpop.f32.mrb[0].mxu0
        %v1537 = vadd.f32 %v927, %v1536
        %1538 = vmatprep.mubr.bf16.mxu0 0
        %1539 = vmatmul.mubr.bf16.gmra.mrb[0].mxu0 %v1320
        %v1540 = vpop.f32.mrb[0].mxu0
        %v1541 = vadd.f32 %v932, %v1540
        %v1542 = vpop.f32.mrb[0].mxu0
        %v1543 = vadd.f32 %v932, %v1542
        %v1544 = vpop.f32.mrb[0].mxu0
        %v1545 = vadd.f32 %v937, %v1544
        %v1546 = vpop.f32.mrb[0].mxu0
        %v1547 = vadd.f32 %v937, %v1546
        %1548 = vmatprep.mubr.bf16.mxu0 0
        %1549 = vmatmul.mubr.bf16.gmra.mrb[0].mxu0 %v1323
        %v1550 = vpop.f32.mrb[0].mxu0
        %v1551 = vadd.f32 %v942, %v1550
        %v1552 = vpop.f32.mrb[0].mxu0
        %v1553 = vadd.f32 %v942, %v1552
        %v1554 = vpop.f32.mrb[0].mxu0
        %v1555 = vadd.f32 %v947, %v1554
        %v1556 = vpop.f32.mrb[0].mxu0
        %v1557 = vadd.f32 %v947, %v1556
        %1558 = vmatprep.mubr.bf16.mxu0 0
        %1559 = vmatmul.mubr.bf16.gmra.mrb[0].mxu0 %v1326
        %v1560 = vpop.f32.mrb[0].mxu0
        %v1561 = vadd.f32 %v952, %v1560
        %v1562 = vpop.f32.mrb[0].mxu0
        %v1563 = vadd.f32 %v952, %v1562
        %v1564 = vpop.f32.mrb[0].mxu0
        %v1565 = vadd.f32 %v957, %v1564
        %v1566 = vpop.f32.mrb[0].mxu0
        %v1567 = vadd.f32 %v957, %v1566
        %1568 = vmatprep.mubr.bf16.mxu0 0
        %1569 = vmatmul.mubr.bf16.gmra.mrb[0].mxu0 %v1329
        %v1570 = vpop.f32.mrb[0].mxu0
        %v1571 = vadd.f32 %v962, %v1570
        %v1572 = vpop.f32.mrb[0].mxu0
        %v1573 = vadd.f32 %v962, %v1572
        %v1574 = vpop.f32.mrb[0].mxu0
        %v1575 = vadd.f32 %v967, %v1574
        %v1576 = vpop.f32.mrb[0].mxu0
        %v1577 = vadd.f32 %v967, %v1576
        %1578 = vmatprep.mubr.bf16.mxu0 0
        %1579 = vmatmul.mubr.bf16.gmra.mrb[0].mxu0 %v1332
        %v1580 = vpop.f32.mrb[0].mxu0
        %v1581 = vadd.f32 %v972, %v1580
        %v1582 = vpop.f32.mrb[0].mxu0
        %v1583 = vadd.f32 %v972, %v1582
        %v1584 = vpop.f32.mrb[0].mxu0
        %v1585 = vadd.f32 %v977, %v1584
        %v1586 = vpop.f32.mrb[0].mxu0
        %v1587 = vadd.f32 %v977, %v1586
        %1588 = vmatprep.mubr.bf16.mxu0 0
        %1589 = vmatmul.mubr.bf16.gmra.mrb[0].mxu0 %v1335
        %v1590 = vpop.f32.mrb[0].mxu0
        %v1591 = vadd.f32 %v982, %v1590
        %v1592 = vpop.f32.mrb[0].mxu0
        %v1593 = vadd.f32 %v982, %v1592
        %v1594 = vpop.f32.mrb[0].mxu0
        %v1595 = vadd.f32 %v987, %v1594
        %v1596 = vpop.f32.mrb[0].mxu0
        %v1597 = vadd.f32 %v987, %v1596
        %1598 = vmatprep.mubr.bf16.mxu0 0
        %1599 = vmatmul.mubr.bf16.gmra.mrb[0].mxu0 %v1338
        %v1600 = vpop.f32.mrb[0].mxu0
        %v1601 = vadd.f32 %v992, %v1600
        %v1602 = vpop.f32.mrb[0].mxu0
        %v1603 = vadd.f32 %v992, %v1602
        %v1604 = vpop.f32.mrb[0].mxu0
        %v1605 = vadd.f32 %v997, %v1604
        %v1606 = vpop.f32.mrb[0].mxu0
        %v1607 = vadd.f32 %v997, %v1606
        %1608 = vmatprep.mubr.bf16.mxu0 0
        %1609 = vmatmul.mubr.bf16.gmra.mrb[0].mxu0 %v1341
        %v1610 = vpop.f32.mrb[0].mxu0
        %v1611 = vadd.f32 %v1002, %v1610
        %v1612 = vpop.f32.mrb[0].mxu0
        %v1613 = vadd.f32 %v1002, %v1612
        %v1614 = vpop.f32.mrb[0].mxu0
        %v1615 = vadd.f32 %v1007, %v1614
        %v1616 = vpop.f32.mrb[0].mxu0
        %v1617 = vadd.f32 %v1007, %v1616
        %1618 = vmatprep.mubr.bf16.mxu0 0
        %1619 = vmatmul.mubr.bf16.gmra.mrb[0].mxu0 %v1344
        %v1620 = vpop.f32.mrb[0].mxu0
        %v1621 = vadd.f32 %v1012, %v1620
        %v1622 = vpop.f32.mrb[0].mxu0
        %v1623 = vadd.f32 %v1012, %v1622
        %v1624 = vpop.f32.mrb[0].mxu0
        %v1625 = vadd.f32 %v1017, %v1624
        %v1626 = vpop.f32.mrb[0].mxu0
        %v1627 = vadd.f32 %v1017, %v1626
        %1628 = vmatprep.mubr.bf16.mxu0 0
        %1629 = vmatmul.mubr.bf16.gmra.mrb[0].mxu0 %v1347
        %v1630 = vpop.f32.mrb[0].mxu0
        %v1631 = vadd.f32 %v1022, %v1630
        %v1632 = vpop.f32.mrb[0].mxu0
        %v1633 = vadd.f32 %v1022, %v1632
        %v1634 = vpop.f32.mrb[0].mxu0
        %v1635 = vadd.f32 %v1027, %v1634
        %v1636 = vpop.f32.mrb[0].mxu0
        %v1637 = vadd.f32 %v1027, %v1636
        %1638 = vmatprep.mubr.bf16.mxu0 0
        %1639 = vmatmul.mubr.bf16.gmra.mrb[0].mxu0 %v1350
        %v1640 = vpop.f32.mrb[0].mxu0
        %v1641 = vadd.f32 %v1032, %v1640
        %v1642 = vpop.f32.mrb[0].mxu0
        %v1643 = vadd.f32 %v1032, %v1642
        %v1644 = vpop.f32.mrb[0].mxu0
        %v1645 = vadd.f32 %v1037, %v1644
        %v1646 = vpop.f32.mrb[0].mxu0
        %v1647 = vadd.f32 %v1037, %v1646
        %1648 = vmatprep.mubr.bf16.mxu0 0
        %1649 = vmatmul.mubr.bf16.gmra.mrb[0].mxu0 %v1353
        %v1650 = vpop.f32.mrb[0].mxu0
        %v1651 = vadd.f32 %v1042, %v1650
        %v1652 = vpop.f32.mrb[0].mxu0
        %v1653 = vadd.f32 %v1042, %v1652
        %v1654 = vpop.f32.mrb[0].mxu0
        %v1655 = vadd.f32 %v1047, %v1654
        %v1656 = vpop.f32.mrb[0].mxu0
        %v1657 = vadd.f32 %v1047, %v1656
        %1658 = vmatprep.mubr.bf16.mxu0 0
        %1659 = vmatmul.mubr.bf16.gmra.mrb[0].mxu0 %v1356
        %v1660 = vpop.f32.mrb[0].mxu0
        %v1661 = vadd.f32 %v1052, %v1660
        %v1662 = vpop.f32.mrb[0].mxu0
        %v1663 = vadd.f32 %v1052, %v1662
        %v1664 = vpop.f32.mrb[0].mxu0
        %v1665 = vadd.f32 %v1057, %v1664
        %v1666 = vpop.f32.mrb[0].mxu0
        %v1667 = vadd.f32 %v1057, %v1666
        %1668 = vmatprep.mubr.bf16.mxu0 0
        %1669 = vmatmul.mubr.bf16.gmra.mrb[0].mxu0 %v1359
        %v1670 = vpop.f32.mrb[0].mxu0
        %v1671 = vadd.f32 %v1062, %v1670
        %v1672 = vpop.f32.mrb[0].mxu0
        %v1673 = vadd.f32 %v1062, %v1672
        %v1674 = vpop.f32.mrb[0].mxu0
        %v1675 = vadd.f32 %v1067, %v1674
        %v1676 = vpop.f32.mrb[0].mxu0
        %v1677 = vadd.f32 %v1067, %v1676
        %1678 = vmatprep.mubr.bf16.mxu0 0
        %1679 = vmatmul.mubr.bf16.gmra.mrb[0].mxu0 %v1362
        %v1680 = vpop.f32.mrb[0].mxu0
        %v1681 = vadd.f32 %v1072, %v1680
        %v1682 = vpop.f32.mrb[0].mxu0
        %v1683 = vadd.f32 %v1072, %v1682
        %v1684 = vpop.f32.mrb[0].mxu0
        %v1685 = vadd.f32 %v1077, %v1684
        %v1686 = vpop.f32.mrb[0].mxu0
        %v1687 = vadd.f32 %v1077, %v1686
        %1688 = vmatprep.mubr.bf16.mxu0 0
        %1689 = vmatmul.mubr.bf16.gmra.mrb[0].mxu0 %v1365
        %v1690 = vpop.f32.mrb[0].mxu0
        %v1691 = vadd.f32 %v1082, %v1690
        %v1692 = vpop.f32.mrb[0].mxu0
        %v1693 = vadd.f32 %v1082, %v1692
        %v1694 = vpop.f32.mrb[0].mxu0
        %v1695 = vadd.f32 %v1087, %v1694
        %v1696 = vpop.f32.mrb[0].mxu0
        %v1697 = vadd.f32 %v1087, %v1696
        %1698 = vmatprep.mubr.bf16.mxu0 0
        %1699 = vmatmul.mubr.bf16.gmra.mrb[0].mxu0 %v1368
        %v1700 = vpop.f32.mrb[0].mxu0
        %v1701 = vadd.f32 %v1092, %v1700
        %v1702 = vpop.f32.mrb[0].mxu0
        %v1703 = vadd.f32 %v1092, %v1702
        %v1704 = vpop.f32.mrb[0].mxu0
        %v1705 = vadd.f32 %v1097, %v1704
        %v1706 = vpop.f32.mrb[0].mxu0
        %v1707 = vadd.f32 %v1097, %v1706
        %1708 = vmatprep.mubr.bf16.mxu0 0
        %1709 = vmatmul.mubr.bf16.gmra.mrb[0].mxu0 %v1371
        %v1710 = vpop.f32.mrb[0].mxu0
        %v1711 = vadd.f32 %v1102, %v1710
        %v1712 = vpop.f32.mrb[0].mxu0
        %v1713 = vadd.f32 %v1102, %v1712
        %v1714 = vpop.f32.mrb[0].mxu0
        %v1715 = vadd.f32 %v1107, %v1714
        %v1716 = vpop.f32.mrb[0].mxu0
        %v1717 = vadd.f32 %v1107, %v1716
        %1718 = vmatprep.mubr.bf16.mxu0 0
        %1719 = vmatmul.mubr.bf16.gmra.mrb[0].mxu0 %v1374
        %v1720 = vpop.f32.mrb[0].mxu0
        %v1721 = vadd.f32 %v1112, %v1720
        %v1722 = vpop.f32.mrb[0].mxu0
        %v1723 = vadd.f32 %v1112, %v1722
        %v1724 = vpop.f32.mrb[0].mxu0
        %v1725 = vadd.f32 %v1117, %v1724
        %v1726 = vpop.f32.mrb[0].mxu0
        %v1727 = vadd.f32 %v1117, %v1726
        %1728 = vdwg.mxu0
        %1729 = vmatprep.subr.bf16.mxu0 %v730
        %1730 = vmatpush1.bf16.msra.mxu0 %v729
        %1731 = vmatprep.subr.bf16.mxu0 %v734
        %1732 = vmatpush1.bf16.msra.mxu0 %v733
        %1733 = vmatprep.subr.bf16.mxu0 0
        %1734 = vmatpush1.bf16.msra.mxu0 0
        %1735 = vmatprep.subr.bf16.mxu0 0
        %1736 = vmatpush1.bf16.msra.mxu0 0
        %1737 = vmatprep.subr.bf16.mxu0 0
        %1738 = vmatpush1.bf16.msra.mxu0 0
        %1739 = vmatprep.subr.bf16.mxu0 0
        %1740 = vmatpush1.bf16.msra.mxu0 0
        %1741 = vmatprep.subr.bf16.mxu0 0
        %1742 = vmatpush1.bf16.msra.mxu0 0
        %1743 = vmatprep.subr.bf16.mxu0 0
        %1744 = vmatpush1.bf16.msra.mxu0 0
        %1745 = vmatprep.subr.bf16.mxu0 0
        %1746 = vmatpush1.bf16.msra.mxu0 0
        %1747 = vmatprep.subr.bf16.mxu0 0
        %1748 = vmatpush1.bf16.msra.mxu0 0
        %1749 = vmatprep.subr.bf16.mxu0 0
        %1750 = vmatpush1.bf16.msra.mxu0 0
        %1751 = vmatprep.subr.bf16.mxu0 0
        %1752 = vmatpush1.bf16.msra.mxu0 0
        %1753 = vmatprep.subr.bf16.mxu0 0
        %1754 = vmatpush1.bf16.msra.mxu0 0
        %1755 = vmatprep.subr.bf16.mxu0 0
        %1756 = vmatpush1.bf16.msra.mxu0 0
        %1757 = vmatprep.subr.bf16.mxu0 0
        %1758 = vmatpush1.bf16.msra.mxu0 0
        %1759 = vmatprep.subr.bf16.mxu0 0
        %1760 = vmatpush1.bf16.msra.mxu0 0
        %1761 = vmatprep.mubr.bf16.mxu0 0
        %1762 = vmatmul.mubr.bf16.gmra.mrb[0].mxu0 %v1281
        %v1763 = vpop.f32.mrb[0].mxu0
        %v1764 = vadd.f32 %v802, %v1763
        %v1765 = vpop.f32.mrb[0].mxu0
        %v1766 = vadd.f32 %v802, %v1765
        %v1767 = vpop.f32.mrb[0].mxu0
        %v1768 = vadd.f32 %v807, %v1767
        %v1769 = vpop.f32.mrb[0].mxu0
        %v1770 = vadd.f32 %v807, %v1769
        %1771 = vmatprep.mubr.bf16.mxu0 0
        %1772 = vmatmul.mubr.bf16.gmra.mrb[0].mxu0 %v1284
        %v1773 = vpop.f32.mrb[0].mxu0
        %v1774 = vadd.f32 %v812, %v1773
        %v1775 = vpop.f32.mrb[0].mxu0
        %v1776 = vadd.f32 %v812, %v1775
        %v1777 = vpop.f32.mrb[0].mxu0
        %v1778 = vadd.f32 %v817, %v1777
        %v1779 = vpop.f32.mrb[0].mxu0
        %v1780 = vadd.f32 %v817, %v1779
        %1781 = vmatprep.mubr.bf16.mxu0 0
        %1782 = vmatmul.mubr.bf16.gmra.mrb[0].mxu0 %v1287
        %v1783 = vpop.f32.mrb[0].mxu0
        %v1784 = vadd.f32 %v822, %v1783
        %v1785 = vpop.f32.mrb[0].mxu0
        %v1786 = vadd.f32 %v822, %v1785
        %v1787 = vpop.f32.mrb[0].mxu0
        %v1788 = vadd.f32 %v827, %v1787
        %v1789 = vpop.f32.mrb[0].mxu0
        %v1790 = vadd.f32 %v827, %v1789
        %1791 = vmatprep.mubr.bf16.mxu0 0
        %1792 = vmatmul.mubr.bf16.gmra.mrb[0].mxu0 %v1290
        %v1793 = vpop.f32.mrb[0].mxu0
        %v1794 = vadd.f32 %v832, %v1793
        %v1795 = vpop.f32.mrb[0].mxu0
        %v1796 = vadd.f32 %v832, %v1795
        %v1797 = vpop.f32.mrb[0].mxu0
        %v1798 = vadd.f32 %v837, %v1797
        %v1799 = vpop.f32.mrb[0].mxu0
        %v1800 = vadd.f32 %v837, %v1799
        %1801 = vmatprep.mubr.bf16.mxu0 0
        %1802 = vmatmul.mubr.bf16.gmra.mrb[0].mxu0 %v1293
        %v1803 = vpop.f32.mrb[0].mxu0
        %v1804 = vadd.f32 %v842, %v1803
        %v1805 = vpop.f32.mrb[0].mxu0
        %v1806 = vadd.f32 %v842, %v1805
        %v1807 = vpop.f32.mrb[0].mxu0
        %v1808 = vadd.f32 %v847, %v1807
        %v1809 = vpop.f32.mrb[0].mxu0
        %v1810 = vadd.f32 %v847, %v1809
        %1811 = vmatprep.mubr.bf16.mxu0 0
        %1812 = vmatmul.mubr.bf16.gmra.mrb[0].mxu0 %v1296
        %v1813 = vpop.f32.mrb[0].mxu0
        %v1814 = vadd.f32 %v852, %v1813
        %v1815 = vpop.f32.mrb[0].mxu0
        %v1816 = vadd.f32 %v852, %v1815
        %v1817 = vpop.f32.mrb[0].mxu0
        %v1818 = vadd.f32 %v857, %v1817
        %v1819 = vpop.f32.mrb[0].mxu0
        %v1820 = vadd.f32 %v857, %v1819
        %1821 = vmatprep.mubr.bf16.mxu0 0
        %1822 = vmatmul.mubr.bf16.gmra.mrb[0].mxu0 %v1299
        %v1823 = vpop.f32.mrb[0].mxu0
        %v1824 = vadd.f32 %v862, %v1823
        %v1825 = vpop.f32.mrb[0].mxu0
        %v1826 = vadd.f32 %v862, %v1825
        %v1827 = vpop.f32.mrb[0].mxu0
        %v1828 = vadd.f32 %v867, %v1827
        %v1829 = vpop.f32.mrb[0].mxu0
        %v1830 = vadd.f32 %v867, %v1829
        %1831 = vmatprep.mubr.bf16.mxu0 0
        %1832 = vmatmul.mubr.bf16.gmra.mrb[0].mxu0 %v1302
        %v1833 = vpop.f32.mrb[0].mxu0
        %v1834 = vadd.f32 %v872, %v1833
        %v1835 = vpop.f32.mrb[0].mxu0
        %v1836 = vadd.f32 %v872, %v1835
        %v1837 = vpop.f32.mrb[0].mxu0
        %v1838 = vadd.f32 %v877, %v1837
        %v1839 = vpop.f32.mrb[0].mxu0
        %v1840 = vadd.f32 %v877, %v1839
        %1841 = vmatprep.mubr.bf16.mxu0 0
        %1842 = vmatmul.mubr.bf16.gmra.mrb[0].mxu0 %v1305
        %v1843 = vpop.f32.mrb[0].mxu0
        %v1844 = vadd.f32 %v882, %v1843
        %v1845 = vpop.f32.mrb[0].mxu0
        %v1846 = vadd.f32 %v882, %v1845
        %v1847 = vpop.f32.mrb[0].mxu0
        %v1848 = vadd.f32 %v887, %v1847
        %v1849 = vpop.f32.mrb[0].mxu0
        %v1850 = vadd.f32 %v887, %v1849
        %1851 = vmatprep.mubr.bf16.mxu0 0
        %1852 = vmatmul.mubr.bf16.gmra.mrb[0].mxu0 %v1308
        %v1853 = vpop.f32.mrb[0].mxu0
        %v1854 = vadd.f32 %v892, %v1853
        %v1855 = vpop.f32.mrb[0].mxu0
        %v1856 = vadd.f32 %v892, %v1855
        %v1857 = vpop.f32.mrb[0].mxu0
        %v1858 = vadd.f32 %v897, %v1857
        %v1859 = vpop.f32.mrb[0].mxu0
        %v1860 = vadd.f32 %v897, %v1859
        %1861 = vmatprep.mubr.bf16.mxu0 0
        %1862 = vmatmul.mubr.bf16.gmra.mrb[0].mxu0 %v1311
        %v1863 = vpop.f32.mrb[0].mxu0
        %v1864 = vadd.f32 %v902, %v1863
        %v1865 = vpop.f32.mrb[0].mxu0
        %v1866 = vadd.f32 %v902, %v1865
        %v1867 = vpop.f32.mrb[0].mxu0
        %v1868 = vadd.f32 %v907, %v1867
        %v1869 = vpop.f32.mrb[0].mxu0
        %v1870 = vadd.f32 %v907, %v1869
        %1871 = vmatprep.mubr.bf16.mxu0 0
        %1872 = vmatmul.mubr.bf16.gmra.mrb[0].mxu0 %v1314
        %v1873 = vpop.f32.mrb[0].mxu0
        %v1874 = vadd.f32 %v912, %v1873
        %v1875 = vpop.f32.mrb[0].mxu0
        %v1876 = vadd.f32 %v912, %v1875
        %v1877 = vpop.f32.mrb[0].mxu0
        %v1878 = vadd.f32 %v917, %v1877
        %v1879 = vpop.f32.mrb[0].mxu0
        %v1880 = vadd.f32 %v917, %v1879
        %1881 = vmatprep.mubr.bf16.mxu0 0
        %1882 = vmatmul.mubr.bf16.gmra.mrb[0].mxu0 %v1317
        %v1883 = vpop.f32.mrb[0].mxu0
        %v1884 = vadd.f32 %v922, %v1883
        %v1885 = vpop.f32.mrb[0].mxu0
        %v1886 = vadd.f32 %v922, %v1885
        %v1887 = vpop.f32.mrb[0].mxu0
        %v1888 = vadd.f32 %v927, %v1887
        %v1889 = vpop.f32.mrb[0].mxu0
        %v1890 = vadd.f32 %v927, %v1889
        %1891 = vmatprep.mubr.bf16.mxu0 0
        %1892 = vmatmul.mubr.bf16.gmra.mrb[0].mxu0 %v1320
        %v1893 = vpop.f32.mrb[0].mxu0
        %v1894 = vadd.f32 %v932, %v1893
        %v1895 = vpop.f32.mrb[0].mxu0
        %v1896 = vadd.f32 %v932, %v1895
        %v1897 = vpop.f32.mrb[0].mxu0
        %v1898 = vadd.f32 %v937, %v1897
        %v1899 = vpop.f32.mrb[0].mxu0
        %v1900 = vadd.f32 %v937, %v1899
        %1901 = vmatprep.mubr.bf16.mxu0 0
        %1902 = vmatmul.mubr.bf16.gmra.mrb[0].mxu0 %v1323
        %v1903 = vpop.f32.mrb[0].mxu0
        %v1904 = vadd.f32 %v942, %v1903
        %v1905 = vpop.f32.mrb[0].mxu0
        %v1906 = vadd.f32 %v942, %v1905
        %v1907 = vpop.f32.mrb[0].mxu0
        %v1908 = vadd.f32 %v947, %v1907
        %v1909 = vpop.f32.mrb[0].mxu0
        %v1910 = vadd.f32 %v947, %v1909
        %1911 = vmatprep.mubr.bf16.mxu0 0
        %1912 = vmatmul.mubr.bf16.gmra.mrb[0].mxu0 %v1326
        %v1913 = vpop.f32.mrb[0].mxu0
        %v1914 = vadd.f32 %v952, %v1913
        %v1915 = vpop.f32.mrb[0].mxu0
        %v1916 = vadd.f32 %v952, %v1915
        %v1917 = vpop.f32.mrb[0].mxu0
        %v1918 = vadd.f32 %v957, %v1917
        %v1919 = vpop.f32.mrb[0].mxu0
        %v1920 = vadd.f32 %v957, %v1919
        %1921 = vmatprep.mubr.bf16.mxu0 0
        %1922 = vmatmul.mubr.bf16.gmra.mrb[0].mxu0 %v1329
        %v1923 = vpop.f32.mrb[0].mxu0
        %v1924 = vadd.f32 %v962, %v1923
        %v1925 = vpop.f32.mrb[0].mxu0
        %v1926 = vadd.f32 %v962, %v1925
        %v1927 = vpop.f32.mrb[0].mxu0
        %v1928 = vadd.f32 %v967, %v1927
        %v1929 = vpop.f32.mrb[0].mxu0
        %v1930 = vadd.f32 %v967, %v1929
        %1931 = vmatprep.mubr.bf16.mxu0 0
        %1932 = vmatmul.mubr.bf16.gmra.mrb[0].mxu0 %v1332
        %v1933 = vpop.f32.mrb[0].mxu0
        %v1934 = vadd.f32 %v972, %v1933
        %v1935 = vpop.f32.mrb[0].mxu0
        %v1936 = vadd.f32 %v972, %v1935
        %v1937 = vpop.f32.mrb[0].mxu0
        %v1938 = vadd.f32 %v977, %v1937
        %v1939 = vpop.f32.mrb[0].mxu0
        %v1940 = vadd.f32 %v977, %v1939
        %1941 = vmatprep.mubr.bf16.mxu0 0
        %1942 = vmatmul.mubr.bf16.gmra.mrb[0].mxu0 %v1335
        %v1943 = vpop.f32.mrb[0].mxu0
        %v1944 = vadd.f32 %v982, %v1943
        %v1945 = vpop.f32.mrb[0].mxu0
        %v1946 = vadd.f32 %v982, %v1945
        %v1947 = vpop.f32.mrb[0].mxu0
        %v1948 = vadd.f32 %v987, %v1947
        %v1949 = vpop.f32.mrb[0].mxu0
        %v1950 = vadd.f32 %v987, %v1949
        %1951 = vmatprep.mubr.bf16.mxu0 0
        %1952 = vmatmul.mubr.bf16.gmra.mrb[0].mxu0 %v1338
        %v1953 = vpop.f32.mrb[0].mxu0
        %v1954 = vadd.f32 %v992, %v1953
        %v1955 = vpop.f32.mrb[0].mxu0
        %v1956 = vadd.f32 %v992, %v1955
        %v1957 = vpop.f32.mrb[0].mxu0
        %v1958 = vadd.f32 %v997, %v1957
        %v1959 = vpop.f32.mrb[0].mxu0
        %v1960 = vadd.f32 %v997, %v1959
        %1961 = vmatprep.mubr.bf16.mxu0 0
        %1962 = vmatmul.mubr.bf16.gmra.mrb[0].mxu0 %v1341
        %v1963 = vpop.f32.mrb[0].mxu0
        %v1964 = vadd.f32 %v1002, %v1963
        %v1965 = vpop.f32.mrb[0].mxu0
        %v1966 = vadd.f32 %v1002, %v1965
        %v1967 = vpop.f32.mrb[0].mxu0
        %v1968 = vadd.f32 %v1007, %v1967
        %v1969 = vpop.f32.mrb[0].mxu0
        %v1970 = vadd.f32 %v1007, %v1969
        %1971 = vmatprep.mubr.bf16.mxu0 0
        %1972 = vmatmul.mubr.bf16.gmra.mrb[0].mxu0 %v1344
        %v1973 = vpop.f32.mrb[0].mxu0
        %v1974 = vadd.f32 %v1012, %v1973
        %v1975 = vpop.f32.mrb[0].mxu0
        %v1976 = vadd.f32 %v1012, %v1975
        %v1977 = vpop.f32.mrb[0].mxu0
        %v1978 = vadd.f32 %v1017, %v1977
        %v1979 = vpop.f32.mrb[0].mxu0
        %v1980 = vadd.f32 %v1017, %v1979
        %1981 = vmatprep.mubr.bf16.mxu0 0
        %1982 = vmatmul.mubr.bf16.gmra.mrb[0].mxu0 %v1347
        %v1983 = vpop.f32.mrb[0].mxu0
        %v1984 = vadd.f32 %v1022, %v1983
        %v1985 = vpop.f32.mrb[0].mxu0
        %v1986 = vadd.f32 %v1022, %v1985
        %v1987 = vpop.f32.mrb[0].mxu0
        %v1988 = vadd.f32 %v1027, %v1987
        %v1989 = vpop.f32.mrb[0].mxu0
        %v1990 = vadd.f32 %v1027, %v1989
        %1991 = vmatprep.mubr.bf16.mxu0 0
        %1992 = vmatmul.mubr.bf16.gmra.mrb[0].mxu0 %v1350
        %v1993 = vpop.f32.mrb[0].mxu0
        %v1994 = vadd.f32 %v1032, %v1993
        %v1995 = vpop.f32.mrb[0].mxu0
        %v1996 = vadd.f32 %v1032, %v1995
        %v1997 = vpop.f32.mrb[0].mxu0
        %v1998 = vadd.f32 %v1037, %v1997
        %v1999 = vpop.f32.mrb[0].mxu0
        %v2000 = vadd.f32 %v1037, %v1999
        %2001 = vmatprep.mubr.bf16.mxu0 0
        %2002 = vmatmul.mubr.bf16.gmra.mrb[0].mxu0 %v1353
        %v2003 = vpop.f32.mrb[0].mxu0
        %v2004 = vadd.f32 %v1042, %v2003
        %v2005 = vpop.f32.mrb[0].mxu0
        %v2006 = vadd.f32 %v1042, %v2005
        %v2007 = vpop.f32.mrb[0].mxu0
        %v2008 = vadd.f32 %v1047, %v2007
        %v2009 = vpop.f32.mrb[0].mxu0
        %v2010 = vadd.f32 %v1047, %v2009
        %2011 = vmatprep.mubr.bf16.mxu0 0
        %2012 = vmatmul.mubr.bf16.gmra.mrb[0].mxu0 %v1356
        %v2013 = vpop.f32.mrb[0].mxu0
        %v2014 = vadd.f32 %v1052, %v2013
        %v2015 = vpop.f32.mrb[0].mxu0
        %v2016 = vadd.f32 %v1052, %v2015
        %v2017 = vpop.f32.mrb[0].mxu0
        %v2018 = vadd.f32 %v1057, %v2017
        %v2019 = vpop.f32.mrb[0].mxu0
        %v2020 = vadd.f32 %v1057, %v2019
        %2021 = vmatprep.mubr.bf16.mxu0 0
        %2022 = vmatmul.mubr.bf16.gmra.mrb[0].mxu0 %v1359
        %v2023 = vpop.f32.mrb[0].mxu0
        %v2024 = vadd.f32 %v1062, %v2023
        %v2025 = vpop.f32.mrb[0].mxu0
        %v2026 = vadd.f32 %v1062, %v2025
        %v2027 = vpop.f32.mrb[0].mxu0
        %v2028 = vadd.f32 %v1067, %v2027
        %v2029 = vpop.f32.mrb[0].mxu0
        %v2030 = vadd.f32 %v1067, %v2029
        %2031 = vmatprep.mubr.bf16.mxu0 0
        %2032 = vmatmul.mubr.bf16.gmra.mrb[0].mxu0 %v1362
        %v2033 = vpop.f32.mrb[0].mxu0
        %v2034 = vadd.f32 %v1072, %v2033
        %v2035 = vpop.f32.mrb[0].mxu0
        %v2036 = vadd.f32 %v1072, %v2035
        %v2037 = vpop.f32.mrb[0].mxu0
        %v2038 = vadd.f32 %v1077, %v2037
        %v2039 = vpop.f32.mrb[0].mxu0
        %v2040 = vadd.f32 %v1077, %v2039
        %2041 = vmatprep.mubr.bf16.mxu0 0
        %2042 = vmatmul.mubr.bf16.gmra.mrb[0].mxu0 %v1365
        %v2043 = vpop.f32.mrb[0].mxu0
        %v2044 = vadd.f32 %v1082, %v2043
        %v2045 = vpop.f32.mrb[0].mxu0
        %v2046 = vadd.f32 %v1082, %v2045
        %v2047 = vpop.f32.mrb[0].mxu0
        %v2048 = vadd.f32 %v1087, %v2047
        %v2049 = vpop.f32.mrb[0].mxu0
        %v2050 = vadd.f32 %v1087, %v2049
        %2051 = vmatprep.mubr.bf16.mxu0 0
        %2052 = vmatmul.mubr.bf16.gmra.mrb[0].mxu0 %v1368
        %v2053 = vpop.f32.mrb[0].mxu0
        %v2054 = vadd.f32 %v1092, %v2053
        %v2055 = vpop.f32.mrb[0].mxu0
        %v2056 = vadd.f32 %v1092, %v2055
        %v2057 = vpop.f32.mrb[0].mxu0
        %v2058 = vadd.f32 %v1097, %v2057
        %v2059 = vpop.f32.mrb[0].mxu0
        %v2060 = vadd.f32 %v1097, %v2059
        %2061 = vmatprep.mubr.bf16.mxu0 0
        %2062 = vmatmul.mubr.bf16.gmra.mrb[0].mxu0 %v1371
        %v2063 = vpop.f32.mrb[0].mxu0
        %v2064 = vadd.f32 %v1102, %v2063
        %v2065 = vpop.f32.mrb[0].mxu0
        %v2066 = vadd.f32 %v1102, %v2065
        %v2067 = vpop.f32.mrb[0].mxu0
        %v2068 = vadd.f32 %v1107, %v2067
        %v2069 = vpop.f32.mrb[0].mxu0
        %v2070 = vadd.f32 %v1107, %v2069
        %2071 = vmatprep.mubr.bf16.mxu0 0
        %2072 = vmatmul.mubr.bf16.gmra.mrb[0].mxu0 %v1374
        %v2073 = vpop.f32.mrb[0].mxu0
        %v2074 = vadd.f32 %v1112, %v2073
        %v2075 = vpop.f32.mrb[0].mxu0
        %v2076 = vadd.f32 %v1112, %v2075
        %v2077 = vpop.f32.mrb[0].mxu0
        %v2078 = vadd.f32 %v1117, %v2077
        %v2079 = vpop.f32.mrb[0].mxu0
        %v2080 = vadd.f32 %v1117, %v2079
        %2081 = vdwg.mxu0
        %v2082 = vmax.f32 %v1411, 0.0
        %v2083 = vmax.f32 %v1413, 0.0
        %v2084 = vmax.f32 %v1764, 0.0
        %v2085 = vmax.f32 %v1766, 0.0
        %v2086 = vmax.f32 %v1415, 0.0
        %v2087 = vmax.f32 %v1417, 0.0
        %v2088 = vmax.f32 %v1768, 0.0
        %v2089 = vmax.f32 %v1770, 0.0
        %v2090 = vmax.f32 %v1421, 0.0
        %v2091 = vmax.f32 %v1423, 0.0
        %v2092 = vmax.f32 %v1774, 0.0
        %v2093 = vmax.f32 %v1776, 0.0
        %v2094 = vmax.f32 %v1425, 0.0
        %v2095 = vmax.f32 %v1427, 0.0
        %v2096 = vmax.f32 %v1778, 0.0
        %v2097 = vmax.f32 %v1780, 0.0
        %v2098 = vmax.f32 %v1431, 0.0
        %v2099 = vmax.f32 %v1433, 0.0
        %v2100 = vmax.f32 %v1784, 0.0
        %v2101 = vmax.f32 %v1786, 0.0
        %v2102 = vmax.f32 %v1435, 0.0
        %v2103 = vmax.f32 %v1437, 0.0
        %v2104 = vmax.f32 %v1788, 0.0
        %v2105 = vmax.f32 %v1790, 0.0
        %v2106 = vmax.f32 %v1441, 0.0
        %v2107 = vmax.f32 %v1443, 0.0
        %v2108 = vmax.f32 %v1794, 0.0
        %v2109 = vmax.f32 %v1796, 0.0
        %v2110 = vmax.f32 %v1445, 0.0
        %v2111 = vmax.f32 %v1447, 0.0
        %v2112 = vmax.f32 %v1798, 0.0
        %v2113 = vmax.f32 %v1800, 0.0
        %v2114 = vmax.f32 %v1451, 0.0
        %v2115 = vmax.f32 %v1453, 0.0
        %v2116 = vmax.f32 %v1804, 0.0
        %v2117 = vmax.f32 %v1806, 0.0
        %v2118 = vmax.f32 %v1455, 0.0
        %v2119 = vmax.f32 %v1457, 0.0
        %v2120 = vmax.f32 %v1808, 0.0
        %v2121 = vmax.f32 %v1810, 0.0
        %v2122 = vmax.f32 %v1461, 0.0
        %v2123 = vmax.f32 %v1463, 0.0
        %v2124 = vmax.f32 %v1814, 0.0
        %v2125 = vmax.f32 %v1816, 0.0
        %v2126 = vmax.f32 %v1465, 0.0
        %v2127 = vmax.f32 %v1467, 0.0
        %v2128 = vmax.f32 %v1818, 0.0
        %v2129 = vmax.f32 %v1820, 0.0
        %v2130 = vmax.f32 %v1471, 0.0
        %v2131 = vmax.f32 %v1473, 0.0
        %v2132 = vmax.f32 %v1824, 0.0
        %v2133 = vmax.f32 %v1826, 0.0
        %v2134 = vmax.f32 %v1475, 0.0
        %v2135 = vmax.f32 %v1477, 0.0
        %v2136 = vmax.f32 %v1828, 0.0
        %v2137 = vmax.f32 %v1830, 0.0
        %v2138 = vmax.f32 %v1481, 0.0
        %v2139 = vmax.f32 %v1483, 0.0
        %v2140 = vmax.f32 %v1834, 0.0
        %v2141 = vmax.f32 %v1836, 0.0
        %v2142 = vmax.f32 %v1485, 0.0
        %v2143 = vmax.f32 %v1487, 0.0
        %v2144 = vmax.f32 %v1838, 0.0
        %v2145 = vmax.f32 %v1840, 0.0
        %v2146 = vmax.f32 %v1491, 0.0
        %v2147 = vmax.f32 %v1493, 0.0
        %v2148 = vmax.f32 %v1844, 0.0
        %v2149 = vmax.f32 %v1846, 0.0
        %v2150 = vmax.f32 %v1495, 0.0
        %v2151 = vmax.f32 %v1497, 0.0
        %v2152 = vmax.f32 %v1848, 0.0
        %v2153 = vmax.f32 %v1850, 0.0
        %v2154 = vmax.f32 %v1501, 0.0
        %v2155 = vmax.f32 %v1503, 0.0
        %v2156 = vmax.f32 %v1854, 0.0
        %v2157 = vmax.f32 %v1856, 0.0
        %v2158 = vmax.f32 %v1505, 0.0
        %v2159 = vmax.f32 %v1507, 0.0
        %v2160 = vmax.f32 %v1858, 0.0
        %v2161 = vmax.f32 %v1860, 0.0
        %v2162 = vmax.f32 %v1511, 0.0
        %v2163 = vmax.f32 %v1513, 0.0
        %v2164 = vmax.f32 %v1864, 0.0
        %v2165 = vmax.f32 %v1866, 0.0
        %v2166 = vmax.f32 %v1515, 0.0
        %v2167 = vmax.f32 %v1517, 0.0
        %v2168 = vmax.f32 %v1868, 0.0
        %v2169 = vmax.f32 %v1870, 0.0
        %v2170 = vmax.f32 %v1521, 0.0
        %v2171 = vmax.f32 %v1523, 0.0
        %v2172 = vmax.f32 %v1874, 0.0
        %v2173 = vmax.f32 %v1876, 0.0
        %v2174 = vmax.f32 %v1525, 0.0
        %v2175 = vmax.f32 %v1527, 0.0
        %v2176 = vmax.f32 %v1878, 0.0
        %v2177 = vmax.f32 %v1880, 0.0
        %v2178 = vmax.f32 %v1531, 0.0
        %v2179 = vmax.f32 %v1533, 0.0
        %v2180 = vmax.f32 %v1884, 0.0
        %v2181 = vmax.f32 %v1886, 0.0
        %v2182 = vmax.f32 %v1535, 0.0
        %v2183 = vmax.f32 %v1537, 0.0
        %v2184 = vmax.f32 %v1888, 0.0
        %v2185 = vmax.f32 %v1890, 0.0
        %v2186 = vmax.f32 %v1541, 0.0
        %v2187 = vmax.f32 %v1543, 0.0
        %v2188 = vmax.f32 %v1894, 0.0
        %v2189 = vmax.f32 %v1896, 0.0
        %v2190 = vmax.f32 %v1545, 0.0
        %v2191 = vmax.f32 %v1547, 0.0
        %v2192 = vmax.f32 %v1898, 0.0
        %v2193 = vmax.f32 %v1900, 0.0
        %v2194 = vmax.f32 %v1551, 0.0
        %v2195 = vmax.f32 %v1553, 0.0
        %v2196 = vmax.f32 %v1904, 0.0
        %v2197 = vmax.f32 %v1906, 0.0
        %v2198 = vmax.f32 %v1555, 0.0
        %v2199 = vmax.f32 %v1557, 0.0
        %v2200 = vmax.f32 %v1908, 0.0
        %v2201 = vmax.f32 %v1910, 0.0
        %v2202 = vmax.f32 %v1561, 0.0
        %v2203 = vmax.f32 %v1563, 0.0
        %v2204 = vmax.f32 %v1914, 0.0
        %v2205 = vmax.f32 %v1916, 0.0
        %v2206 = vmax.f32 %v1565, 0.0
        %v2207 = vmax.f32 %v1567, 0.0
        %v2208 = vmax.f32 %v1918, 0.0
        %v2209 = vmax.f32 %v1920, 0.0
        %v2210 = vmax.f32 %v1571, 0.0
        %v2211 = vmax.f32 %v1573, 0.0
        %v2212 = vmax.f32 %v1924, 0.0
        %v2213 = vmax.f32 %v1926, 0.0
        %v2214 = vmax.f32 %v1575, 0.0
        %v2215 = vmax.f32 %v1577, 0.0
        %v2216 = vmax.f32 %v1928, 0.0
        %v2217 = vmax.f32 %v1930, 0.0
        %v2218 = vmax.f32 %v1581, 0.0
        %v2219 = vmax.f32 %v1583, 0.0
        %v2220 = vmax.f32 %v1934, 0.0
        %v2221 = vmax.f32 %v1936, 0.0
        %v2222 = vmax.f32 %v1585, 0.0
        %v2223 = vmax.f32 %v1587, 0.0
        %v2224 = vmax.f32 %v1938, 0.0
        %v2225 = vmax.f32 %v1940, 0.0
        %v2226 = vmax.f32 %v1591, 0.0
        %v2227 = vmax.f32 %v1593, 0.0
        %v2228 = vmax.f32 %v1944, 0.0
        %v2229 = vmax.f32 %v1946, 0.0
        %v2230 = vmax.f32 %v1595, 0.0
        %v2231 = vmax.f32 %v1597, 0.0
        %v2232 = vmax.f32 %v1948, 0.0
        %v2233 = vmax.f32 %v1950, 0.0
        %v2234 = vmax.f32 %v1601, 0.0
        %v2235 = vmax.f32 %v1603, 0.0
        %v2236 = vmax.f32 %v1954, 0.0
        %v2237 = vmax.f32 %v1956, 0.0
        %v2238 = vmax.f32 %v1605, 0.0
        %v2239 = vmax.f32 %v1607, 0.0
        %v2240 = vmax.f32 %v1958, 0.0
        %v2241 = vmax.f32 %v1960, 0.0
        %v2242 = vmax.f32 %v1611, 0.0
        %v2243 = vmax.f32 %v1613, 0.0
        %v2244 = vmax.f32 %v1964, 0.0
        %v2245 = vmax.f32 %v1966, 0.0
        %v2246 = vmax.f32 %v1615, 0.0
        %v2247 = vmax.f32 %v1617, 0.0
        %v2248 = vmax.f32 %v1968, 0.0
        %v2249 = vmax.f32 %v1970, 0.0
        %v2250 = vmax.f32 %v1621, 0.0
        %v2251 = vmax.f32 %v1623, 0.0
        %v2252 = vmax.f32 %v1974, 0.0
        %v2253 = vmax.f32 %v1976, 0.0
        %v2254 = vmax.f32 %v1625, 0.0
        %v2255 = vmax.f32 %v1627, 0.0
        %v2256 = vmax.f32 %v1978, 0.0
        %v2257 = vmax.f32 %v1980, 0.0
        %v2258 = vmax.f32 %v1631, 0.0
        %v2259 = vmax.f32 %v1633, 0.0
        %v2260 = vmax.f32 %v1984, 0.0
        %v2261 = vmax.f32 %v1986, 0.0
        %v2262 = vmax.f32 %v1635, 0.0
        %v2263 = vmax.f32 %v1637, 0.0
        %v2264 = vmax.f32 %v1988, 0.0
        %v2265 = vmax.f32 %v1990, 0.0
        %v2266 = vmax.f32 %v1641, 0.0
        %v2267 = vmax.f32 %v1643, 0.0
        %v2268 = vmax.f32 %v1994, 0.0
        %v2269 = vmax.f32 %v1996, 0.0
        %v2270 = vmax.f32 %v1645, 0.0
        %v2271 = vmax.f32 %v1647, 0.0
        %v2272 = vmax.f32 %v1998, 0.0
        %v2273 = vmax.f32 %v2000, 0.0
        %v2274 = vmax.f32 %v1651, 0.0
        %v2275 = vmax.f32 %v1653, 0.0
        %v2276 = vmax.f32 %v2004, 0.0
        %v2277 = vmax.f32 %v2006, 0.0
        %v2278 = vmax.f32 %v1655, 0.0
        %v2279 = vmax.f32 %v1657, 0.0
        %v2280 = vmax.f32 %v2008, 0.0
        %v2281 = vmax.f32 %v2010, 0.0
        %v2282 = vmax.f32 %v1661, 0.0
        %v2283 = vmax.f32 %v1663, 0.0
        %v2284 = vmax.f32 %v2014, 0.0
        %v2285 = vmax.f32 %v2016, 0.0
        %v2286 = vmax.f32 %v1665, 0.0
        %v2287 = vmax.f32 %v1667, 0.0
        %v2288 = vmax.f32 %v2018, 0.0
        %v2289 = vmax.f32 %v2020, 0.0
        %v2290 = vmax.f32 %v1671, 0.0
        %v2291 = vmax.f32 %v1673, 0.0
        %v2292 = vmax.f32 %v2024, 0.0
        %v2293 = vmax.f32 %v2026, 0.0
        %v2294 = vmax.f32 %v1675, 0.0
        %v2295 = vmax.f32 %v1677, 0.0
        %v2296 = vmax.f32 %v2028, 0.0
        %v2297 = vmax.f32 %v2030, 0.0
        %v2298 = vmax.f32 %v1681, 0.0
        %v2299 = vmax.f32 %v1683, 0.0
        %v2300 = vmax.f32 %v2034, 0.0
        %v2301 = vmax.f32 %v2036, 0.0
        %v2302 = vmax.f32 %v1685, 0.0
        %v2303 = vmax.f32 %v1687, 0.0
        %v2304 = vmax.f32 %v2038, 0.0
        %v2305 = vmax.f32 %v2040, 0.0
        %v2306 = vmax.f32 %v1691, 0.0
        %v2307 = vmax.f32 %v1693, 0.0
        %v2308 = vmax.f32 %v2044, 0.0
        %v2309 = vmax.f32 %v2046, 0.0
        %v2310 = vmax.f32 %v1695, 0.0
        %v2311 = vmax.f32 %v1697, 0.0
        %v2312 = vmax.f32 %v2048, 0.0
        %v2313 = vmax.f32 %v2050, 0.0
        %v2314 = vmax.f32 %v1701, 0.0
        %v2315 = vmax.f32 %v1703, 0.0
        %v2316 = vmax.f32 %v2054, 0.0
        %v2317 = vmax.f32 %v2056, 0.0
        %v2318 = vmax.f32 %v1705, 0.0
        %v2319 = vmax.f32 %v1707, 0.0
        %v2320 = vmax.f32 %v2058, 0.0
        %v2321 = vmax.f32 %v2060, 0.0
        %v2322 = vmax.f32 %v1711, 0.0
        %v2323 = vmax.f32 %v1713, 0.0
        %v2324 = vmax.f32 %v2064, 0.0
        %v2325 = vmax.f32 %v2066, 0.0
        %v2326 = vmax.f32 %v1715, 0.0
        %v2327 = vmax.f32 %v1717, 0.0
        %v2328 = vmax.f32 %v2068, 0.0
        %v2329 = vmax.f32 %v2070, 0.0
        %v2330 = vmax.f32 %v1721, 0.0
        %v2331 = vmax.f32 %v1723, 0.0
        %v2332 = vmax.f32 %v2074, 0.0
        %v2333 = vmax.f32 %v2076, 0.0
        %v2334 = vmax.f32 %v1725, 0.0
        %v2335 = vmax.f32 %v1727, 0.0
        %v2336 = vmax.f32 %v2078, 0.0
        %v2337 = vmax.f32 %v2080, 0.0
        %v2338 = vld [vmem:[%s5] sm:$0xff]
        %v2339 = vld [vmem:[%s5 + $0x8] sm:$0xff]
        %v2340 = vld [vmem:[%s5 + $0x10] sm:$0xff]
        %v2341 = vld [vmem:[%s5 + $0x18] sm:$0xff]
        %v2342 = vld [vmem:[%s5 + $0x20] sm:$0xff]
        %v2343 = vld [vmem:[%s5 + $0x28] sm:$0xff]
        %v2344 = vld [vmem:[%s5 + $0x30] sm:$0xff]
        %v2345 = vld [vmem:[%s5 + $0x38] sm:$0xff]
        %v2346 = vld [vmem:[%s5 + $0x40] sm:$0xff]
        %v2347 = vld [vmem:[%s5 + $0x48] sm:$0xff]
        %v2348 = vld [vmem:[%s5 + $0x50] sm:$0xff]
        %v2349 = vld [vmem:[%s5 + $0x58] sm:$0xff]
        %v2350 = vld [vmem:[%s5 + $0x60] sm:$0xff]
        %v2351 = vld [vmem:[%s5 + $0x68] sm:$0xff]
        %v2352 = vld [vmem:[%s5 + $0x70] sm:$0xff]
        %v2353 = vld [vmem:[%s5 + $0x78] sm:$0xff]
        %v2354 = vld [vmem:[%s5 + $0x80] sm:$0xff]
        %v2355 = vld [vmem:[%s5 + $0x88] sm:$0xff]
        %v2356 = vld [vmem:[%s5 + $0x90] sm:$0xff]
        %v2357 = vld [vmem:[%s5 + $0x98] sm:$0xff]
        %v2358 = vld [vmem:[%s5 + $0xa0] sm:$0xff]
        %v2359 = vld [vmem:[%s5 + $0xa8] sm:$0xff]
        %v2360 = vld [vmem:[%s5 + $0xb0] sm:$0xff]
        %v2361 = vld [vmem:[%s5 + $0xb8] sm:$0xff]
        %v2362 = vld [vmem:[%s5 + $0xc0] sm:$0xff]
        %v2363 = vld [vmem:[%s5 + $0xc8] sm:$0xff]
        %v2364 = vld [vmem:[%s5 + $0xd0] sm:$0xff]
        %v2365 = vld [vmem:[%s5 + $0xd8] sm:$0xff]
        %v2366 = vld [vmem:[%s5 + $0xe0] sm:$0xff]
        %v2367 = vld [vmem:[%s5 + $0xe8] sm:$0xff]
        %v2368 = vld [vmem:[%s5 + $0xf0] sm:$0xff]
        %v2369 = vld [vmem:[%s5 + $0xf8] sm:$0xff]
        %v2370 = vld [vmem:[%s5 + $0x100] sm:$0xff]
        %v2371 = vld [vmem:[%s5 + $0x108] sm:$0xff]
        %v2372 = vld [vmem:[%s5 + $0x110] sm:$0xff]
        %v2373 = vld [vmem:[%s5 + $0x118] sm:$0xff]
        %v2374 = vld [vmem:[%s5 + $0x120] sm:$0xff]
        %v2375 = vld [vmem:[%s5 + $0x128] sm:$0xff]
        %v2376 = vld [vmem:[%s5 + $0x130] sm:$0xff]
        %v2377 = vld [vmem:[%s5 + $0x138] sm:$0xff]
        %v2378 = vld [vmem:[%s5 + $0x140] sm:$0xff]
        %v2379 = vld [vmem:[%s5 + $0x148] sm:$0xff]
        %v2380 = vld [vmem:[%s5 + $0x150] sm:$0xff]
        %v2381 = vld [vmem:[%s5 + $0x158] sm:$0xff]
        %v2382 = vld [vmem:[%s5 + $0x160] sm:$0xff]
        %v2383 = vld [vmem:[%s5 + $0x168] sm:$0xff]
        %v2384 = vld [vmem:[%s5 + $0x170] sm:$0xff]
        %v2385 = vld [vmem:[%s5 + $0x178] sm:$0xff]
        %v2386 = vld [vmem:[%s5 + $0x180] sm:$0xff]
        %v2387 = vld [vmem:[%s5 + $0x188] sm:$0xff]
        %v2388 = vld [vmem:[%s5 + $0x190] sm:$0xff]
        %v2389 = vld [vmem:[%s5 + $0x198] sm:$0xff]
        %v2390 = vld [vmem:[%s5 + $0x1a0] sm:$0xff]
        %v2391 = vld [vmem:[%s5 + $0x1a8] sm:$0xff]
        %v2392 = vld [vmem:[%s5 + $0x1b0] sm:$0xff]
        %v2393 = vld [vmem:[%s5 + $0x1b8] sm:$0xff]
        %v2394 = vld [vmem:[%s5 + $0x1c0] sm:$0xff]
        %v2395 = vld [vmem:[%s5 + $0x1c8] sm:$0xff]
        %v2396 = vld [vmem:[%s5 + $0x1d0] sm:$0xff]
        %v2397 = vld [vmem:[%s5 + $0x1d8] sm:$0xff]
        %v2398 = vld [vmem:[%s5 + $0x1e0] sm:$0xff]
        %v2399 = vld [vmem:[%s5 + $0x1e8] sm:$0xff]
        %v2400 = vld [vmem:[%s5 + $0x1f0] sm:$0xff]
        %v2401 = vld [vmem:[%s5 + $0x1f8] sm:$0xff]
        %v2402 = vpack.c.bf16 %v2086, %v2082
        %v2403 = vpack.c.bf16 %v2087, %v2083
        %v2404 = vpack.c.bf16 %v2088, %v2084
        %v2405 = vpack.c.bf16 %v2089, %v2085
        %v2406 = vpack.c.bf16 %v2094, %v2090
        %v2407 = vpack.c.bf16 %v2095, %v2091
        %v2408 = vpack.c.bf16 %v2096, %v2092
        %v2409 = vpack.c.bf16 %v2097, %v2093
        %v2410 = vpack.c.bf16 %v2102, %v2098
        %v2411 = vpack.c.bf16 %v2103, %v2099
        %v2412 = vpack.c.bf16 %v2104, %v2100
        %v2413 = vpack.c.bf16 %v2105, %v2101
        %v2414 = vpack.c.bf16 %v2110, %v2106
        %v2415 = vpack.c.bf16 %v2111, %v2107
        %v2416 = vpack.c.bf16 %v2112, %v2108
        %v2417 = vpack.c.bf16 %v2113, %v2109
        %v2418 = vpack.c.bf16 %v2118, %v2114
        %v2419 = vpack.c.bf16 %v2119, %v2115
        %v2420 = vpack.c.bf16 %v2120, %v2116
        %v2421 = vpack.c.bf16 %v2121, %v2117
        %v2422 = vpack.c.bf16 %v2126, %v2122
        %v2423 = vpack.c.bf16 %v2127, %v2123
        %v2424 = vpack.c.bf16 %v2128, %v2124
        %v2425 = vpack.c.bf16 %v2129, %v2125
        %v2426 = vpack.c.bf16 %v2134, %v2130
        %v2427 = vpack.c.bf16 %v2135, %v2131
        %v2428 = vpack.c.bf16 %v2136, %v2132
        %v2429 = vpack.c.bf16 %v2137, %v2133
        %v2430 = vpack.c.bf16 %v2142, %v2138
        %v2431 = vpack.c.bf16 %v2143, %v2139
        %v2432 = vpack.c.bf16 %v2144, %v2140
        %v2433 = vpack.c.bf16 %v2145, %v2141
        %v2434 = vpack.c.bf16 %v2150, %v2146
        %v2435 = vpack.c.bf16 %v2151, %v2147
        %v2436 = vpack.c.bf16 %v2152, %v2148
        %v2437 = vpack.c.bf16 %v2153, %v2149
        %v2438 = vpack.c.bf16 %v2158, %v2154
        %v2439 = vpack.c.bf16 %v2159, %v2155
        %v2440 = vpack.c.bf16 %v2160, %v2156
        %v2441 = vpack.c.bf16 %v2161, %v2157
        %v2442 = vpack.c.bf16 %v2166, %v2162
        %v2443 = vpack.c.bf16 %v2167, %v2163
        %v2444 = vpack.c.bf16 %v2168, %v2164
        %v2445 = vpack.c.bf16 %v2169, %v2165
        %v2446 = vpack.c.bf16 %v2174, %v2170
        %v2447 = vpack.c.bf16 %v2175, %v2171
        %v2448 = vpack.c.bf16 %v2176, %v2172
        %v2449 = vpack.c.bf16 %v2177, %v2173
        %v2450 = vpack.c.bf16 %v2182, %v2178
        %v2451 = vpack.c.bf16 %v2183, %v2179
        %v2452 = vpack.c.bf16 %v2184, %v2180
        %v2453 = vpack.c.bf16 %v2185, %v2181
        %v2454 = vpack.c.bf16 %v2190, %v2186
        %v2455 = vpack.c.bf16 %v2191, %v2187
        %v2456 = vpack.c.bf16 %v2192, %v2188
        %v2457 = vpack.c.bf16 %v2193, %v2189
        %v2458 = vpack.c.bf16 %v2198, %v2194
        %v2459 = vpack.c.bf16 %v2199, %v2195
        %v2460 = vpack.c.bf16 %v2200, %v2196
        %v2461 = vpack.c.bf16 %v2201, %v2197
        %v2462 = vpack.c.bf16 %v2206, %v2202
        %v2463 = vpack.c.bf16 %v2207, %v2203
        %v2464 = vpack.c.bf16 %v2208, %v2204
        %v2465 = vpack.c.bf16 %v2209, %v2205
        %v2466 = vpack.c.bf16 %v2214, %v2210
        %v2467 = vpack.c.bf16 %v2215, %v2211
        %v2468 = vpack.c.bf16 %v2216, %v2212
        %v2469 = vpack.c.bf16 %v2217, %v2213
        %v2470 = vpack.c.bf16 %v2222, %v2218
        %v2471 = vpack.c.bf16 %v2223, %v2219
        %v2472 = vpack.c.bf16 %v2224, %v2220
        %v2473 = vpack.c.bf16 %v2225, %v2221
        %v2474 = vpack.c.bf16 %v2230, %v2226
        %v2475 = vpack.c.bf16 %v2231, %v2227
        %v2476 = vpack.c.bf16 %v2232, %v2228
        %v2477 = vpack.c.bf16 %v2233, %v2229
        %v2478 = vpack.c.bf16 %v2238, %v2234
        %v2479 = vpack.c.bf16 %v2239, %v2235
        %v2480 = vpack.c.bf16 %v2240, %v2236
        %v2481 = vpack.c.bf16 %v2241, %v2237
        %v2482 = vpack.c.bf16 %v2246, %v2242
        %v2483 = vpack.c.bf16 %v2247, %v2243
        %v2484 = vpack.c.bf16 %v2248, %v2244
        %v2485 = vpack.c.bf16 %v2249, %v2245
        %v2486 = vpack.c.bf16 %v2254, %v2250
        %v2487 = vpack.c.bf16 %v2255, %v2251
        %v2488 = vpack.c.bf16 %v2256, %v2252
        %v2489 = vpack.c.bf16 %v2257, %v2253
        %v2490 = vpack.c.bf16 %v2262, %v2258
        %v2491 = vpack.c.bf16 %v2263, %v2259
        %v2492 = vpack.c.bf16 %v2264, %v2260
        %v2493 = vpack.c.bf16 %v2265, %v2261
        %v2494 = vpack.c.bf16 %v2270, %v2266
        %v2495 = vpack.c.bf16 %v2271, %v2267
        %v2496 = vpack.c.bf16 %v2272, %v2268
        %v2497 = vpack.c.bf16 %v2273, %v2269
        %v2498 = vpack.c.bf16 %v2278, %v2274
        %v2499 = vpack.c.bf16 %v2279, %v2275
        %v2500 = vpack.c.bf16 %v2280, %v2276
        %v2501 = vpack.c.bf16 %v2281, %v2277
        %v2502 = vpack.c.bf16 %v2286, %v2282
        %v2503 = vpack.c.bf16 %v2287, %v2283
        %v2504 = vpack.c.bf16 %v2288, %v2284
        %v2505 = vpack.c.bf16 %v2289, %v2285
        %v2506 = vpack.c.bf16 %v2294, %v2290
        %v2507 = vpack.c.bf16 %v2295, %v2291
        %v2508 = vpack.c.bf16 %v2296, %v2292
        %v2509 = vpack.c.bf16 %v2297, %v2293
        %v2510 = vpack.c.bf16 %v2302, %v2298
        %v2511 = vpack.c.bf16 %v2303, %v2299
        %v2512 = vpack.c.bf16 %v2304, %v2300
        %v2513 = vpack.c.bf16 %v2305, %v2301
        %v2514 = vpack.c.bf16 %v2310, %v2306
        %v2515 = vpack.c.bf16 %v2311, %v2307
        %v2516 = vpack.c.bf16 %v2312, %v2308
        %v2517 = vpack.c.bf16 %v2313, %v2309
        %v2518 = vpack.c.bf16 %v2318, %v2314
        %v2519 = vpack.c.bf16 %v2319, %v2315
        %v2520 = vpack.c.bf16 %v2320, %v2316
        %v2521 = vpack.c.bf16 %v2321, %v2317
        %v2522 = vpack.c.bf16 %v2326, %v2322
        %v2523 = vpack.c.bf16 %v2327, %v2323
        %v2524 = vpack.c.bf16 %v2328, %v2324
        %v2525 = vpack.c.bf16 %v2329, %v2325
        %v2526 = vpack.c.bf16 %v2334, %v2330
        %v2527 = vpack.c.bf16 %v2335, %v2331
        %v2528 = vpack.c.bf16 %v2336, %v2332
        %v2529 = vpack.c.bf16 %v2337, %v2333
        %v2530 = vld [vmem:[%s6] sm:$0xff]
        %v2531 = vld [vmem:[%s6 + $0x8] sm:$0xff]
        %v2532 = vld [vmem:[%s6 + $0x10] sm:$0xff]
        %v2533 = vld [vmem:[%s6 + $0x18] sm:$0xff]
        %v2534 = vld [vmem:[%s6 + $0x20] sm:$0xff]
        %v2535 = vld [vmem:[%s6 + $0x28] sm:$0xff]
        %v2536 = vld [vmem:[%s6 + $0x30] sm:$0xff]
        %v2537 = vld [vmem:[%s6 + $0x38] sm:$0xff]
        %v2538 = vld [vmem:[%s6 + $0x40] sm:$0xff]
        %v2539 = vld [vmem:[%s6 + $0x48] sm:$0xff]
        %v2540 = vld [vmem:[%s6 + $0x50] sm:$0xff]
        %v2541 = vld [vmem:[%s6 + $0x58] sm:$0xff]
        %v2542 = vld [vmem:[%s6 + $0x60] sm:$0xff]
        %v2543 = vld [vmem:[%s6 + $0x68] sm:$0xff]
        %v2544 = vld [vmem:[%s6 + $0x70] sm:$0xff]
        %v2545 = vld [vmem:[%s6 + $0x78] sm:$0xff]
        %v2546 = vld [vmem:[%s6 + $0x80] sm:$0xff]
        %v2547 = vld [vmem:[%s6 + $0x88] sm:$0xff]
        %v2548 = vld [vmem:[%s6 + $0x90] sm:$0xff]
        %v2549 = vld [vmem:[%s6 + $0x98] sm:$0xff]
        %v2550 = vld [vmem:[%s6 + $0xa0] sm:$0xff]
        %v2551 = vld [vmem:[%s6 + $0xa8] sm:$0xff]
        %v2552 = vld [vmem:[%s6 + $0xb0] sm:$0xff]
        %v2553 = vld [vmem:[%s6 + $0xb8] sm:$0xff]
        %v2554 = vld [vmem:[%s6 + $0xc0] sm:$0xff]
        %v2555 = vld [vmem:[%s6 + $0xc8] sm:$0xff]
        %v2556 = vld [vmem:[%s6 + $0xd0] sm:$0xff]
        %v2557 = vld [vmem:[%s6 + $0xd8] sm:$0xff]
        %v2558 = vld [vmem:[%s6 + $0xe0] sm:$0xff]
        %v2559 = vld [vmem:[%s6 + $0xe8] sm:$0xff]
        %v2560 = vld [vmem:[%s6 + $0xf0] sm:$0xff]
        %v2561 = vld [vmem:[%s6 + $0xf8] sm:$0xff]
        %2563 = vset.pattern.permute.xlu0 0
        %2564 = vperm.xlu0 %2563, %v2530
        %v2565 = vpop.permute.xlu0 %2564
        %2568 = vset.pattern.permute.xlu0 0
        %2569 = vperm.xlu0 %2568, %v2531
        %v2570 = vpop.permute.xlu0 %2569
        %2573 = vset.pattern.permute.xlu0 0
        %2574 = vperm.xlu0 %2573, %v2532
        %v2575 = vpop.permute.xlu0 %2574
        %2578 = vset.pattern.permute.xlu0 0
        %2579 = vperm.xlu0 %2578, %v2533
        %v2580 = vpop.permute.xlu0 %2579
        %2583 = vset.pattern.permute.xlu0 0
        %2584 = vperm.xlu0 %2583, %v2534
        %v2585 = vpop.permute.xlu0 %2584
        %2588 = vset.pattern.permute.xlu0 0
        %2589 = vperm.xlu0 %2588, %v2535
        %v2590 = vpop.permute.xlu0 %2589
        %2593 = vset.pattern.permute.xlu0 0
        %2594 = vperm.xlu0 %2593, %v2536
        %v2595 = vpop.permute.xlu0 %2594
        %2598 = vset.pattern.permute.xlu0 0
        %2599 = vperm.xlu0 %2598, %v2537
        %v2600 = vpop.permute.xlu0 %2599
        %2603 = vset.pattern.permute.xlu0 0
        %2604 = vperm.xlu0 %2603, %v2538
        %v2605 = vpop.permute.xlu0 %2604
        %2608 = vset.pattern.permute.xlu0 0
        %2609 = vperm.xlu0 %2608, %v2539
        %v2610 = vpop.permute.xlu0 %2609
        %2613 = vset.pattern.permute.xlu0 0
        %2614 = vperm.xlu0 %2613, %v2540
        %v2615 = vpop.permute.xlu0 %2614
        %2618 = vset.pattern.permute.xlu0 0
        %2619 = vperm.xlu0 %2618, %v2541
        %v2620 = vpop.permute.xlu0 %2619
        %2623 = vset.pattern.permute.xlu0 0
        %2624 = vperm.xlu0 %2623, %v2542
        %v2625 = vpop.permute.xlu0 %2624
        %2628 = vset.pattern.permute.xlu0 0
        %2629 = vperm.xlu0 %2628, %v2543
        %v2630 = vpop.permute.xlu0 %2629
        %2633 = vset.pattern.permute.xlu0 0
        %2634 = vperm.xlu0 %2633, %v2544
        %v2635 = vpop.permute.xlu0 %2634
        %2638 = vset.pattern.permute.xlu0 0
        %2639 = vperm.xlu0 %2638, %v2545
        %v2640 = vpop.permute.xlu0 %2639
        %2643 = vset.pattern.permute.xlu0 0
        %2644 = vperm.xlu0 %2643, %v2546
        %v2645 = vpop.permute.xlu0 %2644
        %2648 = vset.pattern.permute.xlu0 0
        %2649 = vperm.xlu0 %2648, %v2547
        %v2650 = vpop.permute.xlu0 %2649
        %2653 = vset.pattern.permute.xlu0 0
        %2654 = vperm.xlu0 %2653, %v2548
        %v2655 = vpop.permute.xlu0 %2654
        %2658 = vset.pattern.permute.xlu0 0
        %2659 = vperm.xlu0 %2658, %v2549
        %v2660 = vpop.permute.xlu0 %2659
        %2663 = vset.pattern.permute.xlu0 0
        %2664 = vperm.xlu0 %2663, %v2550
        %v2665 = vpop.permute.xlu0 %2664
        %2668 = vset.pattern.permute.xlu0 0
        %2669 = vperm.xlu0 %2668, %v2551
        %v2670 = vpop.permute.xlu0 %2669
        %2673 = vset.pattern.permute.xlu0 0
        %2674 = vperm.xlu0 %2673, %v2552
        %v2675 = vpop.permute.xlu0 %2674
        %2678 = vset.pattern.permute.xlu0 0
        %2679 = vperm.xlu0 %2678, %v2553
        %v2680 = vpop.permute.xlu0 %2679
        %2683 = vset.pattern.permute.xlu0 0
        %2684 = vperm.xlu0 %2683, %v2554
        %v2685 = vpop.permute.xlu0 %2684
        %2688 = vset.pattern.permute.xlu0 0
        %2689 = vperm.xlu0 %2688, %v2555
        %v2690 = vpop.permute.xlu0 %2689
        %2693 = vset.pattern.permute.xlu0 0
        %2694 = vperm.xlu0 %2693, %v2556
        %v2695 = vpop.permute.xlu0 %2694
        %2698 = vset.pattern.permute.xlu0 0
        %2699 = vperm.xlu0 %2698, %v2557
        %v2700 = vpop.permute.xlu0 %2699
        %2703 = vset.pattern.permute.xlu0 0
        %2704 = vperm.xlu0 %2703, %v2558
        %v2705 = vpop.permute.xlu0 %2704
        %2708 = vset.pattern.permute.xlu0 0
        %2709 = vperm.xlu0 %2708, %v2559
        %v2710 = vpop.permute.xlu0 %2709
        %2713 = vset.pattern.permute.xlu0 0
        %2714 = vperm.xlu0 %2713, %v2560
        %v2715 = vpop.permute.xlu0 %2714
        %2718 = vset.pattern.permute.xlu0 0
        %2719 = vperm.xlu0 %2718, %v2561
        %v2720 = vpop.permute.xlu0 %2719
        %v2786 = vunpack.c.l.b16 %v2338
        %v2787 = vunpack.c.h.b16 %v2338
        %v2788 = vunpack.c.l.b16 %v2339
        %v2789 = vunpack.c.h.b16 %v2339
        %v2790 = vunpack.c.l.b16 %v2340
        %v2791 = vunpack.c.h.b16 %v2340
        %v2792 = vunpack.c.l.b16 %v2341
        %v2793 = vunpack.c.h.b16 %v2341
        %v2794 = vunpack.c.l.b16 %v2342
        %v2795 = vunpack.c.h.b16 %v2342
        %v2796 = vunpack.c.l.b16 %v2343
        %v2797 = vunpack.c.h.b16 %v2343
        %v2798 = vunpack.c.l.b16 %v2344
        %v2799 = vunpack.c.h.b16 %v2344
        %v2800 = vunpack.c.l.b16 %v2345
        %v2801 = vunpack.c.h.b16 %v2345
        %v2802 = vunpack.c.l.b16 %v2346
        %v2803 = vunpack.c.h.b16 %v2346
        %v2804 = vunpack.c.l.b16 %v2347
        %v2805 = vunpack.c.h.b16 %v2347
        %v2806 = vunpack.c.l.b16 %v2348
        %v2807 = vunpack.c.h.b16 %v2348
        %v2808 = vunpack.c.l.b16 %v2349
        %v2809 = vunpack.c.h.b16 %v2349
        %v2810 = vunpack.c.l.b16 %v2350
        %v2811 = vunpack.c.h.b16 %v2350
        %v2812 = vunpack.c.l.b16 %v2351
        %v2813 = vunpack.c.h.b16 %v2351
        %v2814 = vunpack.c.l.b16 %v2352
        %v2815 = vunpack.c.h.b16 %v2352
        %v2816 = vunpack.c.l.b16 %v2353
        %v2817 = vunpack.c.h.b16 %v2353
        %v2818 = vunpack.c.l.b16 %v2354
        %v2819 = vunpack.c.h.b16 %v2354
        %v2820 = vunpack.c.l.b16 %v2355
        %v2821 = vunpack.c.h.b16 %v2355
        %v2822 = vunpack.c.l.b16 %v2356
        %v2823 = vunpack.c.h.b16 %v2356
        %v2824 = vunpack.c.l.b16 %v2357
        %v2825 = vunpack.c.h.b16 %v2357
        %v2826 = vunpack.c.l.b16 %v2358
        %v2827 = vunpack.c.h.b16 %v2358
        %v2828 = vunpack.c.l.b16 %v2359
        %v2829 = vunpack.c.h.b16 %v2359
        %v2830 = vunpack.c.l.b16 %v2360
        %v2831 = vunpack.c.h.b16 %v2360
        %v2832 = vunpack.c.l.b16 %v2361
        %v2833 = vunpack.c.h.b16 %v2361
        %v2834 = vunpack.c.l.b16 %v2362
        %v2835 = vunpack.c.h.b16 %v2362
        %v2836 = vunpack.c.l.b16 %v2363
        %v2837 = vunpack.c.h.b16 %v2363
        %v2838 = vunpack.c.l.b16 %v2364
        %v2839 = vunpack.c.h.b16 %v2364
        %v2840 = vunpack.c.l.b16 %v2365
        %v2841 = vunpack.c.h.b16 %v2365
        %v2842 = vunpack.c.l.b16 %v2366
        %v2843 = vunpack.c.h.b16 %v2366
        %v2844 = vunpack.c.l.b16 %v2367
        %v2845 = vunpack.c.h.b16 %v2367
        %v2846 = vunpack.c.l.b16 %v2368
        %v2847 = vunpack.c.h.b16 %v2368
        %v2848 = vunpack.c.l.b16 %v2369
        %v2849 = vunpack.c.h.b16 %v2369
        %v2850 = vunpack.c.l.b16 %v2370
        %v2851 = vunpack.c.h.b16 %v2370
        %v2852 = vunpack.c.l.b16 %v2371
        %v2853 = vunpack.c.h.b16 %v2371
        %v2854 = vunpack.c.l.b16 %v2372
        %v2855 = vunpack.c.h.b16 %v2372
        %v2856 = vunpack.c.l.b16 %v2373
        %v2857 = vunpack.c.h.b16 %v2373
        %v2858 = vunpack.c.l.b16 %v2374
        %v2859 = vunpack.c.h.b16 %v2374
        %v2860 = vunpack.c.l.b16 %v2375
        %v2861 = vunpack.c.h.b16 %v2375
        %v2862 = vunpack.c.l.b16 %v2376
        %v2863 = vunpack.c.h.b16 %v2376
        %v2864 = vunpack.c.l.b16 %v2377
        %v2865 = vunpack.c.h.b16 %v2377
        %v2866 = vunpack.c.l.b16 %v2378
        %v2867 = vunpack.c.h.b16 %v2378
        %v2868 = vunpack.c.l.b16 %v2379
        %v2869 = vunpack.c.h.b16 %v2379
        %v2870 = vunpack.c.l.b16 %v2380
        %v2871 = vunpack.c.h.b16 %v2380
        %v2872 = vunpack.c.l.b16 %v2381
        %v2873 = vunpack.c.h.b16 %v2381
        %v2874 = vunpack.c.l.b16 %v2382
        %v2875 = vunpack.c.h.b16 %v2382
        %v2876 = vunpack.c.l.b16 %v2383
        %v2877 = vunpack.c.h.b16 %v2383
        %v2878 = vunpack.c.l.b16 %v2384
        %v2879 = vunpack.c.h.b16 %v2384
        %v2880 = vunpack.c.l.b16 %v2385
        %v2881 = vunpack.c.h.b16 %v2385
        %v2882 = vunpack.c.l.b16 %v2386
        %v2883 = vunpack.c.h.b16 %v2386
        %v2884 = vunpack.c.l.b16 %v2387
        %v2885 = vunpack.c.h.b16 %v2387
        %v2886 = vunpack.c.l.b16 %v2388
        %v2887 = vunpack.c.h.b16 %v2388
        %v2888 = vunpack.c.l.b16 %v2389
        %v2889 = vunpack.c.h.b16 %v2389
        %v2890 = vunpack.c.l.b16 %v2390
        %v2891 = vunpack.c.h.b16 %v2390
        %v2892 = vunpack.c.l.b16 %v2391
        %v2893 = vunpack.c.h.b16 %v2391
        %v2894 = vunpack.c.l.b16 %v2392
        %v2895 = vunpack.c.h.b16 %v2392
        %v2896 = vunpack.c.l.b16 %v2393
        %v2897 = vunpack.c.h.b16 %v2393
        %v2898 = vunpack.c.l.b16 %v2394
        %v2899 = vunpack.c.h.b16 %v2394
        %v2900 = vunpack.c.l.b16 %v2395
        %v2901 = vunpack.c.h.b16 %v2395
        %v2902 = vunpack.c.l.b16 %v2396
        %v2903 = vunpack.c.h.b16 %v2396
        %v2904 = vunpack.c.l.b16 %v2397
        %v2905 = vunpack.c.h.b16 %v2397
        %v2906 = vunpack.c.l.b16 %v2398
        %v2907 = vunpack.c.h.b16 %v2398
        %v2908 = vunpack.c.l.b16 %v2399
        %v2909 = vunpack.c.h.b16 %v2399
        %v2910 = vunpack.c.l.b16 %v2400
        %v2911 = vunpack.c.h.b16 %v2400
        %v2912 = vunpack.c.l.b16 %v2401
        %v2913 = vunpack.c.h.b16 %v2401
        %v2914 = vpack.c.b16 %v2790, %v2786
        %v2915 = vpack.c.b16 %v2791, %v2787
        %v2916 = vpack.c.b16 %v2792, %v2788
        %v2917 = vpack.c.b16 %v2793, %v2789
        %v2918 = vpack.c.b16 %v2798, %v2794
        %v2919 = vpack.c.b16 %v2799, %v2795
        %v2920 = vpack.c.b16 %v2800, %v2796
        %v2921 = vpack.c.b16 %v2801, %v2797
        %v2922 = vpack.c.b16 %v2806, %v2802
        %v2923 = vpack.c.b16 %v2807, %v2803
        %v2924 = vpack.c.b16 %v2808, %v2804
        %v2925 = vpack.c.b16 %v2809, %v2805
        %v2926 = vpack.c.b16 %v2814, %v2810
        %v2927 = vpack.c.b16 %v2815, %v2811
        %v2928 = vpack.c.b16 %v2816, %v2812
        %v2929 = vpack.c.b16 %v2817, %v2813
        %v2930 = vpack.c.b16 %v2822, %v2818
        %v2931 = vpack.c.b16 %v2823, %v2819
        %v2932 = vpack.c.b16 %v2824, %v2820
        %v2933 = vpack.c.b16 %v2825, %v2821
        %v2934 = vpack.c.b16 %v2830, %v2826
        %v2935 = vpack.c.b16 %v2831, %v2827
        %v2936 = vpack.c.b16 %v2832, %v2828
        %v2937 = vpack.c.b16 %v2833, %v2829
        %v2938 = vpack.c.b16 %v2838, %v2834
        %v2939 = vpack.c.b16 %v2839, %v2835
        %v2940 = vpack.c.b16 %v2840, %v2836
        %v2941 = vpack.c.b16 %v2841, %v2837
        %v2942 = vpack.c.b16 %v2846, %v2842
        %v2943 = vpack.c.b16 %v2847, %v2843
        %v2944 = vpack.c.b16 %v2848, %v2844
        %v2945 = vpack.c.b16 %v2849, %v2845
        %v2946 = vpack.c.b16 %v2854, %v2850
        %v2947 = vpack.c.b16 %v2855, %v2851
        %v2948 = vpack.c.b16 %v2856, %v2852
        %v2949 = vpack.c.b16 %v2857, %v2853
        %v2950 = vpack.c.b16 %v2862, %v2858
        %v2951 = vpack.c.b16 %v2863, %v2859
        %v2952 = vpack.c.b16 %v2864, %v2860
        %v2953 = vpack.c.b16 %v2865, %v2861
        %v2954 = vpack.c.b16 %v2870, %v2866
        %v2955 = vpack.c.b16 %v2871, %v2867
        %v2956 = vpack.c.b16 %v2872, %v2868
        %v2957 = vpack.c.b16 %v2873, %v2869
        %v2958 = vpack.c.b16 %v2878, %v2874
        %v2959 = vpack.c.b16 %v2879, %v2875
        %v2960 = vpack.c.b16 %v2880, %v2876
        %v2961 = vpack.c.b16 %v2881, %v2877
        %v2962 = vpack.c.b16 %v2886, %v2882
        %v2963 = vpack.c.b16 %v2887, %v2883
        %v2964 = vpack.c.b16 %v2888, %v2884
        %v2965 = vpack.c.b16 %v2889, %v2885
        %v2966 = vpack.c.b16 %v2894, %v2890
        %v2967 = vpack.c.b16 %v2895, %v2891
        %v2968 = vpack.c.b16 %v2896, %v2892
        %v2969 = vpack.c.b16 %v2897, %v2893
        %v2970 = vpack.c.b16 %v2902, %v2898
        %v2971 = vpack.c.b16 %v2903, %v2899
        %v2972 = vpack.c.b16 %v2904, %v2900
        %v2973 = vpack.c.b16 %v2905, %v2901
        %v2974 = vpack.c.b16 %v2910, %v2906
        %v2975 = vpack.c.b16 %v2911, %v2907
        %v2976 = vpack.c.b16 %v2912, %v2908
        %v2977 = vpack.c.b16 %v2913, %v2909
        %3042 = vmatprep.subr.bf16.mxu0 %v2403
        %3043 = vmatpush1.bf16.msra.mxu0 %v2402
        %3044 = vmatprep.subr.bf16.mxu0 %v2407
        %3045 = vmatpush1.bf16.msra.mxu0 %v2406
        %3046 = vmatprep.subr.bf16.mxu0 %v2411
        %3047 = vmatpush1.bf16.msra.mxu0 %v2410
        %3048 = vmatprep.subr.bf16.mxu0 %v2415
        %3049 = vmatpush1.bf16.msra.mxu0 %v2414
        %3050 = vmatprep.subr.bf16.mxu0 %v2419
        %3051 = vmatpush1.bf16.msra.mxu0 %v2418
        %3052 = vmatprep.subr.bf16.mxu0 %v2423
        %3053 = vmatpush1.bf16.msra.mxu0 %v2422
        %3054 = vmatprep.subr.bf16.mxu0 %v2427
        %3055 = vmatpush1.bf16.msra.mxu0 %v2426
        %3056 = vmatprep.subr.bf16.mxu0 %v2431
        %3057 = vmatpush1.bf16.msra.mxu0 %v2430
        %3058 = vmatprep.subr.bf16.mxu0 %v2435
        %3059 = vmatpush1.bf16.msra.mxu0 %v2434
        %3060 = vmatprep.subr.bf16.mxu0 %v2439
        %3061 = vmatpush1.bf16.msra.mxu0 %v2438
        %3062 = vmatprep.subr.bf16.mxu0 %v2443
        %3063 = vmatpush1.bf16.msra.mxu0 %v2442
        %3064 = vmatprep.subr.bf16.mxu0 %v2447
        %3065 = vmatpush1.bf16.msra.mxu0 %v2446
        %3066 = vmatprep.subr.bf16.mxu0 %v2451
        %3067 = vmatpush1.bf16.msra.mxu0 %v2450
        %3068 = vmatprep.subr.bf16.mxu0 %v2455
        %3069 = vmatpush1.bf16.msra.mxu0 %v2454
        %3070 = vmatprep.subr.bf16.mxu0 %v2459
        %3071 = vmatpush1.bf16.msra.mxu0 %v2458
        %3072 = vmatprep.subr.bf16.mxu0 %v2463
        %3073 = vmatpush1.bf16.msra.mxu0 %v2462
        %3074 = vmatprep.mubr.bf16.mxu0 %v2915
        %3075 = vmatmul.mubr.bf16.gmra.mrb[0].mxu0 %v2914
        %v3076 = vpop.f32.mrb[0].mxu0
        %v3077 = vadd.f32 %v2565, %v3076
        %v3078 = vpop.f32.mrb[0].mxu0
        %v3079 = vadd.f32 %v2565, %v3078
        %v3080 = vpop.f32.mrb[0].mxu0
        %v3081 = vadd.f32 %v2570, %v3080
        %v3082 = vpop.f32.mrb[0].mxu0
        %v3083 = vadd.f32 %v2570, %v3082
        %3084 = vmatprep.mubr.bf16.mxu0 %v2919
        %3085 = vmatmul.mubr.bf16.gmra.mrb[0].mxu0 %v2918
        %v3086 = vpop.f32.mrb[0].mxu0
        %v3087 = vadd.f32 %v2575, %v3086
        %v3088 = vpop.f32.mrb[0].mxu0
        %v3089 = vadd.f32 %v2575, %v3088
        %v3090 = vpop.f32.mrb[0].mxu0
        %v3091 = vadd.f32 %v2580, %v3090
        %v3092 = vpop.f32.mrb[0].mxu0
        %v3093 = vadd.f32 %v2580, %v3092
        %3094 = vmatprep.mubr.bf16.mxu0 %v2923
        %3095 = vmatmul.mubr.bf16.gmra.mrb[0].mxu0 %v2922
        %v3096 = vpop.f32.mrb[0].mxu0
        %v3097 = vadd.f32 %v2585, %v3096
        %v3098 = vpop.f32.mrb[0].mxu0
        %v3099 = vadd.f32 %v2585, %v3098
        %v3100 = vpop.f32.mrb[0].mxu0
        %v3101 = vadd.f32 %v2590, %v3100
        %v3102 = vpop.f32.mrb[0].mxu0
        %v3103 = vadd.f32 %v2590, %v3102
        %3104 = vmatprep.mubr.bf16.mxu0 %v2927
        %3105 = vmatmul.mubr.bf16.gmra.mrb[0].mxu0 %v2926
        %v3106 = vpop.f32.mrb[0].mxu0
        %v3107 = vadd.f32 %v2595, %v3106
        %v3108 = vpop.f32.mrb[0].mxu0
        %v3109 = vadd.f32 %v2595, %v3108
        %v3110 = vpop.f32.mrb[0].mxu0
        %v3111 = vadd.f32 %v2600, %v3110
        %v3112 = vpop.f32.mrb[0].mxu0
        %v3113 = vadd.f32 %v2600, %v3112
        %3114 = vmatprep.mubr.bf16.mxu0 %v2931
        %3115 = vmatmul.mubr.bf16.gmra.mrb[0].mxu0 %v2930
        %v3116 = vpop.f32.mrb[0].mxu0
        %v3117 = vadd.f32 %v2605, %v3116
        %v3118 = vpop.f32.mrb[0].mxu0
        %v3119 = vadd.f32 %v2605, %v3118
        %v3120 = vpop.f32.mrb[0].mxu0
        %v3121 = vadd.f32 %v2610, %v3120
        %v3122 = vpop.f32.mrb[0].mxu0
        %v3123 = vadd.f32 %v2610, %v3122
        %3124 = vmatprep.mubr.bf16.mxu0 %v2935
        %3125 = vmatmul.mubr.bf16.gmra.mrb[0].mxu0 %v2934
        %v3126 = vpop.f32.mrb[0].mxu0
        %v3127 = vadd.f32 %v2615, %v3126
        %v3128 = vpop.f32.mrb[0].mxu0
        %v3129 = vadd.f32 %v2615, %v3128
        %v3130 = vpop.f32.mrb[0].mxu0
        %v3131 = vadd.f32 %v2620, %v3130
        %v3132 = vpop.f32.mrb[0].mxu0
        %v3133 = vadd.f32 %v2620, %v3132
        %3134 = vmatprep.mubr.bf16.mxu0 %v2939
        %3135 = vmatmul.mubr.bf16.gmra.mrb[0].mxu0 %v2938
        %v3136 = vpop.f32.mrb[0].mxu0
        %v3137 = vadd.f32 %v2625, %v3136
        %v3138 = vpop.f32.mrb[0].mxu0
        %v3139 = vadd.f32 %v2625, %v3138
        %v3140 = vpop.f32.mrb[0].mxu0
        %v3141 = vadd.f32 %v2630, %v3140
        %v3142 = vpop.f32.mrb[0].mxu0
        %v3143 = vadd.f32 %v2630, %v3142
        %3144 = vmatprep.mubr.bf16.mxu0 %v2943
        %3145 = vmatmul.mubr.bf16.gmra.mrb[0].mxu0 %v2942
        %v3146 = vpop.f32.mrb[0].mxu0
        %v3147 = vadd.f32 %v2635, %v3146
        %v3148 = vpop.f32.mrb[0].mxu0
        %v3149 = vadd.f32 %v2635, %v3148
        %v3150 = vpop.f32.mrb[0].mxu0
        %v3151 = vadd.f32 %v2640, %v3150
        %v3152 = vpop.f32.mrb[0].mxu0
        %v3153 = vadd.f32 %v2640, %v3152
        %3154 = vmatprep.mubr.bf16.mxu0 %v2947
        %3155 = vmatmul.mubr.bf16.gmra.mrb[0].mxu0 %v2946
        %v3156 = vpop.f32.mrb[0].mxu0
        %v3157 = vadd.f32 %v2645, %v3156
        %v3158 = vpop.f32.mrb[0].mxu0
        %v3159 = vadd.f32 %v2645, %v3158
        %v3160 = vpop.f32.mrb[0].mxu0
        %v3161 = vadd.f32 %v2650, %v3160
        %v3162 = vpop.f32.mrb[0].mxu0
        %v3163 = vadd.f32 %v2650, %v3162
        %3164 = vmatprep.mubr.bf16.mxu0 %v2951
        %3165 = vmatmul.mubr.bf16.gmra.mrb[0].mxu0 %v2950
        %v3166 = vpop.f32.mrb[0].mxu0
        %v3167 = vadd.f32 %v2655, %v3166
        %v3168 = vpop.f32.mrb[0].mxu0
        %v3169 = vadd.f32 %v2655, %v3168
        %v3170 = vpop.f32.mrb[0].mxu0
        %v3171 = vadd.f32 %v2660, %v3170
        %v3172 = vpop.f32.mrb[0].mxu0
        %v3173 = vadd.f32 %v2660, %v3172
        %3174 = vmatprep.mubr.bf16.mxu0 %v2955
        %3175 = vmatmul.mubr.bf16.gmra.mrb[0].mxu0 %v2954
        %v3176 = vpop.f32.mrb[0].mxu0
        %v3177 = vadd.f32 %v2665, %v3176
        %v3178 = vpop.f32.mrb[0].mxu0
        %v3179 = vadd.f32 %v2665, %v3178
        %v3180 = vpop.f32.mrb[0].mxu0
        %v3181 = vadd.f32 %v2670, %v3180
        %v3182 = vpop.f32.mrb[0].mxu0
        %v3183 = vadd.f32 %v2670, %v3182
        %3184 = vmatprep.mubr.bf16.mxu0 %v2959
        %3185 = vmatmul.mubr.bf16.gmra.mrb[0].mxu0 %v2958
        %v3186 = vpop.f32.mrb[0].mxu0
        %v3187 = vadd.f32 %v2675, %v3186
        %v3188 = vpop.f32.mrb[0].mxu0
        %v3189 = vadd.f32 %v2675, %v3188
        %v3190 = vpop.f32.mrb[0].mxu0
        %v3191 = vadd.f32 %v2680, %v3190
        %v3192 = vpop.f32.mrb[0].mxu0
        %v3193 = vadd.f32 %v2680, %v3192
        %3194 = vmatprep.mubr.bf16.mxu0 %v2963
        %3195 = vmatmul.mubr.bf16.gmra.mrb[0].mxu0 %v2962
        %v3196 = vpop.f32.mrb[0].mxu0
        %v3197 = vadd.f32 %v2685, %v3196
        %v3198 = vpop.f32.mrb[0].mxu0
        %v3199 = vadd.f32 %v2685, %v3198
        %v3200 = vpop.f32.mrb[0].mxu0
        %v3201 = vadd.f32 %v2690, %v3200
        %v3202 = vpop.f32.mrb[0].mxu0
        %v3203 = vadd.f32 %v2690, %v3202
        %3204 = vmatprep.mubr.bf16.mxu0 %v2967
        %3205 = vmatmul.mubr.bf16.gmra.mrb[0].mxu0 %v2966
        %v3206 = vpop.f32.mrb[0].mxu0
        %v3207 = vadd.f32 %v2695, %v3206
        %v3208 = vpop.f32.mrb[0].mxu0
        %v3209 = vadd.f32 %v2695, %v3208
        %v3210 = vpop.f32.mrb[0].mxu0
        %v3211 = vadd.f32 %v2700, %v3210
        %v3212 = vpop.f32.mrb[0].mxu0
        %v3213 = vadd.f32 %v2700, %v3212
        %3214 = vmatprep.mubr.bf16.mxu0 %v2971
        %3215 = vmatmul.mubr.bf16.gmra.mrb[0].mxu0 %v2970
        %v3216 = vpop.f32.mrb[0].mxu0
        %v3217 = vadd.f32 %v2705, %v3216
        %v3218 = vpop.f32.mrb[0].mxu0
        %v3219 = vadd.f32 %v2705, %v3218
        %v3220 = vpop.f32.mrb[0].mxu0
        %v3221 = vadd.f32 %v2710, %v3220
        %v3222 = vpop.f32.mrb[0].mxu0
        %v3223 = vadd.f32 %v2710, %v3222
        %3224 = vmatprep.mubr.bf16.mxu0 %v2975
        %3225 = vmatmul.mubr.bf16.gmra.mrb[0].mxu0 %v2974
        %v3226 = vpop.f32.mrb[0].mxu0
        %v3227 = vadd.f32 %v2715, %v3226
        %v3228 = vpop.f32.mrb[0].mxu0
        %v3229 = vadd.f32 %v2715, %v3228
        %v3230 = vpop.f32.mrb[0].mxu0
        %v3231 = vadd.f32 %v2720, %v3230
        %v3232 = vpop.f32.mrb[0].mxu0
        %v3233 = vadd.f32 %v2720, %v3232
        %3234 = vdwg.mxu0
        %3235 = vmatprep.subr.bf16.mxu0 %v2467
        %3236 = vmatpush1.bf16.msra.mxu0 %v2466
        %3237 = vmatprep.subr.bf16.mxu0 %v2471
        %3238 = vmatpush1.bf16.msra.mxu0 %v2470
        %3239 = vmatprep.subr.bf16.mxu0 %v2475
        %3240 = vmatpush1.bf16.msra.mxu0 %v2474
        %3241 = vmatprep.subr.bf16.mxu0 %v2479
        %3242 = vmatpush1.bf16.msra.mxu0 %v2478
        %3243 = vmatprep.subr.bf16.mxu0 %v2483
        %3244 = vmatpush1.bf16.msra.mxu0 %v2482
        %3245 = vmatprep.subr.bf16.mxu0 %v2487
        %3246 = vmatpush1.bf16.msra.mxu0 %v2486
        %3247 = vmatprep.subr.bf16.mxu0 %v2491
        %3248 = vmatpush1.bf16.msra.mxu0 %v2490
        %3249 = vmatprep.subr.bf16.mxu0 %v2495
        %3250 = vmatpush1.bf16.msra.mxu0 %v2494
        %3251 = vmatprep.subr.bf16.mxu0 %v2499
        %3252 = vmatpush1.bf16.msra.mxu0 %v2498
        %3253 = vmatprep.subr.bf16.mxu0 %v2503
        %3254 = vmatpush1.bf16.msra.mxu0 %v2502
        %3255 = vmatprep.subr.bf16.mxu0 %v2507
        %3256 = vmatpush1.bf16.msra.mxu0 %v2506
        %3257 = vmatprep.subr.bf16.mxu0 %v2511
        %3258 = vmatpush1.bf16.msra.mxu0 %v2510
        %3259 = vmatprep.subr.bf16.mxu0 %v2515
        %3260 = vmatpush1.bf16.msra.mxu0 %v2514
        %3261 = vmatprep.subr.bf16.mxu0 %v2519
        %3262 = vmatpush1.bf16.msra.mxu0 %v2518
        %3263 = vmatprep.subr.bf16.mxu0 %v2523
        %3264 = vmatpush1.bf16.msra.mxu0 %v2522
        %3265 = vmatprep.subr.bf16.mxu0 %v2527
        %3266 = vmatpush1.bf16.msra.mxu0 %v2526
        %3267 = vmatprep.mubr.bf16.mxu0 %v2917
        %3268 = vmatmul.mubr.bf16.gmra.mrb[0].mxu0 %v2916
        %v3269 = vpop.f32.mrb[0].mxu0
        %v3270 = vadd.f32 %v3077, %v3269
        %v3271 = vpop.f32.mrb[0].mxu0
        %v3272 = vadd.f32 %v3079, %v3271
        %v3273 = vpop.f32.mrb[0].mxu0
        %v3274 = vadd.f32 %v3081, %v3273
        %v3275 = vpop.f32.mrb[0].mxu0
        %v3276 = vadd.f32 %v3083, %v3275
        %3277 = vmatprep.mubr.bf16.mxu0 %v2921
        %3278 = vmatmul.mubr.bf16.gmra.mrb[0].mxu0 %v2920
        %v3279 = vpop.f32.mrb[0].mxu0
        %v3280 = vadd.f32 %v3087, %v3279
        %v3281 = vpop.f32.mrb[0].mxu0
        %v3282 = vadd.f32 %v3089, %v3281
        %v3283 = vpop.f32.mrb[0].mxu0
        %v3284 = vadd.f32 %v3091, %v3283
        %v3285 = vpop.f32.mrb[0].mxu0
        %v3286 = vadd.f32 %v3093, %v3285
        %3287 = vmatprep.mubr.bf16.mxu0 %v2925
        %3288 = vmatmul.mubr.bf16.gmra.mrb[0].mxu0 %v2924
        %v3289 = vpop.f32.mrb[0].mxu0
        %v3290 = vadd.f32 %v3097, %v3289
        %v3291 = vpop.f32.mrb[0].mxu0
        %v3292 = vadd.f32 %v3099, %v3291
        %v3293 = vpop.f32.mrb[0].mxu0
        %v3294 = vadd.f32 %v3101, %v3293
        %v3295 = vpop.f32.mrb[0].mxu0
        %v3296 = vadd.f32 %v3103, %v3295
        %3297 = vmatprep.mubr.bf16.mxu0 %v2929
        %3298 = vmatmul.mubr.bf16.gmra.mrb[0].mxu0 %v2928
        %v3299 = vpop.f32.mrb[0].mxu0
        %v3300 = vadd.f32 %v3107, %v3299
        %v3301 = vpop.f32.mrb[0].mxu0
        %v3302 = vadd.f32 %v3109, %v3301
        %v3303 = vpop.f32.mrb[0].mxu0
        %v3304 = vadd.f32 %v3111, %v3303
        %v3305 = vpop.f32.mrb[0].mxu0
        %v3306 = vadd.f32 %v3113, %v3305
        %3307 = vmatprep.mubr.bf16.mxu0 %v2933
        %3308 = vmatmul.mubr.bf16.gmra.mrb[0].mxu0 %v2932
        %v3309 = vpop.f32.mrb[0].mxu0
        %v3310 = vadd.f32 %v3117, %v3309
        %v3311 = vpop.f32.mrb[0].mxu0
        %v3312 = vadd.f32 %v3119, %v3311
        %v3313 = vpop.f32.mrb[0].mxu0
        %v3314 = vadd.f32 %v3121, %v3313
        %v3315 = vpop.f32.mrb[0].mxu0
        %v3316 = vadd.f32 %v3123, %v3315
        %3317 = vmatprep.mubr.bf16.mxu0 %v2937
        %3318 = vmatmul.mubr.bf16.gmra.mrb[0].mxu0 %v2936
        %v3319 = vpop.f32.mrb[0].mxu0
        %v3320 = vadd.f32 %v3127, %v3319
        %v3321 = vpop.f32.mrb[0].mxu0
        %v3322 = vadd.f32 %v3129, %v3321
        %v3323 = vpop.f32.mrb[0].mxu0
        %v3324 = vadd.f32 %v3131, %v3323
        %v3325 = vpop.f32.mrb[0].mxu0
        %v3326 = vadd.f32 %v3133, %v3325
        %3327 = vmatprep.mubr.bf16.mxu0 %v2941
        %3328 = vmatmul.mubr.bf16.gmra.mrb[0].mxu0 %v2940
        %v3329 = vpop.f32.mrb[0].mxu0
        %v3330 = vadd.f32 %v3137, %v3329
        %v3331 = vpop.f32.mrb[0].mxu0
        %v3332 = vadd.f32 %v3139, %v3331
        %v3333 = vpop.f32.mrb[0].mxu0
        %v3334 = vadd.f32 %v3141, %v3333
        %v3335 = vpop.f32.mrb[0].mxu0
        %v3336 = vadd.f32 %v3143, %v3335
        %3337 = vmatprep.mubr.bf16.mxu0 %v2945
        %3338 = vmatmul.mubr.bf16.gmra.mrb[0].mxu0 %v2944
        %v3339 = vpop.f32.mrb[0].mxu0
        %v3340 = vadd.f32 %v3147, %v3339
        %v3341 = vpop.f32.mrb[0].mxu0
        %v3342 = vadd.f32 %v3149, %v3341
        %v3343 = vpop.f32.mrb[0].mxu0
        %v3344 = vadd.f32 %v3151, %v3343
        %v3345 = vpop.f32.mrb[0].mxu0
        %v3346 = vadd.f32 %v3153, %v3345
        %3347 = vmatprep.mubr.bf16.mxu0 %v2949
        %3348 = vmatmul.mubr.bf16.gmra.mrb[0].mxu0 %v2948
        %v3349 = vpop.f32.mrb[0].mxu0
        %v3350 = vadd.f32 %v3157, %v3349
        %v3351 = vpop.f32.mrb[0].mxu0
        %v3352 = vadd.f32 %v3159, %v3351
        %v3353 = vpop.f32.mrb[0].mxu0
        %v3354 = vadd.f32 %v3161, %v3353
        %v3355 = vpop.f32.mrb[0].mxu0
        %v3356 = vadd.f32 %v3163, %v3355
        %3357 = vmatprep.mubr.bf16.mxu0 %v2953
        %3358 = vmatmul.mubr.bf16.gmra.mrb[0].mxu0 %v2952
        %v3359 = vpop.f32.mrb[0].mxu0
        %v3360 = vadd.f32 %v3167, %v3359
        %v3361 = vpop.f32.mrb[0].mxu0
        %v3362 = vadd.f32 %v3169, %v3361
        %v3363 = vpop.f32.mrb[0].mxu0
        %v3364 = vadd.f32 %v3171, %v3363
        %v3365 = vpop.f32.mrb[0].mxu0
        %v3366 = vadd.f32 %v3173, %v3365
        %3367 = vmatprep.mubr.bf16.mxu0 %v2957
        %3368 = vmatmul.mubr.bf16.gmra.mrb[0].mxu0 %v2956
        %v3369 = vpop.f32.mrb[0].mxu0
        %v3370 = vadd.f32 %v3177, %v3369
        %v3371 = vpop.f32.mrb[0].mxu0
        %v3372 = vadd.f32 %v3179, %v3371
        %v3373 = vpop.f32.mrb[0].mxu0
        %v3374 = vadd.f32 %v3181, %v3373
        %v3375 = vpop.f32.mrb[0].mxu0
        %v3376 = vadd.f32 %v3183, %v3375
        %3377 = vmatprep.mubr.bf16.mxu0 %v2961
        %3378 = vmatmul.mubr.bf16.gmra.mrb[0].mxu0 %v2960
        %v3379 = vpop.f32.mrb[0].mxu0
        %v3380 = vadd.f32 %v3187, %v3379
        %v3381 = vpop.f32.mrb[0].mxu0
        %v3382 = vadd.f32 %v3189, %v3381
        %v3383 = vpop.f32.mrb[0].mxu0
        %v3384 = vadd.f32 %v3191, %v3383
        %v3385 = vpop.f32.mrb[0].mxu0
        %v3386 = vadd.f32 %v3193, %v3385
        %3387 = vmatprep.mubr.bf16.mxu0 %v2965
        %3388 = vmatmul.mubr.bf16.gmra.mrb[0].mxu0 %v2964
        %v3389 = vpop.f32.mrb[0].mxu0
        %v3390 = vadd.f32 %v3197, %v3389
        %v3391 = vpop.f32.mrb[0].mxu0
        %v3392 = vadd.f32 %v3199, %v3391
        %v3393 = vpop.f32.mrb[0].mxu0
        %v3394 = vadd.f32 %v3201, %v3393
        %v3395 = vpop.f32.mrb[0].mxu0
        %v3396 = vadd.f32 %v3203, %v3395
        %3397 = vmatprep.mubr.bf16.mxu0 %v2969
        %3398 = vmatmul.mubr.bf16.gmra.mrb[0].mxu0 %v2968
        %v3399 = vpop.f32.mrb[0].mxu0
        %v3400 = vadd.f32 %v3207, %v3399
        %v3401 = vpop.f32.mrb[0].mxu0
        %v3402 = vadd.f32 %v3209, %v3401
        %v3403 = vpop.f32.mrb[0].mxu0
        %v3404 = vadd.f32 %v3211, %v3403
        %v3405 = vpop.f32.mrb[0].mxu0
        %v3406 = vadd.f32 %v3213, %v3405
        %3407 = vmatprep.mubr.bf16.mxu0 %v2973
        %3408 = vmatmul.mubr.bf16.gmra.mrb[0].mxu0 %v2972
        %v3409 = vpop.f32.mrb[0].mxu0
        %v3410 = vadd.f32 %v3217, %v3409
        %v3411 = vpop.f32.mrb[0].mxu0
        %v3412 = vadd.f32 %v3219, %v3411
        %v3413 = vpop.f32.mrb[0].mxu0
        %v3414 = vadd.f32 %v3221, %v3413
        %v3415 = vpop.f32.mrb[0].mxu0
        %v3416 = vadd.f32 %v3223, %v3415
        %3417 = vmatprep.mubr.bf16.mxu0 %v2977
        %3418 = vmatmul.mubr.bf16.gmra.mrb[0].mxu0 %v2976
        %v3419 = vpop.f32.mrb[0].mxu0
        %v3420 = vadd.f32 %v3227, %v3419
        %v3421 = vpop.f32.mrb[0].mxu0
        %v3422 = vadd.f32 %v3229, %v3421
        %v3423 = vpop.f32.mrb[0].mxu0
        %v3424 = vadd.f32 %v3231, %v3423
        %v3425 = vpop.f32.mrb[0].mxu0
        %v3426 = vadd.f32 %v3233, %v3425
        %3427 = vdwg.mxu0
        %3428 = vmatprep.subr.bf16.mxu0 %v2405
        %3429 = vmatpush1.bf16.msra.mxu0 %v2404
        %3430 = vmatprep.subr.bf16.mxu0 %v2409
        %3431 = vmatpush1.bf16.msra.mxu0 %v2408
        %3432 = vmatprep.subr.bf16.mxu0 %v2413
        %3433 = vmatpush1.bf16.msra.mxu0 %v2412
        %3434 = vmatprep.subr.bf16.mxu0 %v2417
        %3435 = vmatpush1.bf16.msra.mxu0 %v2416
        %3436 = vmatprep.subr.bf16.mxu0 %v2421
        %3437 = vmatpush1.bf16.msra.mxu0 %v2420
        %3438 = vmatprep.subr.bf16.mxu0 %v2425
        %3439 = vmatpush1.bf16.msra.mxu0 %v2424
        %3440 = vmatprep.subr.bf16.mxu0 %v2429
        %3441 = vmatpush1.bf16.msra.mxu0 %v2428
        %3442 = vmatprep.subr.bf16.mxu0 %v2433
        %3443 = vmatpush1.bf16.msra.mxu0 %v2432
        %3444 = vmatprep.subr.bf16.mxu0 %v2437
        %3445 = vmatpush1.bf16.msra.mxu0 %v2436
        %3446 = vmatprep.subr.bf16.mxu0 %v2441
        %3447 = vmatpush1.bf16.msra.mxu0 %v2440
        %3448 = vmatprep.subr.bf16.mxu0 %v2445
        %3449 = vmatpush1.bf16.msra.mxu0 %v2444
        %3450 = vmatprep.subr.bf16.mxu0 %v2449
        %3451 = vmatpush1.bf16.msra.mxu0 %v2448
        %3452 = vmatprep.subr.bf16.mxu0 %v2453
        %3453 = vmatpush1.bf16.msra.mxu0 %v2452
        %3454 = vmatprep.subr.bf16.mxu0 %v2457
        %3455 = vmatpush1.bf16.msra.mxu0 %v2456
        %3456 = vmatprep.subr.bf16.mxu0 %v2461
        %3457 = vmatpush1.bf16.msra.mxu0 %v2460
        %3458 = vmatprep.subr.bf16.mxu0 %v2465
        %3459 = vmatpush1.bf16.msra.mxu0 %v2464
        %3460 = vmatprep.mubr.bf16.mxu0 %v2915
        %3461 = vmatmul.mubr.bf16.gmra.mrb[0].mxu0 %v2914
        %v3462 = vpop.f32.mrb[0].mxu0
        %v3463 = vadd.f32 %v2565, %v3462
        %v3464 = vpop.f32.mrb[0].mxu0
        %v3465 = vadd.f32 %v2565, %v3464
        %v3466 = vpop.f32.mrb[0].mxu0
        %v3467 = vadd.f32 %v2570, %v3466
        %v3468 = vpop.f32.mrb[0].mxu0
        %v3469 = vadd.f32 %v2570, %v3468
        %3470 = vmatprep.mubr.bf16.mxu0 %v2919
        %3471 = vmatmul.mubr.bf16.gmra.mrb[0].mxu0 %v2918
        %v3472 = vpop.f32.mrb[0].mxu0
        %v3473 = vadd.f32 %v2575, %v3472
        %v3474 = vpop.f32.mrb[0].mxu0
        %v3475 = vadd.f32 %v2575, %v3474
        %v3476 = vpop.f32.mrb[0].mxu0
        %v3477 = vadd.f32 %v2580, %v3476
        %v3478 = vpop.f32.mrb[0].mxu0
        %v3479 = vadd.f32 %v2580, %v3478
        %3480 = vmatprep.mubr.bf16.mxu0 %v2923
        %3481 = vmatmul.mubr.bf16.gmra.mrb[0].mxu0 %v2922
        %v3482 = vpop.f32.mrb[0].mxu0
        %v3483 = vadd.f32 %v2585, %v3482
        %v3484 = vpop.f32.mrb[0].mxu0
        %v3485 = vadd.f32 %v2585, %v3484
        %v3486 = vpop.f32.mrb[0].mxu0
        %v3487 = vadd.f32 %v2590, %v3486
        %v3488 = vpop.f32.mrb[0].mxu0
        %v3489 = vadd.f32 %v2590, %v3488
        %3490 = vmatprep.mubr.bf16.mxu0 %v2927
        %3491 = vmatmul.mubr.bf16.gmra.mrb[0].mxu0 %v2926
        %v3492 = vpop.f32.mrb[0].mxu0
        %v3493 = vadd.f32 %v2595, %v3492
        %v3494 = vpop.f32.mrb[0].mxu0
        %v3495 = vadd.f32 %v2595, %v3494
        %v3496 = vpop.f32.mrb[0].mxu0
        %v3497 = vadd.f32 %v2600, %v3496
        %v3498 = vpop.f32.mrb[0].mxu0
        %v3499 = vadd.f32 %v2600, %v3498
        %3500 = vmatprep.mubr.bf16.mxu0 %v2931
        %3501 = vmatmul.mubr.bf16.gmra.mrb[0].mxu0 %v2930
        %v3502 = vpop.f32.mrb[0].mxu0
        %v3503 = vadd.f32 %v2605, %v3502
        %v3504 = vpop.f32.mrb[0].mxu0
        %v3505 = vadd.f32 %v2605, %v3504
        %v3506 = vpop.f32.mrb[0].mxu0
        %v3507 = vadd.f32 %v2610, %v3506
        %v3508 = vpop.f32.mrb[0].mxu0
        %v3509 = vadd.f32 %v2610, %v3508
        %3510 = vmatprep.mubr.bf16.mxu0 %v2935
        %3511 = vmatmul.mubr.bf16.gmra.mrb[0].mxu0 %v2934
        %v3512 = vpop.f32.mrb[0].mxu0
        %v3513 = vadd.f32 %v2615, %v3512
        %v3514 = vpop.f32.mrb[0].mxu0
        %v3515 = vadd.f32 %v2615, %v3514
        %v3516 = vpop.f32.mrb[0].mxu0
        %v3517 = vadd.f32 %v2620, %v3516
        %v3518 = vpop.f32.mrb[0].mxu0
        %v3519 = vadd.f32 %v2620, %v3518
        %3520 = vmatprep.mubr.bf16.mxu0 %v2939
        %3521 = vmatmul.mubr.bf16.gmra.mrb[0].mxu0 %v2938
        %v3522 = vpop.f32.mrb[0].mxu0
        %v3523 = vadd.f32 %v2625, %v3522
        %v3524 = vpop.f32.mrb[0].mxu0
        %v3525 = vadd.f32 %v2625, %v3524
        %v3526 = vpop.f32.mrb[0].mxu0
        %v3527 = vadd.f32 %v2630, %v3526
        %v3528 = vpop.f32.mrb[0].mxu0
        %v3529 = vadd.f32 %v2630, %v3528
        %3530 = vmatprep.mubr.bf16.mxu0 %v2943
        %3531 = vmatmul.mubr.bf16.gmra.mrb[0].mxu0 %v2942
        %v3532 = vpop.f32.mrb[0].mxu0
        %v3533 = vadd.f32 %v2635, %v3532
        %v3534 = vpop.f32.mrb[0].mxu0
        %v3535 = vadd.f32 %v2635, %v3534
        %v3536 = vpop.f32.mrb[0].mxu0
        %v3537 = vadd.f32 %v2640, %v3536
        %v3538 = vpop.f32.mrb[0].mxu0
        %v3539 = vadd.f32 %v2640, %v3538
        %3540 = vmatprep.mubr.bf16.mxu0 %v2947
        %3541 = vmatmul.mubr.bf16.gmra.mrb[0].mxu0 %v2946
        %v3542 = vpop.f32.mrb[0].mxu0
        %v3543 = vadd.f32 %v2645, %v3542
        %v3544 = vpop.f32.mrb[0].mxu0
        %v3545 = vadd.f32 %v2645, %v3544
        %v3546 = vpop.f32.mrb[0].mxu0
        %v3547 = vadd.f32 %v2650, %v3546
        %v3548 = vpop.f32.mrb[0].mxu0
        %v3549 = vadd.f32 %v2650, %v3548
        %3550 = vmatprep.mubr.bf16.mxu0 %v2951
        %3551 = vmatmul.mubr.bf16.gmra.mrb[0].mxu0 %v2950
        %v3552 = vpop.f32.mrb[0].mxu0
        %v3553 = vadd.f32 %v2655, %v3552
        %v3554 = vpop.f32.mrb[0].mxu0
        %v3555 = vadd.f32 %v2655, %v3554
        %v3556 = vpop.f32.mrb[0].mxu0
        %v3557 = vadd.f32 %v2660, %v3556
        %v3558 = vpop.f32.mrb[0].mxu0
        %v3559 = vadd.f32 %v2660, %v3558
        %3560 = vmatprep.mubr.bf16.mxu0 %v2955
        %3561 = vmatmul.mubr.bf16.gmra.mrb[0].mxu0 %v2954
        %v3562 = vpop.f32.mrb[0].mxu0
        %v3563 = vadd.f32 %v2665, %v3562
        %v3564 = vpop.f32.mrb[0].mxu0
        %v3565 = vadd.f32 %v2665, %v3564
        %v3566 = vpop.f32.mrb[0].mxu0
        %v3567 = vadd.f32 %v2670, %v3566
        %v3568 = vpop.f32.mrb[0].mxu0
        %v3569 = vadd.f32 %v2670, %v3568
        %3570 = vmatprep.mubr.bf16.mxu0 %v2959
        %3571 = vmatmul.mubr.bf16.gmra.mrb[0].mxu0 %v2958
        %v3572 = vpop.f32.mrb[0].mxu0
        %v3573 = vadd.f32 %v2675, %v3572
        %v3574 = vpop.f32.mrb[0].mxu0
        %v3575 = vadd.f32 %v2675, %v3574
        %v3576 = vpop.f32.mrb[0].mxu0
        %v3577 = vadd.f32 %v2680, %v3576
        %v3578 = vpop.f32.mrb[0].mxu0
        %v3579 = vadd.f32 %v2680, %v3578
        %3580 = vmatprep.mubr.bf16.mxu0 %v2963
        %3581 = vmatmul.mubr.bf16.gmra.mrb[0].mxu0 %v2962
        %v3582 = vpop.f32.mrb[0].mxu0
        %v3583 = vadd.f32 %v2685, %v3582
        %v3584 = vpop.f32.mrb[0].mxu0
        %v3585 = vadd.f32 %v2685, %v3584
        %v3586 = vpop.f32.mrb[0].mxu0
        %v3587 = vadd.f32 %v2690, %v3586
        %v3588 = vpop.f32.mrb[0].mxu0
        %v3589 = vadd.f32 %v2690, %v3588
        %3590 = vmatprep.mubr.bf16.mxu0 %v2967
        %3591 = vmatmul.mubr.bf16.gmra.mrb[0].mxu0 %v2966
        %v3592 = vpop.f32.mrb[0].mxu0
        %v3593 = vadd.f32 %v2695, %v3592
        %v3594 = vpop.f32.mrb[0].mxu0
        %v3595 = vadd.f32 %v2695, %v3594
        %v3596 = vpop.f32.mrb[0].mxu0
        %v3597 = vadd.f32 %v2700, %v3596
        %v3598 = vpop.f32.mrb[0].mxu0
        %v3599 = vadd.f32 %v2700, %v3598
        %3600 = vmatprep.mubr.bf16.mxu0 %v2971
        %3601 = vmatmul.mubr.bf16.gmra.mrb[0].mxu0 %v2970
        %v3602 = vpop.f32.mrb[0].mxu0
        %v3603 = vadd.f32 %v2705, %v3602
        %v3604 = vpop.f32.mrb[0].mxu0
        %v3605 = vadd.f32 %v2705, %v3604
        %v3606 = vpop.f32.mrb[0].mxu0
        %v3607 = vadd.f32 %v2710, %v3606
        %v3608 = vpop.f32.mrb[0].mxu0
        %v3609 = vadd.f32 %v2710, %v3608
        %3610 = vmatprep.mubr.bf16.mxu0 %v2975
        %3611 = vmatmul.mubr.bf16.gmra.mrb[0].mxu0 %v2974
        %v3612 = vpop.f32.mrb[0].mxu0
        %v3613 = vadd.f32 %v2715, %v3612
        %v3614 = vpop.f32.mrb[0].mxu0
        %v3615 = vadd.f32 %v2715, %v3614
        %v3616 = vpop.f32.mrb[0].mxu0
        %v3617 = vadd.f32 %v2720, %v3616
        %v3618 = vpop.f32.mrb[0].mxu0
        %v3619 = vadd.f32 %v2720, %v3618
        %3620 = vdwg.mxu0
        %3621 = vmatprep.subr.bf16.mxu0 %v2469
        %3622 = vmatpush1.bf16.msra.mxu0 %v2468
        %3623 = vmatprep.subr.bf16.mxu0 %v2473
        %3624 = vmatpush1.bf16.msra.mxu0 %v2472
        %3625 = vmatprep.subr.bf16.mxu0 %v2477
        %3626 = vmatpush1.bf16.msra.mxu0 %v2476
        %3627 = vmatprep.subr.bf16.mxu0 %v2481
        %3628 = vmatpush1.bf16.msra.mxu0 %v2480
        %3629 = vmatprep.subr.bf16.mxu0 %v2485
        %3630 = vmatpush1.bf16.msra.mxu0 %v2484
        %3631 = vmatprep.subr.bf16.mxu0 %v2489
        %3632 = vmatpush1.bf16.msra.mxu0 %v2488
        %3633 = vmatprep.subr.bf16.mxu0 %v2493
        %3634 = vmatpush1.bf16.msra.mxu0 %v2492
        %3635 = vmatprep.subr.bf16.mxu0 %v2497
        %3636 = vmatpush1.bf16.msra.mxu0 %v2496
        %3637 = vmatprep.subr.bf16.mxu0 %v2501
        %3638 = vmatpush1.bf16.msra.mxu0 %v2500
        %3639 = vmatprep.subr.bf16.mxu0 %v2505
        %3640 = vmatpush1.bf16.msra.mxu0 %v2504
        %3641 = vmatprep.subr.bf16.mxu0 %v2509
        %3642 = vmatpush1.bf16.msra.mxu0 %v2508
        %3643 = vmatprep.subr.bf16.mxu0 %v2513
        %3644 = vmatpush1.bf16.msra.mxu0 %v2512
        %3645 = vmatprep.subr.bf16.mxu0 %v2517
        %3646 = vmatpush1.bf16.msra.mxu0 %v2516
        %3647 = vmatprep.subr.bf16.mxu0 %v2521
        %3648 = vmatpush1.bf16.msra.mxu0 %v2520
        %3649 = vmatprep.subr.bf16.mxu0 %v2525
        %3650 = vmatpush1.bf16.msra.mxu0 %v2524
        %3651 = vmatprep.subr.bf16.mxu0 %v2529
        %3652 = vmatpush1.bf16.msra.mxu0 %v2528
        %3653 = vmatprep.mubr.bf16.mxu0 %v2917
        %3654 = vmatmul.mubr.bf16.gmra.mrb[0].mxu0 %v2916
        %v3655 = vpop.f32.mrb[0].mxu0
        %v3656 = vadd.f32 %v3463, %v3655
        %v3657 = vpop.f32.mrb[0].mxu0
        %v3658 = vadd.f32 %v3465, %v3657
        %v3659 = vpop.f32.mrb[0].mxu0
        %v3660 = vadd.f32 %v3467, %v3659
        %v3661 = vpop.f32.mrb[0].mxu0
        %v3662 = vadd.f32 %v3469, %v3661
        %3663 = vmatprep.mubr.bf16.mxu0 %v2921
        %3664 = vmatmul.mubr.bf16.gmra.mrb[0].mxu0 %v2920
        %v3665 = vpop.f32.mrb[0].mxu0
        %v3666 = vadd.f32 %v3473, %v3665
        %v3667 = vpop.f32.mrb[0].mxu0
        %v3668 = vadd.f32 %v3475, %v3667
        %v3669 = vpop.f32.mrb[0].mxu0
        %v3670 = vadd.f32 %v3477, %v3669
        %v3671 = vpop.f32.mrb[0].mxu0
        %v3672 = vadd.f32 %v3479, %v3671
        %3673 = vmatprep.mubr.bf16.mxu0 %v2925
        %3674 = vmatmul.mubr.bf16.gmra.mrb[0].mxu0 %v2924
        %v3675 = vpop.f32.mrb[0].mxu0
        %v3676 = vadd.f32 %v3483, %v3675
        %v3677 = vpop.f32.mrb[0].mxu0
        %v3678 = vadd.f32 %v3485, %v3677
        %v3679 = vpop.f32.mrb[0].mxu0
        %v3680 = vadd.f32 %v3487, %v3679
        %v3681 = vpop.f32.mrb[0].mxu0
        %v3682 = vadd.f32 %v3489, %v3681
        %3683 = vmatprep.mubr.bf16.mxu0 %v2929
        %3684 = vmatmul.mubr.bf16.gmra.mrb[0].mxu0 %v2928
        %v3685 = vpop.f32.mrb[0].mxu0
        %v3686 = vadd.f32 %v3493, %v3685
        %v3687 = vpop.f32.mrb[0].mxu0
        %v3688 = vadd.f32 %v3495, %v3687
        %v3689 = vpop.f32.mrb[0].mxu0
        %v3690 = vadd.f32 %v3497, %v3689
        %v3691 = vpop.f32.mrb[0].mxu0
        %v3692 = vadd.f32 %v3499, %v3691
        %3693 = vmatprep.mubr.bf16.mxu0 %v2933
        %3694 = vmatmul.mubr.bf16.gmra.mrb[0].mxu0 %v2932
        %v3695 = vpop.f32.mrb[0].mxu0
        %v3696 = vadd.f32 %v3503, %v3695
        %v3697 = vpop.f32.mrb[0].mxu0
        %v3698 = vadd.f32 %v3505, %v3697
        %v3699 = vpop.f32.mrb[0].mxu0
        %v3700 = vadd.f32 %v3507, %v3699
        %v3701 = vpop.f32.mrb[0].mxu0
        %v3702 = vadd.f32 %v3509, %v3701
        %3703 = vmatprep.mubr.bf16.mxu0 %v2937
        %3704 = vmatmul.mubr.bf16.gmra.mrb[0].mxu0 %v2936
        %v3705 = vpop.f32.mrb[0].mxu0
        %v3706 = vadd.f32 %v3513, %v3705
        %v3707 = vpop.f32.mrb[0].mxu0
        %v3708 = vadd.f32 %v3515, %v3707
        %v3709 = vpop.f32.mrb[0].mxu0
        %v3710 = vadd.f32 %v3517, %v3709
        %v3711 = vpop.f32.mrb[0].mxu0
        %v3712 = vadd.f32 %v3519, %v3711
        %3713 = vmatprep.mubr.bf16.mxu0 %v2941
        %3714 = vmatmul.mubr.bf16.gmra.mrb[0].mxu0 %v2940
        %v3715 = vpop.f32.mrb[0].mxu0
        %v3716 = vadd.f32 %v3523, %v3715
        %v3717 = vpop.f32.mrb[0].mxu0
        %v3718 = vadd.f32 %v3525, %v3717
        %v3719 = vpop.f32.mrb[0].mxu0
        %v3720 = vadd.f32 %v3527, %v3719
        %v3721 = vpop.f32.mrb[0].mxu0
        %v3722 = vadd.f32 %v3529, %v3721
        %3723 = vmatprep.mubr.bf16.mxu0 %v2945
        %3724 = vmatmul.mubr.bf16.gmra.mrb[0].mxu0 %v2944
        %v3725 = vpop.f32.mrb[0].mxu0
        %v3726 = vadd.f32 %v3533, %v3725
        %v3727 = vpop.f32.mrb[0].mxu0
        %v3728 = vadd.f32 %v3535, %v3727
        %v3729 = vpop.f32.mrb[0].mxu0
        %v3730 = vadd.f32 %v3537, %v3729
        %v3731 = vpop.f32.mrb[0].mxu0
        %v3732 = vadd.f32 %v3539, %v3731
        %3733 = vmatprep.mubr.bf16.mxu0 %v2949
        %3734 = vmatmul.mubr.bf16.gmra.mrb[0].mxu0 %v2948
        %v3735 = vpop.f32.mrb[0].mxu0
        %v3736 = vadd.f32 %v3543, %v3735
        %v3737 = vpop.f32.mrb[0].mxu0
        %v3738 = vadd.f32 %v3545, %v3737
        %v3739 = vpop.f32.mrb[0].mxu0
        %v3740 = vadd.f32 %v3547, %v3739
        %v3741 = vpop.f32.mrb[0].mxu0
        %v3742 = vadd.f32 %v3549, %v3741
        %3743 = vmatprep.mubr.bf16.mxu0 %v2953
        %3744 = vmatmul.mubr.bf16.gmra.mrb[0].mxu0 %v2952
        %v3745 = vpop.f32.mrb[0].mxu0
        %v3746 = vadd.f32 %v3553, %v3745
        %v3747 = vpop.f32.mrb[0].mxu0
        %v3748 = vadd.f32 %v3555, %v3747
        %v3749 = vpop.f32.mrb[0].mxu0
        %v3750 = vadd.f32 %v3557, %v3749
        %v3751 = vpop.f32.mrb[0].mxu0
        %v3752 = vadd.f32 %v3559, %v3751
        %3753 = vmatprep.mubr.bf16.mxu0 %v2957
        %3754 = vmatmul.mubr.bf16.gmra.mrb[0].mxu0 %v2956
        %v3755 = vpop.f32.mrb[0].mxu0
        %v3756 = vadd.f32 %v3563, %v3755
        %v3757 = vpop.f32.mrb[0].mxu0
        %v3758 = vadd.f32 %v3565, %v3757
        %v3759 = vpop.f32.mrb[0].mxu0
        %v3760 = vadd.f32 %v3567, %v3759
        %v3761 = vpop.f32.mrb[0].mxu0
        %v3762 = vadd.f32 %v3569, %v3761
        %3763 = vmatprep.mubr.bf16.mxu0 %v2961
        %3764 = vmatmul.mubr.bf16.gmra.mrb[0].mxu0 %v2960
        %v3765 = vpop.f32.mrb[0].mxu0
        %v3766 = vadd.f32 %v3573, %v3765
        %v3767 = vpop.f32.mrb[0].mxu0
        %v3768 = vadd.f32 %v3575, %v3767
        %v3769 = vpop.f32.mrb[0].mxu0
        %v3770 = vadd.f32 %v3577, %v3769
        %v3771 = vpop.f32.mrb[0].mxu0
        %v3772 = vadd.f32 %v3579, %v3771
        %3773 = vmatprep.mubr.bf16.mxu0 %v2965
        %3774 = vmatmul.mubr.bf16.gmra.mrb[0].mxu0 %v2964
        %v3775 = vpop.f32.mrb[0].mxu0
        %v3776 = vadd.f32 %v3583, %v3775
        %v3777 = vpop.f32.mrb[0].mxu0
        %v3778 = vadd.f32 %v3585, %v3777
        %v3779 = vpop.f32.mrb[0].mxu0
        %v3780 = vadd.f32 %v3587, %v3779
        %v3781 = vpop.f32.mrb[0].mxu0
        %v3782 = vadd.f32 %v3589, %v3781
        %3783 = vmatprep.mubr.bf16.mxu0 %v2969
        %3784 = vmatmul.mubr.bf16.gmra.mrb[0].mxu0 %v2968
        %v3785 = vpop.f32.mrb[0].mxu0
        %v3786 = vadd.f32 %v3593, %v3785
        %v3787 = vpop.f32.mrb[0].mxu0
        %v3788 = vadd.f32 %v3595, %v3787
        %v3789 = vpop.f32.mrb[0].mxu0
        %v3790 = vadd.f32 %v3597, %v3789
        %v3791 = vpop.f32.mrb[0].mxu0
        %v3792 = vadd.f32 %v3599, %v3791
        %3793 = vmatprep.mubr.bf16.mxu0 %v2973
        %3794 = vmatmul.mubr.bf16.gmra.mrb[0].mxu0 %v2972
        %v3795 = vpop.f32.mrb[0].mxu0
        %v3796 = vadd.f32 %v3603, %v3795
        %v3797 = vpop.f32.mrb[0].mxu0
        %v3798 = vadd.f32 %v3605, %v3797
        %v3799 = vpop.f32.mrb[0].mxu0
        %v3800 = vadd.f32 %v3607, %v3799
        %v3801 = vpop.f32.mrb[0].mxu0
        %v3802 = vadd.f32 %v3609, %v3801
        %3803 = vmatprep.mubr.bf16.mxu0 %v2977
        %3804 = vmatmul.mubr.bf16.gmra.mrb[0].mxu0 %v2976
        %v3805 = vpop.f32.mrb[0].mxu0
        %v3806 = vadd.f32 %v3613, %v3805
        %v3807 = vpop.f32.mrb[0].mxu0
        %v3808 = vadd.f32 %v3615, %v3807
        %v3809 = vpop.f32.mrb[0].mxu0
        %v3810 = vadd.f32 %v3617, %v3809
        %v3811 = vpop.f32.mrb[0].mxu0
        %v3812 = vadd.f32 %v3619, %v3811
        %3813 = vdwg.mxu0
        %v3814 = vmax.f32 %v3270, 0.0
        %v3815 = vmax.f32 %v3272, 0.0
        %v3816 = vmax.f32 %v3656, 0.0
        %v3817 = vmax.f32 %v3658, 0.0
        %v3818 = vmax.f32 %v3274, 0.0
        %v3819 = vmax.f32 %v3276, 0.0
        %v3820 = vmax.f32 %v3660, 0.0
        %v3821 = vmax.f32 %v3662, 0.0
        %v3822 = vmax.f32 %v3280, 0.0
        %v3823 = vmax.f32 %v3282, 0.0
        %v3824 = vmax.f32 %v3666, 0.0
        %v3825 = vmax.f32 %v3668, 0.0
        %v3826 = vmax.f32 %v3284, 0.0
        %v3827 = vmax.f32 %v3286, 0.0
        %v3828 = vmax.f32 %v3670, 0.0
        %v3829 = vmax.f32 %v3672, 0.0
        %v3830 = vmax.f32 %v3290, 0.0
        %v3831 = vmax.f32 %v3292, 0.0
        %v3832 = vmax.f32 %v3676, 0.0
        %v3833 = vmax.f32 %v3678, 0.0
        %v3834 = vmax.f32 %v3294, 0.0
        %v3835 = vmax.f32 %v3296, 0.0
        %v3836 = vmax.f32 %v3680, 0.0
        %v3837 = vmax.f32 %v3682, 0.0
        %v3838 = vmax.f32 %v3300, 0.0
        %v3839 = vmax.f32 %v3302, 0.0
        %v3840 = vmax.f32 %v3686, 0.0
        %v3841 = vmax.f32 %v3688, 0.0
        %v3842 = vmax.f32 %v3304, 0.0
        %v3843 = vmax.f32 %v3306, 0.0
        %v3844 = vmax.f32 %v3690, 0.0
        %v3845 = vmax.f32 %v3692, 0.0
        %v3846 = vmax.f32 %v3310, 0.0
        %v3847 = vmax.f32 %v3312, 0.0
        %v3848 = vmax.f32 %v3696, 0.0
        %v3849 = vmax.f32 %v3698, 0.0
        %v3850 = vmax.f32 %v3314, 0.0
        %v3851 = vmax.f32 %v3316, 0.0
        %v3852 = vmax.f32 %v3700, 0.0
        %v3853 = vmax.f32 %v3702, 0.0
        %v3854 = vmax.f32 %v3320, 0.0
        %v3855 = vmax.f32 %v3322, 0.0
        %v3856 = vmax.f32 %v3706, 0.0
        %v3857 = vmax.f32 %v3708, 0.0
        %v3858 = vmax.f32 %v3324, 0.0
        %v3859 = vmax.f32 %v3326, 0.0
        %v3860 = vmax.f32 %v3710, 0.0
        %v3861 = vmax.f32 %v3712, 0.0
        %v3862 = vmax.f32 %v3330, 0.0
        %v3863 = vmax.f32 %v3332, 0.0
        %v3864 = vmax.f32 %v3716, 0.0
        %v3865 = vmax.f32 %v3718, 0.0
        %v3866 = vmax.f32 %v3334, 0.0
        %v3867 = vmax.f32 %v3336, 0.0
        %v3868 = vmax.f32 %v3720, 0.0
        %v3869 = vmax.f32 %v3722, 0.0
        %v3870 = vmax.f32 %v3340, 0.0
        %v3871 = vmax.f32 %v3342, 0.0
        %v3872 = vmax.f32 %v3726, 0.0
        %v3873 = vmax.f32 %v3728, 0.0
        %v3874 = vmax.f32 %v3344, 0.0
        %v3875 = vmax.f32 %v3346, 0.0
        %v3876 = vmax.f32 %v3730, 0.0
        %v3877 = vmax.f32 %v3732, 0.0
        %v3878 = vmax.f32 %v3350, 0.0
        %v3879 = vmax.f32 %v3352, 0.0
        %v3880 = vmax.f32 %v3736, 0.0
        %v3881 = vmax.f32 %v3738, 0.0
        %v3882 = vmax.f32 %v3354, 0.0
        %v3883 = vmax.f32 %v3356, 0.0
        %v3884 = vmax.f32 %v3740, 0.0
        %v3885 = vmax.f32 %v3742, 0.0
        %v3886 = vmax.f32 %v3360, 0.0
        %v3887 = vmax.f32 %v3362, 0.0
        %v3888 = vmax.f32 %v3746, 0.0
        %v3889 = vmax.f32 %v3748, 0.0
        %v3890 = vmax.f32 %v3364, 0.0
        %v3891 = vmax.f32 %v3366, 0.0
        %v3892 = vmax.f32 %v3750, 0.0
        %v3893 = vmax.f32 %v3752, 0.0
        %v3894 = vmax.f32 %v3370, 0.0
        %v3895 = vmax.f32 %v3372, 0.0
        %v3896 = vmax.f32 %v3756, 0.0
        %v3897 = vmax.f32 %v3758, 0.0
        %v3898 = vmax.f32 %v3374, 0.0
        %v3899 = vmax.f32 %v3376, 0.0
        %v3900 = vmax.f32 %v3760, 0.0
        %v3901 = vmax.f32 %v3762, 0.0
        %v3902 = vmax.f32 %v3380, 0.0
        %v3903 = vmax.f32 %v3382, 0.0
        %v3904 = vmax.f32 %v3766, 0.0
        %v3905 = vmax.f32 %v3768, 0.0
        %v3906 = vmax.f32 %v3384, 0.0
        %v3907 = vmax.f32 %v3386, 0.0
        %v3908 = vmax.f32 %v3770, 0.0
        %v3909 = vmax.f32 %v3772, 0.0
        %v3910 = vmax.f32 %v3390, 0.0
        %v3911 = vmax.f32 %v3392, 0.0
        %v3912 = vmax.f32 %v3776, 0.0
        %v3913 = vmax.f32 %v3778, 0.0
        %v3914 = vmax.f32 %v3394, 0.0
        %v3915 = vmax.f32 %v3396, 0.0
        %v3916 = vmax.f32 %v3780, 0.0
        %v3917 = vmax.f32 %v3782, 0.0
        %v3918 = vmax.f32 %v3400, 0.0
        %v3919 = vmax.f32 %v3402, 0.0
        %v3920 = vmax.f32 %v3786, 0.0
        %v3921 = vmax.f32 %v3788, 0.0
        %v3922 = vmax.f32 %v3404, 0.0
        %v3923 = vmax.f32 %v3406, 0.0
        %v3924 = vmax.f32 %v3790, 0.0
        %v3925 = vmax.f32 %v3792, 0.0
        %v3926 = vmax.f32 %v3410, 0.0
        %v3927 = vmax.f32 %v3412, 0.0
        %v3928 = vmax.f32 %v3796, 0.0
        %v3929 = vmax.f32 %v3798, 0.0
        %v3930 = vmax.f32 %v3414, 0.0
        %v3931 = vmax.f32 %v3416, 0.0
        %v3932 = vmax.f32 %v3800, 0.0
        %v3933 = vmax.f32 %v3802, 0.0
        %v3934 = vmax.f32 %v3420, 0.0
        %v3935 = vmax.f32 %v3422, 0.0
        %v3936 = vmax.f32 %v3806, 0.0
        %v3937 = vmax.f32 %v3808, 0.0
        %v3938 = vmax.f32 %v3424, 0.0
        %v3939 = vmax.f32 %v3426, 0.0
        %v3940 = vmax.f32 %v3810, 0.0
        %v3941 = vmax.f32 %v3812, 0.0
        %v3942 = vld [vmem:[%s7] sm:$0xff]
        %v3943 = vld [vmem:[%s7 + $0x8] sm:$0xff]
        %v3944 = vld [vmem:[%s7 + $0x10] sm:$0xff]
        %v3945 = vld [vmem:[%s7 + $0x18] sm:$0xff]
        %v3946 = vld [vmem:[%s7 + $0x20] sm:$0xff]
        %v3947 = vld [vmem:[%s7 + $0x28] sm:$0xff]
        %v3948 = vld [vmem:[%s7 + $0x30] sm:$0xff]
        %v3949 = vld [vmem:[%s7 + $0x38] sm:$0xff]
        %v3950 = vld [vmem:[%s7 + $0x40] sm:$0xff]
        %v3951 = vld [vmem:[%s7 + $0x48] sm:$0xff]
        %v3952 = vld [vmem:[%s7 + $0x50] sm:$0xff]
        %v3953 = vld [vmem:[%s7 + $0x58] sm:$0xff]
        %v3954 = vld [vmem:[%s7 + $0x60] sm:$0xff]
        %v3955 = vld [vmem:[%s7 + $0x68] sm:$0xff]
        %v3956 = vld [vmem:[%s7 + $0x70] sm:$0xff]
        %v3957 = vld [vmem:[%s7 + $0x78] sm:$0xff]
        %v3958 = vpack.c.bf16 %v3818, %v3814
        %v3959 = vpack.c.bf16 %v3819, %v3815
        %v3960 = vpack.c.bf16 %v3820, %v3816
        %v3961 = vpack.c.bf16 %v3821, %v3817
        %v3962 = vpack.c.bf16 %v3826, %v3822
        %v3963 = vpack.c.bf16 %v3827, %v3823
        %v3964 = vpack.c.bf16 %v3828, %v3824
        %v3965 = vpack.c.bf16 %v3829, %v3825
        %v3966 = vpack.c.bf16 %v3834, %v3830
        %v3967 = vpack.c.bf16 %v3835, %v3831
        %v3968 = vpack.c.bf16 %v3836, %v3832
        %v3969 = vpack.c.bf16 %v3837, %v3833
        %v3970 = vpack.c.bf16 %v3842, %v3838
        %v3971 = vpack.c.bf16 %v3843, %v3839
        %v3972 = vpack.c.bf16 %v3844, %v3840
        %v3973 = vpack.c.bf16 %v3845, %v3841
        %v3974 = vpack.c.bf16 %v3850, %v3846
        %v3975 = vpack.c.bf16 %v3851, %v3847
        %v3976 = vpack.c.bf16 %v3852, %v3848
        %v3977 = vpack.c.bf16 %v3853, %v3849
        %v3978 = vpack.c.bf16 %v3858, %v3854
        %v3979 = vpack.c.bf16 %v3859, %v3855
        %v3980 = vpack.c.bf16 %v3860, %v3856
        %v3981 = vpack.c.bf16 %v3861, %v3857
        %v3982 = vpack.c.bf16 %v3866, %v3862
        %v3983 = vpack.c.bf16 %v3867, %v3863
        %v3984 = vpack.c.bf16 %v3868, %v3864
        %v3985 = vpack.c.bf16 %v3869, %v3865
        %v3986 = vpack.c.bf16 %v3874, %v3870
        %v3987 = vpack.c.bf16 %v3875, %v3871
        %v3988 = vpack.c.bf16 %v3876, %v3872
        %v3989 = vpack.c.bf16 %v3877, %v3873
        %v3990 = vpack.c.bf16 %v3882, %v3878
        %v3991 = vpack.c.bf16 %v3883, %v3879
        %v3992 = vpack.c.bf16 %v3884, %v3880
        %v3993 = vpack.c.bf16 %v3885, %v3881
        %v3994 = vpack.c.bf16 %v3890, %v3886
        %v3995 = vpack.c.bf16 %v3891, %v3887
        %v3996 = vpack.c.bf16 %v3892, %v3888
        %v3997 = vpack.c.bf16 %v3893, %v3889
        %v3998 = vpack.c.bf16 %v3898, %v3894
        %v3999 = vpack.c.bf16 %v3899, %v3895
        %v4000 = vpack.c.bf16 %v3900, %v3896
        %v4001 = vpack.c.bf16 %v3901, %v3897
        %v4002 = vpack.c.bf16 %v3906, %v3902
        %v4003 = vpack.c.bf16 %v3907, %v3903
        %v4004 = vpack.c.bf16 %v3908, %v3904
        %v4005 = vpack.c.bf16 %v3909, %v3905
        %v4006 = vpack.c.bf16 %v3914, %v3910
        %v4007 = vpack.c.bf16 %v3915, %v3911
        %v4008 = vpack.c.bf16 %v3916, %v3912
        %v4009 = vpack.c.bf16 %v3917, %v3913
        %v4010 = vpack.c.bf16 %v3922, %v3918
        %v4011 = vpack.c.bf16 %v3923, %v3919
        %v4012 = vpack.c.bf16 %v3924, %v3920
        %v4013 = vpack.c.bf16 %v3925, %v3921
        %v4014 = vpack.c.bf16 %v3930, %v3926
        %v4015 = vpack.c.bf16 %v3931, %v3927
        %v4016 = vpack.c.bf16 %v3932, %v3928
        %v4017 = vpack.c.bf16 %v3933, %v3929
        %v4018 = vpack.c.bf16 %v3938, %v3934
        %v4019 = vpack.c.bf16 %v3939, %v3935
        %v4020 = vpack.c.bf16 %v3940, %v3936
        %v4021 = vpack.c.bf16 %v3941, %v3937
        %v4022 = vld [vmem:[%s8] sm:$0xff]
        %v4023 = vld [vmem:[%s8 + $0x8] sm:$0xff]
        %v4024 = vld [vmem:[%s8 + $0x10] sm:$0xff]
        %v4025 = vld [vmem:[%s8 + $0x18] sm:$0xff]
        %v4026 = vld [vmem:[%s8 + $0x20] sm:$0xff]
        %v4027 = vld [vmem:[%s8 + $0x28] sm:$0xff]
        %v4028 = vld [vmem:[%s8 + $0x30] sm:$0xff]
        %v4029 = vld [vmem:[%s8 + $0x38] sm:$0xff]
        %v4030 = vld [vmem:[%s8 + $0x40] sm:$0xff]
        %v4031 = vld [vmem:[%s8 + $0x48] sm:$0xff]
        %v4032 = vld [vmem:[%s8 + $0x50] sm:$0xff]
        %v4033 = vld [vmem:[%s8 + $0x58] sm:$0xff]
        %v4034 = vld [vmem:[%s8 + $0x60] sm:$0xff]
        %v4035 = vld [vmem:[%s8 + $0x68] sm:$0xff]
        %v4036 = vld [vmem:[%s8 + $0x70] sm:$0xff]
        %v4037 = vld [vmem:[%s8 + $0x78] sm:$0xff]
        %4039 = vset.pattern.permute.xlu0 0
        %4040 = vperm.xlu0 %4039, %v4022
        %v4041 = vpop.permute.xlu0 %4040
        %4044 = vset.pattern.permute.xlu0 0
        %4045 = vperm.xlu0 %4044, %v4023
        %v4046 = vpop.permute.xlu0 %4045
        %4049 = vset.pattern.permute.xlu0 0
        %4050 = vperm.xlu0 %4049, %v4024
        %v4051 = vpop.permute.xlu0 %4050
        %4054 = vset.pattern.permute.xlu0 0
        %4055 = vperm.xlu0 %4054, %v4025
        %v4056 = vpop.permute.xlu0 %4055
        %4059 = vset.pattern.permute.xlu0 0
        %4060 = vperm.xlu0 %4059, %v4026
        %v4061 = vpop.permute.xlu0 %4060
        %4064 = vset.pattern.permute.xlu0 0
        %4065 = vperm.xlu0 %4064, %v4027
        %v4066 = vpop.permute.xlu0 %4065
        %4069 = vset.pattern.permute.xlu0 0
        %4070 = vperm.xlu0 %4069, %v4028
        %v4071 = vpop.permute.xlu0 %4070
        %4074 = vset.pattern.permute.xlu0 0
        %4075 = vperm.xlu0 %4074, %v4029
        %v4076 = vpop.permute.xlu0 %4075
        %4079 = vset.pattern.permute.xlu0 0
        %4080 = vperm.xlu0 %4079, %v4030
        %v4081 = vpop.permute.xlu0 %4080
        %4084 = vset.pattern.permute.xlu0 0
        %4085 = vperm.xlu0 %4084, %v4031
        %v4086 = vpop.permute.xlu0 %4085
        %4089 = vset.pattern.permute.xlu0 0
        %4090 = vperm.xlu0 %4089, %v4032
        %v4091 = vpop.permute.xlu0 %4090
        %4094 = vset.pattern.permute.xlu0 0
        %4095 = vperm.xlu0 %4094, %v4033
        %v4096 = vpop.permute.xlu0 %4095
        %4099 = vset.pattern.permute.xlu0 0
        %4100 = vperm.xlu0 %4099, %v4034
        %v4101 = vpop.permute.xlu0 %4100
        %4104 = vset.pattern.permute.xlu0 0
        %4105 = vperm.xlu0 %4104, %v4035
        %v4106 = vpop.permute.xlu0 %4105
        %4109 = vset.pattern.permute.xlu0 0
        %4110 = vperm.xlu0 %4109, %v4036
        %v4111 = vpop.permute.xlu0 %4110
        %4114 = vset.pattern.permute.xlu0 0
        %4115 = vperm.xlu0 %4114, %v4037
        %v4116 = vpop.permute.xlu0 %4115
        %v4134 = vunpack.c.l.b16 %v3942
        %v4135 = vunpack.c.h.b16 %v3942
        %v4136 = vunpack.c.l.b16 %v3943
        %v4137 = vunpack.c.h.b16 %v3943
        %v4138 = vunpack.c.l.b16 %v3944
        %v4139 = vunpack.c.h.b16 %v3944
        %v4140 = vunpack.c.l.b16 %v3945
        %v4141 = vunpack.c.h.b16 %v3945
        %v4142 = vunpack.c.l.b16 %v3946
        %v4143 = vunpack.c.h.b16 %v3946
        %v4144 = vunpack.c.l.b16 %v3947
        %v4145 = vunpack.c.h.b16 %v3947
        %v4146 = vunpack.c.l.b16 %v3948
        %v4147 = vunpack.c.h.b16 %v3948
        %v4148 = vunpack.c.l.b16 %v3949
        %v4149 = vunpack.c.h.b16 %v3949
        %v4150 = vunpack.c.l.b16 %v3950
        %v4151 = vunpack.c.h.b16 %v3950
        %v4152 = vunpack.c.l.b16 %v3951
        %v4153 = vunpack.c.h.b16 %v3951
        %v4154 = vunpack.c.l.b16 %v3952
        %v4155 = vunpack.c.h.b16 %v3952
        %v4156 = vunpack.c.l.b16 %v3953
        %v4157 = vunpack.c.h.b16 %v3953
        %v4158 = vunpack.c.l.b16 %v3954
        %v4159 = vunpack.c.h.b16 %v3954
        %v4160 = vunpack.c.l.b16 %v3955
        %v4161 = vunpack.c.h.b16 %v3955
        %v4162 = vunpack.c.l.b16 %v3956
        %v4163 = vunpack.c.h.b16 %v3956
        %v4164 = vunpack.c.l.b16 %v3957
        %v4165 = vunpack.c.h.b16 %v3957
        %v4166 = vpack.c.b16 %v4136, %v4134
        %v4167 = vpack.c.b16 %v4137, %v4135
        %v4168 = vpack.c.b16 %v4140, %v4138
        %v4169 = vpack.c.b16 %v4141, %v4139
        %v4170 = vpack.c.b16 %v4144, %v4142
        %v4171 = vpack.c.b16 %v4145, %v4143
        %v4172 = vpack.c.b16 %v4148, %v4146
        %v4173 = vpack.c.b16 %v4149, %v4147
        %v4174 = vpack.c.b16 %v4152, %v4150
        %v4175 = vpack.c.b16 %v4153, %v4151
        %v4176 = vpack.c.b16 %v4156, %v4154
        %v4177 = vpack.c.b16 %v4157, %v4155
        %v4178 = vpack.c.b16 %v4160, %v4158
        %v4179 = vpack.c.b16 %v4161, %v4159
        %v4180 = vpack.c.b16 %v4164, %v4162
        %v4181 = vpack.c.b16 %v4165, %v4163
        %4198 = vmatprep.subr.bf16.mxu0 %v3959
        %4199 = vmatpush1.bf16.msra.mxu0 %v3958
        %4200 = vmatprep.subr.bf16.mxu0 %v3963
        %4201 = vmatpush1.bf16.msra.mxu0 %v3962
        %4202 = vmatprep.subr.bf16.mxu0 %v3967
        %4203 = vmatpush1.bf16.msra.mxu0 %v3966
        %4204 = vmatprep.subr.bf16.mxu0 %v3971
        %4205 = vmatpush1.bf16.msra.mxu0 %v3970
        %4206 = vmatprep.subr.bf16.mxu0 %v3975
        %4207 = vmatpush1.bf16.msra.mxu0 %v3974
        %4208 = vmatprep.subr.bf16.mxu0 %v3979
        %4209 = vmatpush1.bf16.msra.mxu0 %v3978
        %4210 = vmatprep.subr.bf16.mxu0 %v3983
        %4211 = vmatpush1.bf16.msra.mxu0 %v3982
        %4212 = vmatprep.subr.bf16.mxu0 %v3987
        %4213 = vmatpush1.bf16.msra.mxu0 %v3986
        %4214 = vmatprep.subr.bf16.mxu0 %v3991
        %4215 = vmatpush1.bf16.msra.mxu0 %v3990
        %4216 = vmatprep.subr.bf16.mxu0 %v3995
        %4217 = vmatpush1.bf16.msra.mxu0 %v3994
        %4218 = vmatprep.subr.bf16.mxu0 %v3999
        %4219 = vmatpush1.bf16.msra.mxu0 %v3998
        %4220 = vmatprep.subr.bf16.mxu0 %v4003
        %4221 = vmatpush1.bf16.msra.mxu0 %v4002
        %4222 = vmatprep.subr.bf16.mxu0 %v4007
        %4223 = vmatpush1.bf16.msra.mxu0 %v4006
        %4224 = vmatprep.subr.bf16.mxu0 %v4011
        %4225 = vmatpush1.bf16.msra.mxu0 %v4010
        %4226 = vmatprep.subr.bf16.mxu0 %v4015
        %4227 = vmatpush1.bf16.msra.mxu0 %v4014
        %4228 = vmatprep.subr.bf16.mxu0 %v4019
        %4229 = vmatpush1.bf16.msra.mxu0 %v4018
        %4230 = vmatprep.mubr.bf16.mxu0 %v4167
        %4231 = vmatmul.mubr.bf16.gmra.mrb[0].mxu0 %v4166
        %v4232 = vpop.f32.mrb[0].mxu0
        %v4233 = vadd.f32 %v4041, %v4232
        %v4234 = vpop.f32.mrb[0].mxu0
        %v4235 = vadd.f32 %v4041, %v4234
        %v4236 = vpop.f32.mrb[0].mxu0
        %v4237 = vadd.f32 %v4046, %v4236
        %v4238 = vpop.f32.mrb[0].mxu0
        %v4239 = vadd.f32 %v4046, %v4238
        %4240 = vmatprep.mubr.bf16.mxu0 %v4169
        %4241 = vmatmul.mubr.bf16.gmra.mrb[0].mxu0 %v4168
        %v4242 = vpop.f32.mrb[0].mxu0
        %v4243 = vadd.f32 %v4051, %v4242
        %v4244 = vpop.f32.mrb[0].mxu0
        %v4245 = vadd.f32 %v4051, %v4244
        %v4246 = vpop.f32.mrb[0].mxu0
        %v4247 = vadd.f32 %v4056, %v4246
        %v4248 = vpop.f32.mrb[0].mxu0
        %v4249 = vadd.f32 %v4056, %v4248
        %4250 = vmatprep.mubr.bf16.mxu0 %v4171
        %4251 = vmatmul.mubr.bf16.gmra.mrb[0].mxu0 %v4170
        %v4252 = vpop.f32.mrb[0].mxu0
        %v4253 = vadd.f32 %v4061, %v4252
        %v4254 = vpop.f32.mrb[0].mxu0
        %v4255 = vadd.f32 %v4061, %v4254
        %v4256 = vpop.f32.mrb[0].mxu0
        %v4257 = vadd.f32 %v4066, %v4256
        %v4258 = vpop.f32.mrb[0].mxu0
        %v4259 = vadd.f32 %v4066, %v4258
        %4260 = vmatprep.mubr.bf16.mxu0 %v4173
        %4261 = vmatmul.mubr.bf16.gmra.mrb[0].mxu0 %v4172
        %v4262 = vpop.f32.mrb[0].mxu0
        %v4263 = vadd.f32 %v4071, %v4262
        %v4264 = vpop.f32.mrb[0].mxu0
        %v4265 = vadd.f32 %v4071, %v4264
        %v4266 = vpop.f32.mrb[0].mxu0
        %v4267 = vadd.f32 %v4076, %v4266
        %v4268 = vpop.f32.mrb[0].mxu0
        %v4269 = vadd.f32 %v4076, %v4268
        %4270 = vmatprep.mubr.bf16.mxu0 %v4175
        %4271 = vmatmul.mubr.bf16.gmra.mrb[0].mxu0 %v4174
        %v4272 = vpop.f32.mrb[0].mxu0
        %v4273 = vadd.f32 %v4081, %v4272
        %v4274 = vpop.f32.mrb[0].mxu0
        %v4275 = vadd.f32 %v4081, %v4274
        %v4276 = vpop.f32.mrb[0].mxu0
        %v4277 = vadd.f32 %v4086, %v4276
        %v4278 = vpop.f32.mrb[0].mxu0
        %v4279 = vadd.f32 %v4086, %v4278
        %4280 = vmatprep.mubr.bf16.mxu0 %v4177
        %4281 = vmatmul.mubr.bf16.gmra.mrb[0].mxu0 %v4176
        %v4282 = vpop.f32.mrb[0].mxu0
        %v4283 = vadd.f32 %v4091, %v4282
        %v4284 = vpop.f32.mrb[0].mxu0
        %v4285 = vadd.f32 %v4091, %v4284
        %v4286 = vpop.f32.mrb[0].mxu0
        %v4287 = vadd.f32 %v4096, %v4286
        %v4288 = vpop.f32.mrb[0].mxu0
        %v4289 = vadd.f32 %v4096, %v4288
        %4290 = vmatprep.mubr.bf16.mxu0 %v4179
        %4291 = vmatmul.mubr.bf16.gmra.mrb[0].mxu0 %v4178
        %v4292 = vpop.f32.mrb[0].mxu0
        %v4293 = vadd.f32 %v4101, %v4292
        %v4294 = vpop.f32.mrb[0].mxu0
        %v4295 = vadd.f32 %v4101, %v4294
        %v4296 = vpop.f32.mrb[0].mxu0
        %v4297 = vadd.f32 %v4106, %v4296
        %v4298 = vpop.f32.mrb[0].mxu0
        %v4299 = vadd.f32 %v4106, %v4298
        %4300 = vmatprep.mubr.bf16.mxu0 %v4181
        %4301 = vmatmul.mubr.bf16.gmra.mrb[0].mxu0 %v4180
        %v4302 = vpop.f32.mrb[0].mxu0
        %v4303 = vadd.f32 %v4111, %v4302
        %v4304 = vpop.f32.mrb[0].mxu0
        %v4305 = vadd.f32 %v4111, %v4304
        %v4306 = vpop.f32.mrb[0].mxu0
        %v4307 = vadd.f32 %v4116, %v4306
        %v4308 = vpop.f32.mrb[0].mxu0
        %v4309 = vadd.f32 %v4116, %v4308
        %4310 = vdwg.mxu0
        %4311 = vmatprep.subr.bf16.mxu0 %v3961
        %4312 = vmatpush1.bf16.msra.mxu0 %v3960
        %4313 = vmatprep.subr.bf16.mxu0 %v3965
        %4314 = vmatpush1.bf16.msra.mxu0 %v3964
        %4315 = vmatprep.subr.bf16.mxu0 %v3969
        %4316 = vmatpush1.bf16.msra.mxu0 %v3968
        %4317 = vmatprep.subr.bf16.mxu0 %v3973
        %4318 = vmatpush1.bf16.msra.mxu0 %v3972
        %4319 = vmatprep.subr.bf16.mxu0 %v3977
        %4320 = vmatpush1.bf16.msra.mxu0 %v3976
        %4321 = vmatprep.subr.bf16.mxu0 %v3981
        %4322 = vmatpush1.bf16.msra.mxu0 %v3980
        %4323 = vmatprep.subr.bf16.mxu0 %v3985
        %4324 = vmatpush1.bf16.msra.mxu0 %v3984
        %4325 = vmatprep.subr.bf16.mxu0 %v3989
        %4326 = vmatpush1.bf16.msra.mxu0 %v3988
        %4327 = vmatprep.subr.bf16.mxu0 %v3993
        %4328 = vmatpush1.bf16.msra.mxu0 %v3992
        %4329 = vmatprep.subr.bf16.mxu0 %v3997
        %4330 = vmatpush1.bf16.msra.mxu0 %v3996
        %4331 = vmatprep.subr.bf16.mxu0 %v4001
        %4332 = vmatpush1.bf16.msra.mxu0 %v4000
        %4333 = vmatprep.subr.bf16.mxu0 %v4005
        %4334 = vmatpush1.bf16.msra.mxu0 %v4004
        %4335 = vmatprep.subr.bf16.mxu0 %v4009
        %4336 = vmatpush1.bf16.msra.mxu0 %v4008
        %4337 = vmatprep.subr.bf16.mxu0 %v4013
        %4338 = vmatpush1.bf16.msra.mxu0 %v4012
        %4339 = vmatprep.subr.bf16.mxu0 %v4017
        %4340 = vmatpush1.bf16.msra.mxu0 %v4016
        %4341 = vmatprep.subr.bf16.mxu0 %v4021
        %4342 = vmatpush1.bf16.msra.mxu0 %v4020
        %4343 = vmatprep.mubr.bf16.mxu0 %v4167
        %4344 = vmatmul.mubr.bf16.gmra.mrb[0].mxu0 %v4166
        %v4345 = vpop.f32.mrb[0].mxu0
        %v4346 = vadd.f32 %v4041, %v4345
        %v4347 = vpop.f32.mrb[0].mxu0
        %v4348 = vadd.f32 %v4041, %v4347
        %v4349 = vpop.f32.mrb[0].mxu0
        %v4350 = vadd.f32 %v4046, %v4349
        %v4351 = vpop.f32.mrb[0].mxu0
        %v4352 = vadd.f32 %v4046, %v4351
        %4353 = vmatprep.mubr.bf16.mxu0 %v4169
        %4354 = vmatmul.mubr.bf16.gmra.mrb[0].mxu0 %v4168
        %v4355 = vpop.f32.mrb[0].mxu0
        %v4356 = vadd.f32 %v4051, %v4355
        %v4357 = vpop.f32.mrb[0].mxu0
        %v4358 = vadd.f32 %v4051, %v4357
        %v4359 = vpop.f32.mrb[0].mxu0
        %v4360 = vadd.f32 %v4056, %v4359
        %v4361 = vpop.f32.mrb[0].mxu0
        %v4362 = vadd.f32 %v4056, %v4361
        %4363 = vmatprep.mubr.bf16.mxu0 %v4171
        %4364 = vmatmul.mubr.bf16.gmra.mrb[0].mxu0 %v4170
        %v4365 = vpop.f32.mrb[0].mxu0
        %v4366 = vadd.f32 %v4061, %v4365
        %v4367 = vpop.f32.mrb[0].mxu0
        %v4368 = vadd.f32 %v4061, %v4367
        %v4369 = vpop.f32.mrb[0].mxu0
        %v4370 = vadd.f32 %v4066, %v4369
        %v4371 = vpop.f32.mrb[0].mxu0
        %v4372 = vadd.f32 %v4066, %v4371
        %4373 = vmatprep.mubr.bf16.mxu0 %v4173
        %4374 = vmatmul.mubr.bf16.gmra.mrb[0].mxu0 %v4172
        %v4375 = vpop.f32.mrb[0].mxu0
        %v4376 = vadd.f32 %v4071, %v4375
        %v4377 = vpop.f32.mrb[0].mxu0
        %v4378 = vadd.f32 %v4071, %v4377
        %v4379 = vpop.f32.mrb[0].mxu0
        %v4380 = vadd.f32 %v4076, %v4379
        %v4381 = vpop.f32.mrb[0].mxu0
        %v4382 = vadd.f32 %v4076, %v4381
        %4383 = vmatprep.mubr.bf16.mxu0 %v4175
        %4384 = vmatmul.mubr.bf16.gmra.mrb[0].mxu0 %v4174
        %v4385 = vpop.f32.mrb[0].mxu0
        %v4386 = vadd.f32 %v4081, %v4385
        %v4387 = vpop.f32.mrb[0].mxu0
        %v4388 = vadd.f32 %v4081, %v4387
        %v4389 = vpop.f32.mrb[0].mxu0
        %v4390 = vadd.f32 %v4086, %v4389
        %v4391 = vpop.f32.mrb[0].mxu0
        %v4392 = vadd.f32 %v4086, %v4391
        %4393 = vmatprep.mubr.bf16.mxu0 %v4177
        %4394 = vmatmul.mubr.bf16.gmra.mrb[0].mxu0 %v4176
        %v4395 = vpop.f32.mrb[0].mxu0
        %v4396 = vadd.f32 %v4091, %v4395
        %v4397 = vpop.f32.mrb[0].mxu0
        %v4398 = vadd.f32 %v4091, %v4397
        %v4399 = vpop.f32.mrb[0].mxu0
        %v4400 = vadd.f32 %v4096, %v4399
        %v4401 = vpop.f32.mrb[0].mxu0
        %v4402 = vadd.f32 %v4096, %v4401
        %4403 = vmatprep.mubr.bf16.mxu0 %v4179
        %4404 = vmatmul.mubr.bf16.gmra.mrb[0].mxu0 %v4178
        %v4405 = vpop.f32.mrb[0].mxu0
        %v4406 = vadd.f32 %v4101, %v4405
        %v4407 = vpop.f32.mrb[0].mxu0
        %v4408 = vadd.f32 %v4101, %v4407
        %v4409 = vpop.f32.mrb[0].mxu0
        %v4410 = vadd.f32 %v4106, %v4409
        %v4411 = vpop.f32.mrb[0].mxu0
        %v4412 = vadd.f32 %v4106, %v4411
        %4413 = vmatprep.mubr.bf16.mxu0 %v4181
        %4414 = vmatmul.mubr.bf16.gmra.mrb[0].mxu0 %v4180
        %v4415 = vpop.f32.mrb[0].mxu0
        %v4416 = vadd.f32 %v4111, %v4415
        %v4417 = vpop.f32.mrb[0].mxu0
        %v4418 = vadd.f32 %v4111, %v4417
        %v4419 = vpop.f32.mrb[0].mxu0
        %v4420 = vadd.f32 %v4116, %v4419
        %v4421 = vpop.f32.mrb[0].mxu0
        %v4422 = vadd.f32 %v4116, %v4421
        %4423 = vdwg.mxu0
        %v4424 = vmax.f32 %v4233, 0.0
        %v4425 = vmax.f32 %v4235, 0.0
        %v4426 = vmax.f32 %v4346, 0.0
        %v4427 = vmax.f32 %v4348, 0.0
        %v4428 = vmax.f32 %v4237, 0.0
        %v4429 = vmax.f32 %v4239, 0.0
        %v4430 = vmax.f32 %v4350, 0.0
        %v4431 = vmax.f32 %v4352, 0.0
        %v4432 = vmax.f32 %v4243, 0.0
        %v4433 = vmax.f32 %v4245, 0.0
        %v4434 = vmax.f32 %v4356, 0.0
        %v4435 = vmax.f32 %v4358, 0.0
        %v4436 = vmax.f32 %v4247, 0.0
        %v4437 = vmax.f32 %v4249, 0.0
        %v4438 = vmax.f32 %v4360, 0.0
        %v4439 = vmax.f32 %v4362, 0.0
        %v4440 = vmax.f32 %v4253, 0.0
        %v4441 = vmax.f32 %v4255, 0.0
        %v4442 = vmax.f32 %v4366, 0.0
        %v4443 = vmax.f32 %v4368, 0.0
        %v4444 = vmax.f32 %v4257, 0.0
        %v4445 = vmax.f32 %v4259, 0.0
        %v4446 = vmax.f32 %v4370, 0.0
        %v4447 = vmax.f32 %v4372, 0.0
        %v4448 = vmax.f32 %v4263, 0.0
        %v4449 = vmax.f32 %v4265, 0.0
        %v4450 = vmax.f32 %v4376, 0.0
        %v4451 = vmax.f32 %v4378, 0.0
        %v4452 = vmax.f32 %v4267, 0.0
        %v4453 = vmax.f32 %v4269, 0.0
        %v4454 = vmax.f32 %v4380, 0.0
        %v4455 = vmax.f32 %v4382, 0.0
        %v4456 = vmax.f32 %v4273, 0.0
        %v4457 = vmax.f32 %v4275, 0.0
        %v4458 = vmax.f32 %v4386, 0.0
        %v4459 = vmax.f32 %v4388, 0.0
        %v4460 = vmax.f32 %v4277, 0.0
        %v4461 = vmax.f32 %v4279, 0.0
        %v4462 = vmax.f32 %v4390, 0.0
        %v4463 = vmax.f32 %v4392, 0.0
        %v4464 = vmax.f32 %v4283, 0.0
        %v4465 = vmax.f32 %v4285, 0.0
        %v4466 = vmax.f32 %v4396, 0.0
        %v4467 = vmax.f32 %v4398, 0.0
        %v4468 = vmax.f32 %v4287, 0.0
        %v4469 = vmax.f32 %v4289, 0.0
        %v4470 = vmax.f32 %v4400, 0.0
        %v4471 = vmax.f32 %v4402, 0.0
        %v4472 = vmax.f32 %v4293, 0.0
        %v4473 = vmax.f32 %v4295, 0.0
        %v4474 = vmax.f32 %v4406, 0.0
        %v4475 = vmax.f32 %v4408, 0.0
        %v4476 = vmax.f32 %v4297, 0.0
        %v4477 = vmax.f32 %v4299, 0.0
        %v4478 = vmax.f32 %v4410, 0.0
        %v4479 = vmax.f32 %v4412, 0.0
        %v4480 = vmax.f32 %v4303, 0.0
        %v4481 = vmax.f32 %v4305, 0.0
        %v4482 = vmax.f32 %v4416, 0.0
        %v4483 = vmax.f32 %v4418, 0.0
        %v4484 = vmax.f32 %v4307, 0.0
        %v4485 = vmax.f32 %v4309, 0.0
        %v4486 = vmax.f32 %v4420, 0.0
        %v4487 = vmax.f32 %v4422, 0.0
        %v4488 = vld [vmem:[%s9] sm:$0xf]
        %v4489 = vld [vmem:[%s9 + $0x4] sm:$0xf]
        %v4490 = vld [vmem:[%s9 + $0x8] sm:$0xf]
        %v4491 = vld [vmem:[%s9 + $0xc] sm:$0xf]
        %v4492 = vld [vmem:[%s9 + $0x10] sm:$0xf]
        %v4493 = vld [vmem:[%s9 + $0x14] sm:$0xf]
        %v4494 = vld [vmem:[%s9 + $0x18] sm:$0xf]
        %v4495 = vld [vmem:[%s9 + $0x1c] sm:$0xf]
        %v4496 = vpack.c.bf16 %v4428, %v4424
        %v4497 = vpack.c.bf16 %v4429, %v4425
        %v4498 = vpack.c.bf16 %v4430, %v4426
        %v4499 = vpack.c.bf16 %v4431, %v4427
        %v4500 = vpack.c.bf16 %v4436, %v4432
        %v4501 = vpack.c.bf16 %v4437, %v4433
        %v4502 = vpack.c.bf16 %v4438, %v4434
        %v4503 = vpack.c.bf16 %v4439, %v4435
        %v4504 = vpack.c.bf16 %v4444, %v4440
        %v4505 = vpack.c.bf16 %v4445, %v4441
        %v4506 = vpack.c.bf16 %v4446, %v4442
        %v4507 = vpack.c.bf16 %v4447, %v4443
        %v4508 = vpack.c.bf16 %v4452, %v4448
        %v4509 = vpack.c.bf16 %v4453, %v4449
        %v4510 = vpack.c.bf16 %v4454, %v4450
        %v4511 = vpack.c.bf16 %v4455, %v4451
        %v4512 = vpack.c.bf16 %v4460, %v4456
        %v4513 = vpack.c.bf16 %v4461, %v4457
        %v4514 = vpack.c.bf16 %v4462, %v4458
        %v4515 = vpack.c.bf16 %v4463, %v4459
        %v4516 = vpack.c.bf16 %v4468, %v4464
        %v4517 = vpack.c.bf16 %v4469, %v4465
        %v4518 = vpack.c.bf16 %v4470, %v4466
        %v4519 = vpack.c.bf16 %v4471, %v4467
        %v4520 = vpack.c.bf16 %v4476, %v4472
        %v4521 = vpack.c.bf16 %v4477, %v4473
        %v4522 = vpack.c.bf16 %v4478, %v4474
        %v4523 = vpack.c.bf16 %v4479, %v4475
        %v4524 = vpack.c.bf16 %v4484, %v4480
        %v4525 = vpack.c.bf16 %v4485, %v4481
        %v4526 = vpack.c.bf16 %v4486, %v4482
        %v4527 = vpack.c.bf16 %v4487, %v4483
        %v4528 = vld [vmem:[%s10] sm:$0xff]
        %v4529 = vld [vmem:[%s10 + $0x8] sm:$0xff]
        %v4530 = vld [vmem:[%s10 + $0x10] sm:$0xff]
        %v4531 = vld [vmem:[%s10 + $0x18] sm:$0xff]
        %v4532 = vld [vmem:[%s10 + $0x20] sm:$0xff]
        %v4533 = vld [vmem:[%s10 + $0x28] sm:$0xff]
        %v4534 = vld [vmem:[%s10 + $0x30] sm:$0xff]
        %v4535 = vld [vmem:[%s10 + $0x38] sm:$0xff]
        %4537 = vset.pattern.permute.xlu0 0
        %4538 = vperm.xlu0 %4537, %v4528
        %v4539 = vpop.permute.xlu0 %4538
        %4542 = vset.pattern.permute.xlu0 0
        %4543 = vperm.xlu0 %4542, %v4529
        %v4544 = vpop.permute.xlu0 %4543
        %4547 = vset.pattern.permute.xlu0 0
        %4548 = vperm.xlu0 %4547, %v4530
        %v4549 = vpop.permute.xlu0 %4548
        %4552 = vset.pattern.permute.xlu0 0
        %4553 = vperm.xlu0 %4552, %v4531
        %v4554 = vpop.permute.xlu0 %4553
        %4557 = vset.pattern.permute.xlu0 0
        %4558 = vperm.xlu0 %4557, %v4532
        %v4559 = vpop.permute.xlu0 %4558
        %4562 = vset.pattern.permute.xlu0 0
        %4563 = vperm.xlu0 %4562, %v4533
        %v4564 = vpop.permute.xlu0 %4563
        %4567 = vset.pattern.permute.xlu0 0
        %4568 = vperm.xlu0 %4567, %v4534
        %v4569 = vpop.permute.xlu0 %4568
        %4572 = vset.pattern.permute.xlu0 0
        %4573 = vperm.xlu0 %4572, %v4535
        %v4574 = vpop.permute.xlu0 %4573
        %v4584 = vunpack.c.l.b16 %v4488
        %v4585 = vunpack.c.l.b16 %v4489
        %v4586 = vunpack.c.l.b16 %v4490
        %v4587 = vunpack.c.l.b16 %v4491
        %v4588 = vunpack.c.l.b16 %v4492
        %v4589 = vunpack.c.l.b16 %v4493
        %v4590 = vunpack.c.l.b16 %v4494
        %v4591 = vunpack.c.l.b16 %v4495
        %v4592 = vpack.c.b16 %v4585, %v4584
        %v4593 = vpack.c.b16 %v4587, %v4586
        %v4594 = vpack.c.b16 %v4589, %v4588
        %v4595 = vpack.c.b16 %v4591, %v4590
        %4600 = vmatprep.subr.bf16.mxu0 %v4497
        %4601 = vmatpush1.bf16.msra.mxu0 %v4496
        %4602 = vmatprep.subr.bf16.mxu0 %v4501
        %4603 = vmatpush1.bf16.msra.mxu0 %v4500
        %4604 = vmatprep.subr.bf16.mxu0 %v4505
        %4605 = vmatpush1.bf16.msra.mxu0 %v4504
        %4606 = vmatprep.subr.bf16.mxu0 %v4509
        %4607 = vmatpush1.bf16.msra.mxu0 %v4508
        %4608 = vmatprep.subr.bf16.mxu0 %v4513
        %4609 = vmatpush1.bf16.msra.mxu0 %v4512
        %4610 = vmatprep.subr.bf16.mxu0 %v4517
        %4611 = vmatpush1.bf16.msra.mxu0 %v4516
        %4612 = vmatprep.subr.bf16.mxu0 %v4521
        %4613 = vmatpush1.bf16.msra.mxu0 %v4520
        %4614 = vmatprep.subr.bf16.mxu0 %v4525
        %4615 = vmatpush1.bf16.msra.mxu0 %v4524
        %4616 = vmatprep.subr.bf16.mxu0 0
        %4617 = vmatpush1.bf16.msra.mxu0 0
        %4618 = vmatprep.subr.bf16.mxu0 0
        %4619 = vmatpush1.bf16.msra.mxu0 0
        %4620 = vmatprep.subr.bf16.mxu0 0
        %4621 = vmatpush1.bf16.msra.mxu0 0
        %4622 = vmatprep.subr.bf16.mxu0 0
        %4623 = vmatpush1.bf16.msra.mxu0 0
        %4624 = vmatprep.subr.bf16.mxu0 0
        %4625 = vmatpush1.bf16.msra.mxu0 0
        %4626 = vmatprep.subr.bf16.mxu0 0
        %4627 = vmatpush1.bf16.msra.mxu0 0
        %4628 = vmatprep.subr.bf16.mxu0 0
        %4629 = vmatpush1.bf16.msra.mxu0 0
        %4630 = vmatprep.subr.bf16.mxu0 0
        %4631 = vmatpush1.bf16.msra.mxu0 0
        %4632 = vmatprep.mubr.bf16.mxu0 0
        %4633 = vmatmul.mubr.bf16.gmra.mrb[0].mxu0 %v4592
        %v4634 = vpop.f32.mrb[0].mxu0
        %v4635 = vadd.f32 %v4539, %v4634
        %v4636 = vpop.f32.mrb[0].mxu0
        %v4637 = vadd.f32 %v4539, %v4636
        %v4638 = vpop.f32.mrb[0].mxu0
        %v4639 = vadd.f32 %v4544, %v4638
        %v4640 = vpop.f32.mrb[0].mxu0
        %v4641 = vadd.f32 %v4544, %v4640
        %4642 = vmatprep.mubr.bf16.mxu0 0
        %4643 = vmatmul.mubr.bf16.gmra.mrb[0].mxu0 %v4593
        %v4644 = vpop.f32.mrb[0].mxu0
        %v4645 = vadd.f32 %v4549, %v4644
        %v4646 = vpop.f32.mrb[0].mxu0
        %v4647 = vadd.f32 %v4549, %v4646
        %v4648 = vpop.f32.mrb[0].mxu0
        %v4649 = vadd.f32 %v4554, %v4648
        %v4650 = vpop.f32.mrb[0].mxu0
        %v4651 = vadd.f32 %v4554, %v4650
        %4652 = vmatprep.mubr.bf16.mxu0 0
        %4653 = vmatmul.mubr.bf16.gmra.mrb[0].mxu0 %v4594
        %v4654 = vpop.f32.mrb[0].mxu0
        %v4655 = vadd.f32 %v4559, %v4654
        %v4656 = vpop.f32.mrb[0].mxu0
        %v4657 = vadd.f32 %v4559, %v4656
        %v4658 = vpop.f32.mrb[0].mxu0
        %v4659 = vadd.f32 %v4564, %v4658
        %v4660 = vpop.f32.mrb[0].mxu0
        %v4661 = vadd.f32 %v4564, %v4660
        %4662 = vmatprep.mubr.bf16.mxu0 0
        %4663 = vmatmul.mubr.bf16.gmra.mrb[0].mxu0 %v4595
        %v4664 = vpop.f32.mrb[0].mxu0
        %v4665 = vadd.f32 %v4569, %v4664
        %v4666 = vpop.f32.mrb[0].mxu0
        %v4667 = vadd.f32 %v4569, %v4666
        %v4668 = vpop.f32.mrb[0].mxu0
        %v4669 = vadd.f32 %v4574, %v4668
        %v4670 = vpop.f32.mrb[0].mxu0
        %v4671 = vadd.f32 %v4574, %v4670
        %4672 = vdwg.mxu0
        %4673 = vmatprep.subr.bf16.mxu0 %v4499
        %4674 = vmatpush1.bf16.msra.mxu0 %v4498
        %4675 = vmatprep.subr.bf16.mxu0 %v4503
        %4676 = vmatpush1.bf16.msra.mxu0 %v4502
        %4677 = vmatprep.subr.bf16.mxu0 %v4507
        %4678 = vmatpush1.bf16.msra.mxu0 %v4506
        %4679 = vmatprep.subr.bf16.mxu0 %v4511
        %4680 = vmatpush1.bf16.msra.mxu0 %v4510
        %4681 = vmatprep.subr.bf16.mxu0 %v4515
        %4682 = vmatpush1.bf16.msra.mxu0 %v4514
        %4683 = vmatprep.subr.bf16.mxu0 %v4519
        %4684 = vmatpush1.bf16.msra.mxu0 %v4518
        %4685 = vmatprep.subr.bf16.mxu0 %v4523
        %4686 = vmatpush1.bf16.msra.mxu0 %v4522
        %4687 = vmatprep.subr.bf16.mxu0 %v4527
        %4688 = vmatpush1.bf16.msra.mxu0 %v4526
        %4689 = vmatprep.subr.bf16.mxu0 0
        %4690 = vmatpush1.bf16.msra.mxu0 0
        %4691 = vmatprep.subr.bf16.mxu0 0
        %4692 = vmatpush1.bf16.msra.mxu0 0
        %4693 = vmatprep.subr.bf16.mxu0 0
        %4694 = vmatpush1.bf16.msra.mxu0 0
        %4695 = vmatprep.subr.bf16.mxu0 0
        %4696 = vmatpush1.bf16.msra.mxu0 0
        %4697 = vmatprep.subr.bf16.mxu0 0
        %4698 = vmatpush1.bf16.msra.mxu0 0
        %4699 = vmatprep.subr.bf16.mxu0 0
        %4700 = vmatpush1.bf16.msra.mxu0 0
        %4701 = vmatprep.subr.bf16.mxu0 0
        %4702 = vmatpush1.bf16.msra.mxu0 0
        %4703 = vmatprep.subr.bf16.mxu0 0
        %4704 = vmatpush1.bf16.msra.mxu0 0
        %4705 = vmatprep.mubr.bf16.mxu0 0
        %4706 = vmatmul.mubr.bf16.gmra.mrb[0].mxu0 %v4592
        %v4707 = vpop.f32.mrb[0].mxu0
        %v4708 = vadd.f32 %v4539, %v4707
        %v4709 = vpop.f32.mrb[0].mxu0
        %v4710 = vadd.f32 %v4539, %v4709
        %v4711 = vpop.f32.mrb[0].mxu0
        %v4712 = vadd.f32 %v4544, %v4711
        %v4713 = vpop.f32.mrb[0].mxu0
        %v4714 = vadd.f32 %v4544, %v4713
        %4715 = vmatprep.mubr.bf16.mxu0 0
        %4716 = vmatmul.mubr.bf16.gmra.mrb[0].mxu0 %v4593
        %v4717 = vpop.f32.mrb[0].mxu0
        %v4718 = vadd.f32 %v4549, %v4717
        %v4719 = vpop.f32.mrb[0].mxu0
        %v4720 = vadd.f32 %v4549, %v4719
        %v4721 = vpop.f32.mrb[0].mxu0
        %v4722 = vadd.f32 %v4554, %v4721
        %v4723 = vpop.f32.mrb[0].mxu0
        %v4724 = vadd.f32 %v4554, %v4723
        %4725 = vmatprep.mubr.bf16.mxu0 0
        %4726 = vmatmul.mubr.bf16.gmra.mrb[0].mxu0 %v4594
        %v4727 = vpop.f32.mrb[0].mxu0
        %v4728 = vadd.f32 %v4559, %v4727
        %v4729 = vpop.f32.mrb[0].mxu0
        %v4730 = vadd.f32 %v4559, %v4729
        %v4731 = vpop.f32.mrb[0].mxu0
        %v4732 = vadd.f32 %v4564, %v4731
        %v4733 = vpop.f32.mrb[0].mxu0
        %v4734 = vadd.f32 %v4564, %v4733
        %4735 = vmatprep.mubr.bf16.mxu0 0
        %4736 = vmatmul.mubr.bf16.gmra.mrb[0].mxu0 %v4595
        %v4737 = vpop.f32.mrb[0].mxu0
        %v4738 = vadd.f32 %v4569, %v4737
        %v4739 = vpop.f32.mrb[0].mxu0
        %v4740 = vadd.f32 %v4569, %v4739
        %v4741 = vpop.f32.mrb[0].mxu0
        %v4742 = vadd.f32 %v4574, %v4741
        %v4743 = vpop.f32.mrb[0].mxu0
        %v4744 = vadd.f32 %v4574, %v4743
        %4745 = vdwg.mxu0
        %v4746 = vmax.f32 %v4635, 0.0
        %v4747 = vmax.f32 %v4637, 0.0
        %v4748 = vmax.f32 %v4708, 0.0
        %v4749 = vmax.f32 %v4710, 0.0
        %v4750 = vmax.f32 %v4639, 0.0
        %v4751 = vmax.f32 %v4641, 0.0
        %v4752 = vmax.f32 %v4712, 0.0
        %v4753 = vmax.f32 %v4714, 0.0
        %v4754 = vmax.f32 %v4645, 0.0
        %v4755 = vmax.f32 %v4647, 0.0
        %v4756 = vmax.f32 %v4718, 0.0
        %v4757 = vmax.f32 %v4720, 0.0
        %v4758 = vmax.f32 %v4649, 0.0
        %v4759 = vmax.f32 %v4651, 0.0
        %v4760 = vmax.f32 %v4722, 0.0
        %v4761 = vmax.f32 %v4724, 0.0
        %v4762 = vmax.f32 %v4655, 0.0
        %v4763 = vmax.f32 %v4657, 0.0
        %v4764 = vmax.f32 %v4728, 0.0
        %v4765 = vmax.f32 %v4730, 0.0
        %v4766 = vmax.f32 %v4659, 0.0
        %v4767 = vmax.f32 %v4661, 0.0
        %v4768 = vmax.f32 %v4732, 0.0
        %v4769 = vmax.f32 %v4734, 0.0
        %v4770 = vmax.f32 %v4665, 0.0
        %v4771 = vmax.f32 %v4667, 0.0
        %v4772 = vmax.f32 %v4738, 0.0
        %v4773 = vmax.f32 %v4740, 0.0
        %v4774 = vmax.f32 %v4669, 0.0
        %v4775 = vmax.f32 %v4671, 0.0
        %v4776 = vmax.f32 %v4742, 0.0
        %v4777 = vmax.f32 %v4744, 0.0
        %v4778 = vld [vmem:[%s11] sm:$0xff]
        %v4779 = vld [vmem:[%s11 + $0x8] sm:$0xff]
        %v4780 = vld [vmem:[%s11 + $0x10] sm:$0xff]
        %v4781 = vld [vmem:[%s11 + $0x18] sm:$0xff]
        %v4782 = vld [vmem:[%s11 + $0x20] sm:$0xff]
        %v4783 = vld [vmem:[%s11 + $0x28] sm:$0xff]
        %v4784 = vld [vmem:[%s11 + $0x30] sm:$0xff]
        %v4785 = vld [vmem:[%s11 + $0x38] sm:$0xff]
        %4787 = vset.pattern.permute.xlu0 0
        %4788 = vperm.xlu0 %4787, %v4778
        %v4789 = vpop.permute.xlu0 %4788
        %4792 = vset.pattern.permute.xlu0 0
        %4793 = vperm.xlu0 %4792, %v4779
        %v4794 = vpop.permute.xlu0 %4793
        %4797 = vset.pattern.permute.xlu0 0
        %4798 = vperm.xlu0 %4797, %v4780
        %v4799 = vpop.permute.xlu0 %4798
        %4802 = vset.pattern.permute.xlu0 0
        %4803 = vperm.xlu0 %4802, %v4781
        %v4804 = vpop.permute.xlu0 %4803
        %4807 = vset.pattern.permute.xlu0 0
        %4808 = vperm.xlu0 %4807, %v4782
        %v4809 = vpop.permute.xlu0 %4808
        %4812 = vset.pattern.permute.xlu0 0
        %4813 = vperm.xlu0 %4812, %v4783
        %v4814 = vpop.permute.xlu0 %4813
        %4817 = vset.pattern.permute.xlu0 0
        %4818 = vperm.xlu0 %4817, %v4784
        %v4819 = vpop.permute.xlu0 %4818
        %4822 = vset.pattern.permute.xlu0 0
        %4823 = vperm.xlu0 %4822, %v4785
        %v4824 = vpop.permute.xlu0 %4823
        %v4826 = vmul.f32 %v4789, %v4746
        %v4827 = vmul.f32 %v4789, %v4747
        %v4828 = vmul.f32 %v4789, %v4748
        %v4829 = vmul.f32 %v4789, %v4749
        %v4830 = vmul.f32 %v4794, %v4750
        %v4831 = vmul.f32 %v4794, %v4751
        %v4832 = vmul.f32 %v4794, %v4752
        %v4833 = vmul.f32 %v4794, %v4753
        %v4834 = vmul.f32 %v4799, %v4754
        %v4835 = vmul.f32 %v4799, %v4755
        %v4836 = vmul.f32 %v4799, %v4756
        %v4837 = vmul.f32 %v4799, %v4757
        %v4838 = vmul.f32 %v4804, %v4758
        %v4839 = vmul.f32 %v4804, %v4759
        %v4840 = vmul.f32 %v4804, %v4760
        %v4841 = vmul.f32 %v4804, %v4761
        %v4842 = vmul.f32 %v4809, %v4762
        %v4843 = vmul.f32 %v4809, %v4763
        %v4844 = vmul.f32 %v4809, %v4764
        %v4845 = vmul.f32 %v4809, %v4765
        %v4846 = vmul.f32 %v4814, %v4766
        %v4847 = vmul.f32 %v4814, %v4767
        %v4848 = vmul.f32 %v4814, %v4768
        %v4849 = vmul.f32 %v4814, %v4769
        %v4850 = vmul.f32 %v4819, %v4770
        %v4851 = vmul.f32 %v4819, %v4771
        %v4852 = vmul.f32 %v4819, %v4772
        %v4853 = vmul.f32 %v4819, %v4773
        %v4854 = vmul.f32 %v4824, %v4774
        %v4855 = vmul.f32 %v4824, %v4775
        %v4856 = vmul.f32 %v4824, %v4776
        %v4857 = vmul.f32 %v4824, %v4777
        %v4858 = vadd.f32 %v4826, %v4830
        %v4859 = vadd.f32 %v4858, %v4834
        %v4860 = vadd.f32 %v4859, %v4838
        %v4861 = vadd.f32 %v4860, %v4842
        %v4862 = vadd.f32 %v4861, %v4846
        %v4863 = vadd.f32 %v4862, %v4850
        %v4864 = vadd.f32 %v4863, %v4854
        %v4865 = vrot.slane %v4864, 4
        %v4866 = vadd.f32 %v4864, %v4865
        %v4867 = vrot.slane %v4866, 2
        %v4868 = vadd.f32 %v4866, %v4867
        %v4869 = vrot.slane %v4868, 1
        %v4870 = vadd.f32 %v4868, %v4869
        %v4871 = vadd.f32 %v4827, %v4831
        %v4872 = vadd.f32 %v4871, %v4835
        %v4873 = vadd.f32 %v4872, %v4839
        %v4874 = vadd.f32 %v4873, %v4843
        %v4875 = vadd.f32 %v4874, %v4847
        %v4876 = vadd.f32 %v4875, %v4851
        %v4877 = vadd.f32 %v4876, %v4855
        %v4878 = vrot.slane %v4877, 4
        %v4879 = vadd.f32 %v4877, %v4878
        %v4880 = vrot.slane %v4879, 2
        %v4881 = vadd.f32 %v4879, %v4880
        %v4882 = vrot.slane %v4881, 1
        %v4883 = vadd.f32 %v4881, %v4882
        %v4884 = vadd.f32 %v4828, %v4832
        %v4885 = vadd.f32 %v4884, %v4836
        %v4886 = vadd.f32 %v4885, %v4840
        %v4887 = vadd.f32 %v4886, %v4844
        %v4888 = vadd.f32 %v4887, %v4848
        %v4889 = vadd.f32 %v4888, %v4852
        %v4890 = vadd.f32 %v4889, %v4856
        %v4891 = vrot.slane %v4890, 4
        %v4892 = vadd.f32 %v4890, %v4891
        %v4893 = vrot.slane %v4892, 2
        %v4894 = vadd.f32 %v4892, %v4893
        %v4895 = vrot.slane %v4894, 1
        %v4896 = vadd.f32 %v4894, %v4895
        %v4897 = vadd.f32 %v4829, %v4833
        %v4898 = vadd.f32 %v4897, %v4837
        %v4899 = vadd.f32 %v4898, %v4841
        %v4900 = vadd.f32 %v4899, %v4845
        %v4901 = vadd.f32 %v4900, %v4849
        %v4902 = vadd.f32 %v4901, %v4853
        %v4903 = vadd.f32 %v4902, %v4857
        %v4904 = vrot.slane %v4903, 4
        %v4905 = vadd.f32 %v4903, %v4904
        %v4906 = vrot.slane %v4905, 2
        %v4907 = vadd.f32 %v4905, %v4906
        %v4908 = vrot.slane %v4907, 1
        %v4909 = vadd.f32 %v4907, %v4908
        %v4910 = vld [vmem:[#allocation2] sm:$0x1]
        %4912 = vset.pattern.permute.xlu0 0
        %4913 = vperm.xlu0 %4912, %v4910
        %v4914 = vpop.permute.xlu0 %4913
        %v4916 = vlaneseq
        %v4917 = vshrl.u32 %v4916, 7
        %v4918 = vsub.s32 0, %v4917
        %v4919 = vrot.slane %v4914, %v4918
        %v4920 = vadd.f32 %v4870, %v4919
        %v4921 = vadd.f32 %v4883, %v4919
        %v4922 = vadd.f32 %v4896, %v4919
        %v4923 = vadd.f32 %v4909, %v4919
        %v4924 = vxor.u32 %v4920, 2147483648
        %v4925 = vxor.u32 %v4921, 2147483648
        %v4926 = vxor.u32 %v4922, 2147483648
        %v4927 = vxor.u32 %v4923, 2147483648
        %v4928 = vmul.f32 %v4924, 1.442695
        %v4929 = vpow.pop %v4928
        %v4930 = vmul.f32 %v4925, 1.442695
        %v4931 = vpow.pop %v4930
        %v4932 = vmul.f32 %v4926, 1.442695
        %v4933 = vpow.pop %v4932
        %v4934 = vmul.f32 %v4927, 1.442695
        %v4935 = vpow.pop %v4934
        %v4936 = vadd.f32 %v4929, 1.0
        %v4937 = vadd.f32 %v4931, 1.0
        %v4938 = vadd.f32 %v4933, 1.0
        %v4939 = vadd.f32 %v4935, 1.0
        %v4940 = vrcp.pop %v4936
        %v4941 = vmul.f32 1.0, %v4940
        %v4942 = vrcp.pop %v4937
        %v4943 = vmul.f32 1.0, %v4942
        %v4944 = vrcp.pop %v4938
        %v4945 = vmul.f32 1.0, %v4944
        %v4946 = vrcp.pop %v4939
        %v4947 = vmul.f32 1.0, %v4946
        %v4952 = vcombine.low %v4941, %v4943
        %v4953 = vcombine.low %v4945, %v4947
        %v4955 = vunpack.c.l.s4 1966171168
        %v4956 = vunpack.c.0.s8 %v4955
        %v4957 = vlaneseq
        %v4958 = vshrl.u32 %v4957, 7
        %v4959 = vsub.s32 %v4956, %v4958
        %v4960 = vrot.slane %v4952, %v4959
        %v4962 = vunpack.c.l.s4 1966171168
        %v4963 = vunpack.c.0.s8 %v4962
        %v4964 = vlaneseq
        %v4965 = vshrl.u32 %v4964, 7
        %v4966 = vsub.s32 %v4963, %v4965
        %v4967 = vrot.slane %v4953, %v4966
        %v4968 = vcombine.low %v4960, %v4967
        %v4970 = vunpack.c.l.s4 1966171168
        %v4971 = vunpack.c.0.s8 %v4970
        %v4972 = vlaneseq
        %v4973 = vshrl.u32 %v4972, 7
        %v4974 = vsub.s32 %v4971, %v4973
        %v4975 = vrot.slane %v4968, %v4974
        %v4977 = vlaneseq
        %vm4978 = vcmp.ge.s32.totalorder %v4977, 0
        %vm4979 = vcmp.lt.s32.totalorder %v4977, 512
        %vm4980 = vmand %vm4978, %vm4979
        %4981 = vst.msk [vmem:[%s436] sm:$0xf] %vm4980, %v4975
        %s4982 = sand.u32 %s315, 1
        %s4983 = scalar_lea.sflag [#allocation4], %s4982
        %s4984 = sand.u32 %s315, 1
        %s4985 = smul.addr %s4984, 4
        %s4986 = scalar_lea.vmem [#allocation3], %s4985
        // Predicated region
        $region73: #{tpu_custom_call.1} parent=71 // pred_check
          %p4987 = pneg %p325
        $region74: #{tpu_custom_call.1} parent=71 // pred_check_branch
          %4989 = sbr.rel (%p4987) target = $region76
        $region75: #{tpu_custom_call.1} parent=71 // pred_region
          %s4990 = smul.u32 4, %s29
          %s4992 = ssub.s32 64, 64
          %4993 = vsyncadd %s4983, %s4992
          %s4994 = smul.addr %s4990, 16
          %s4995 = scalar_lea.hbm %s13, %s4994
          %s4997 = sshll.u32 %s4986, 4
          %s4998 = int_to_ptr.vmem [resolvable:$true] %s4997
          %5000 = dma.vmem_to_hbm [thread:$0]  %s4998, 64, %s4995, %s4983
        $region76: #{tpu_custom_call.1} parent=71 // pred_fallthru
          _
      $region72: #{tpu_custom_call.1} parent=5 // pred_fallthru
        _
      %p5001 = scmp.le.s32.totalorder 2, %s24
      // Predicated region
      $region77: #{tpu_custom_call.1} parent=5 // pred_check
        %p5002 = pneg %p5001
      $region78: #{tpu_custom_call.1} parent=5 // pred_check_branch
        %5004 = sbr.rel (%p5002) target = $region80
      $region79: #{tpu_custom_call.1} parent=5 // pred_region
        %s5005 = ssub.s32 %s24, 2
        // Predicated region
        $region81: #{tpu_custom_call.1} parent=79 // pred_check
          %p5006 = pneg %p331
        $region82: #{tpu_custom_call.1} parent=79 // pred_check_branch
          %5008 = sbr.rel (%p5006) target = $region84
        $region83: #{tpu_custom_call.1} parent=79 // pred_region
          %s5009 = sand.u32 %s316, 1
          %s5010 = scalar_lea.sflag [#allocation4], %s5009
          %s5011 = sand.u32 %s316, 1
          %s5012 = smul.addr %s5011, 4
          %s5013 = scalar_lea.vmem [#allocation3], %s5012
          %5014 = dma.done %s5010, 64
        $region84: #{tpu_custom_call.1} parent=79 // pred_fallthru
          _
      $region80: #{tpu_custom_call.1} parent=5 // pred_fallthru
        _
    $region6: #{tpu_custom_call.1} parent=1 // loop_footer
      %s28 = sadd.s32 1, %s24
    $region7: #{tpu_custom_call.1} parent=1 // loop_footer_branch
      %23 = sbr.rel target = $region3
    $region8: #{tpu_custom_call.1} parent=1 // loop_exit
      _
    %5015 = vsyncpa [#allocation4], 1
    %s5016 = scalar_lea.sflag [#allocation4], 1
    %5017 = vsyncpa %s5016, 1

</llo_original>
